<compile_context>
chip_gen: v6e
topology: v6e:2x2x1
jax: 0.10.0
libtpu: 0.0.40
codegen_flags: <defaults>
</compile_context>

<pallas_src>
import functools

import numpy as np

import jax
import jax.numpy as jnp
from jax import lax
from jax.experimental import pallas as pl
from jax.experimental.pallas import tpu as pltpu

LANE = 128


def _ceil_to(x, m):
    return ((x + m - 1) // m) * m


def _pad_axis(a, axis, target):
    pad = target - a.shape[axis]
    if pad == 0:
        return a
    cfg = [(0, 0)] * a.ndim
    cfg[axis] = (0, pad)
    return jnp.pad(a, cfg)


# ----------------------------------------------------------------------------
# Fused kernel: maxpool(2) -> conv3x3+BN+ReLU -> conv3x3+BN+ReLU
# ----------------------------------------------------------------------------
def _down_fused_kernel(x_ref, w1_ref, b1_ref, w2_ref, b2_ref, ml_ref, mr_ref,
                       o_ref, p1_ref, p2_ref, *, ww):
    # x_ref : (1, hh, 2, ww, 2*Ci) bf16   free reshape of the NHWC input image
    # w1_ref: (9, Ci, Cm)          bf16   3x3 taps flattened (ky*3+kx), BN folded
    # b1_ref: (1, Cm)              f32    folded BN bias
    # w2_ref: (9, Cm, Co)          bf16
    # b2_ref: (1, Co)              f32
    # ml_ref: (N, 1)               f32    0.0 on left-edge output pixels, else 1.0
    # mr_ref: (N, 1)               f32    0.0 on right-edge output pixels, else 1.0
    # o_ref : (1, N, Co)           f32    flattened (hh*ww) output rows
    # p1_ref: (N+2*(ww+1), Ci)     bf16   VMEM slab: pooled image + zero halo rows
    # p2_ref: (N+2*(ww+1), Cm)     bf16   VMEM slab: conv1 output + zero halo rows
    N = o_ref.shape[1]
    Ci = x_ref.shape[4] // 2
    Cm = w1_ref.shape[2]
    Co = w2_ref.shape[2]
    pad = ww + 1  # zero rows before/after the flattened image in each slab

    # ---- 1) 2x2 max-pool: 4 taps via int index + aligned lane slices --------
    t00 = x_ref[0, :, 0, :, pl.ds(0, Ci)]     # (hh, ww, Ci)  x[2i  , 2j  ]
    t01 = x_ref[0, :, 0, :, pl.ds(Ci, Ci)]    #               x[2i  , 2j+1]
    t10 = x_ref[0, :, 1, :, pl.ds(0, Ci)]     #               x[2i+1, 2j  ]
    t11 = x_ref[0, :, 1, :, pl.ds(Ci, Ci)]    #               x[2i+1, 2j+1]
    pooled = jnp.maximum(jnp.maximum(t00, t01), jnp.maximum(t10, t11))
    # Single flatten of the leading (hh, ww) dims; the lane (channel) axis is
    # untouched, so this is layout-cheap (free when ww % 8 == 0).
    pooled = pooled.reshape(N, Ci)

    # Zero the halo strips, then drop the pooled image into the slab interior.
    p1_ref[pl.ds(0, pad), :] = jnp.zeros((pad, Ci), p1_ref.dtype)
    p1_ref[pl.ds(pad + N, pad), :] = jnp.zeros((pad, Ci), p1_ref.dtype)
    p1_ref[pl.ds(pad, N), :] = pooled

    ml = ml_ref[...]  # (N, 1) f32
    mr = mr_ref[...]  # (N, 1) f32

    def conv3x3(slab_ref, w_ref, cout):
        # 3x3 "SAME" conv as 9 shifted (N, Cin) @ (Cin, Cout) MXU matmuls on
        # the flattened slab.  Vertical padding comes from the zero halo rows;
        # horizontal wrap-around taps are cancelled by the edge masks.
        acc = jnp.zeros((N, cout), jnp.float32)
        for dy in (-1, 0, 1):
            for dx in (-1, 0, 1):
                patch = slab_ref[pl.ds(pad + dy * ww + dx, N), :]   # (N, Cin)
                tap = w_ref[(dy + 1) * 3 + (dx + 1)]                # (Cin, Cout)
                part = jnp.dot(patch, tap, preferred_element_type=jnp.float32)
                if dx == -1:
                    part = part * ml
                elif dx == 1:
                    part = part * mr
                acc = acc + part
        return acc

    # ---- 2) conv1 + folded BN + ReLU (f32 accumulate / bias / ReLU) ---------
    y1 = jnp.maximum(conv3x3(p1_ref, w1_ref, Cm) + b1_ref[...], 0.0)

    p2_ref[pl.ds(0, pad), :] = jnp.zeros((pad, Cm), p2_ref.dtype)
    p2_ref[pl.ds(pad + N, pad), :] = jnp.zeros((pad, Cm), p2_ref.dtype)
    p2_ref[pl.ds(pad, N), :] = y1.astype(p2_ref.dtype)

    # ---- 3) conv2 + folded BN + ReLU ----------------------------------------
    y2 = jnp.maximum(conv3x3(p2_ref, w2_ref, Co) + b2_ref[...], 0.0)
    o_ref[0] = y2.astype(o_ref.dtype)


def _down_pallas(xr, w1p, b1p, w2p, b2p, mask_l, mask_r, *, hh, ww):
    B = xr.shape[0]
    Cpi = xr.shape[4] // 2
    Cpm = w1p.shape[2]
    Cpo = w2p.shape[2]
    N = hh * ww
    S = N + 2 * (ww + 1)

    kernel = functools.partial(_down_fused_kernel, ww=ww)
    return pl.pallas_call(
        kernel,
        out_shape=jax.ShapeDtypeStruct((B, N, Cpo), jnp.float32),
        grid=(B,),
        in_specs=[
            pl.BlockSpec((1, hh, 2, ww, 2 * Cpi), lambda b: (b, 0, 0, 0, 0)),
            # Weights / biases / masks: constant index_map => fetched once.
            pl.BlockSpec((9, Cpi, Cpm), lambda b: (0, 0, 0)),
            pl.BlockSpec((1, Cpm), lambda b: (0, 0)),
            pl.BlockSpec((9, Cpm, Cpo), lambda b: (0, 0, 0)),
            pl.BlockSpec((1, Cpo), lambda b: (0, 0)),
            pl.BlockSpec((N, 1), lambda b: (0, 0)),
            pl.BlockSpec((N, 1), lambda b: (0, 0)),
        ],
        out_specs=pl.BlockSpec((1, N, Cpo), lambda b: (b, 0, 0)),
        scratch_shapes=[
            pltpu.VMEM((S, Cpi), jnp.bfloat16),
            pltpu.VMEM((S, Cpm), jnp.bfloat16),
        ],
        compiler_params=pltpu.CompilerParams(
            dimension_semantics=("parallel",),
            vmem_limit_bytes=32 * 1024 * 1024,  # safe on v5e/v6e/v7x
        ),
    )(xr, w1p, b1p, w2p, b2p, mask_l, mask_r)


# ----------------------------------------------------------------------------
# Parameter construction (matches the torch module's shapes; BN eval-folded)
# ----------------------------------------------------------------------------
def _fold_bn(w_hwio, gamma, beta, mean, var, eps=1e-5):
    scale = gamma / jnp.sqrt(var + eps)
    return w_hwio * scale[None, None, None, :], beta - mean * scale


def init_down_params(key, in_ch, out_ch):
    mid = out_ch  # DoubleConv: mid_channels defaults to out_channels
    ks = jax.random.split(key, 10)

    def conv_w(k, cin, cout):  # HWIO
        fan_in = 3 * 3 * cin
        return jax.random.normal(k, (3, 3, cin, cout), jnp.float32) / jnp.sqrt(fan_in)

    def bn_params(kg, kb, km, kv, c):
        gamma = 1.0 + 0.1 * jax.random.normal(kg, (c,), jnp.float32)
        beta = 0.1 * jax.random.normal(kb, (c,), jnp.float32)
        mean = 0.1 * jax.random.normal(km, (c,), jnp.float32)
        var = 1.0 + 0.1 * jnp.abs(jax.random.normal(kv, (c,), jnp.float32))
        return gamma, beta, mean, var

    w1 = conv_w(ks[0], in_ch, mid)
    w2 = conv_w(ks[1], mid, out_ch)
    w1e, b1e = _fold_bn(w1, *bn_params(ks[2], ks[3], ks[4], ks[5], mid))
    w2e, b2e = _fold_bn(w2, *bn_params(ks[6], ks[7], ks[8], ks[9], out_ch))
    return w1e, b1e, w2e, b2e


# ----------------------------------------------------------------------------
# Forward: Down = MaxPool2d(2) -> (Conv3x3+BN+ReLU) x 2   (NCHW in/out)
# ----------------------------------------------------------------------------
@jax.jit
def down_forward(x_nchw, w1e, b1e, w2e, b2e):
    B, Cin, H, W = x_nchw.shape
    # PyTorch MaxPool2d(2) floors odd spatial sizes -> crop to even.
    H2, W2 = (H // 2) * 2, (W // 2) * 2
    x_nchw = x_nchw[:, :, :H2, :W2]
    hh, ww = H2 // 2, W2 // 2
    N = hh * ww

    Cmid, Cout = w1e.shape[3], w2e.shape[3]
    Cpi = _ceil_to(Cin, LANE)
    Cpm = _ceil_to(Cmid, LANE)
    Cpo = _ceil_to(Cout, LANE)

    # Model-boundary layout prep (NCHW -> NHWC, lane-pad channels, bf16 cast).
    x = jnp.transpose(x_nchw, (0, 2, 3, 1))
    x = _pad_axis(x, 3, Cpi).astype(jnp.bfloat16)
    # Free row-major reshape exposing the 2x2 pool taps (no transpose / copy).
    xr = x.reshape(B, hh, 2, ww, 2 * Cpi)

    w1p = _pad_axis(_pad_axis(w1e, 2, Cpi), 3, Cpm).reshape(9, Cpi, Cpm).astype(jnp.bfloat16)
    b1p = _pad_axis(b1e, 0, Cpm).reshape(1, Cpm).astype(jnp.float32)
    w2p = _pad_axis(_pad_axis(w2e, 2, Cpm), 3, Cpo).reshape(9, Cpm, Cpo).astype(jnp.bfloat16)
    b2p = _pad_axis(b2e, 0, Cpo).reshape(1, Cpo).astype(jnp.float32)

    col = np.arange(N) % ww
    mask_l = jnp.asarray((col != 0).astype(np.float32).reshape(N, 1))
    mask_r = jnp.asarray((col != ww - 1).astype(np.float32).reshape(N, 1))

    out_flat = _down_pallas(xr, w1p, b1p, w2p, b2p, mask_l, mask_r, hh=hh, ww=ww)

    out = out_flat.reshape(B, hh, ww, Cpo)[..., :Cout]
    return jnp.transpose(out, (0, 3, 1, 2))  # NHWC -> NCHW


def down_reference(x_nchw, w1e, b1e, w2e, b2e):
    # Plain-JAX reference (f32 math, but with the same bf16 rounding of the
    # inputs/weights the Pallas path applies, so tolerances stay tight).
    dn = ("NHWC", "HWIO", "NHWC")
    rq = lambda a: a.astype(jnp.bfloat16).astype(jnp.float32)
    x = jnp.transpose(x_nchw, (0, 2, 3, 1))
    x = lax.reduce_window(rq(x), -jnp.inf, lax.max, (1, 2, 2, 1), (1, 2, 2, 1), "VALID")
    x = lax.conv_general_dilated(x, rq(w1e), (1, 1), "SAME", dimension_numbers=dn)
    x = jnp.maximum(x + b1e, 0.0)
    x = lax.conv_general_dilated(x, rq(w2e), (1, 1), "SAME", dimension_numbers=dn)
    x = jnp.maximum(x + b2e, 0.0)
    return jnp.transpose(x, (0, 3, 1, 2))


if __name__ == "__main__":
    key = jax.random.PRNGKey(0)
    k_x, k_p = jax.random.split(key)

    B, C_IN, H, W = 2, 4, 16, 16
    C_OUT = 8

    x = jax.random.normal(k_x, (B, C_IN, H, W), jnp.float32)  # NCHW, like torch
    params = init_down_params(k_p, C_IN, C_OUT)

    out = down_forward(x, *params)
    out = jax.block_until_ready(out)

    assert out.shape == (B, C_OUT, H // 2, W // 2), out.shape

    ref = down_reference(x, *params)
    if not bool(jnp.allclose(out, ref, atol=2e-2, rtol=2e-2)):
        raise AssertionError("Pallas Down output mismatch vs reference")

    print("KERNEL_OK")
</pallas_src>

<mosaic_0001>
module attributes {stable_mosaic.version = 11 : i64} {
  func.func @_down_fused_kernel(%arg0: i32, %arg1: memref<1x8x2x8x256xbf16, #tpu.memory_space<vmem>>, %arg2: memref<9x128x128xbf16, #tpu.memory_space<vmem>>, %arg3: memref<1x128xf32, #tpu.memory_space<vmem>>, %arg4: memref<9x128x128xbf16, #tpu.memory_space<vmem>>, %arg5: memref<1x128xf32, #tpu.memory_space<vmem>>, %arg6: memref<64x1xf32, #tpu.memory_space<vmem>>, %arg7: memref<64x1xf32, #tpu.memory_space<vmem>>, %arg8: memref<1x64x128xf32, #tpu.memory_space<vmem>>, %arg9: memref<82x128xbf16, #tpu.memory_space<vmem>>, %arg10: memref<82x128xbf16, #tpu.memory_space<vmem>>) attributes {dimension_semantics = [#tpu.dimension_semantics<parallel>], iteration_bounds = array<i64: 2>, scalar_prefetch = 0 : i64, scratch_operands = 2 : i64, tpu.core_type = #tpu.core_type<tc>, window_params = [{transform_indices = @transform_0, window_bounds = array<i64: 1, 8, 2, 8, 256>}, {pipeline_mode = #tpu.pipeline_mode<synchronous>, transform_indices = @transform_1, window_bounds = array<i64: 9, 128, 128>}, {pipeline_mode = #tpu.pipeline_mode<synchronous>, transform_indices = @transform_2, window_bounds = array<i64: 1, 128>}, {pipeline_mode = #tpu.pipeline_mode<synchronous>, transform_indices = @transform_3, window_bounds = array<i64: 9, 128, 128>}, {pipeline_mode = #tpu.pipeline_mode<synchronous>, transform_indices = @transform_4, window_bounds = array<i64: 1, 128>}, {pipeline_mode = #tpu.pipeline_mode<synchronous>, transform_indices = @transform_5, window_bounds = array<i64: 64, 1>}, {pipeline_mode = #tpu.pipeline_mode<synchronous>, transform_indices = @transform_6, window_bounds = array<i64: 64, 1>}, {transform_indices = @transform_7, window_bounds = array<i64: 1, 64, 128>}]} {
    %c0 = arith.constant 0 : index
    %c0_0 = arith.constant 0 : index
    %c0_1 = arith.constant 0 : index
    %c0_2 = arith.constant 0 : index
    %c0_3 = arith.constant 0 : index
    %0 = vector.load %arg1[%c0, %c0_0, %c0_1, %c0_2, %c0_3] : memref<1x8x2x8x256xbf16, #tpu.memory_space<vmem>>, vector<1x8x1x8x128xbf16>
    %1 = vector.shape_cast %0 : vector<1x8x1x8x128xbf16> to vector<8x8x128xbf16>
    %c0_4 = arith.constant 0 : index
    %c0_5 = arith.constant 0 : index
    %c0_6 = arith.constant 0 : index
    %c0_7 = arith.constant 0 : index
    %c128 = arith.constant 128 : index
    %2 = vector.load %arg1[%c0_4, %c0_5, %c0_6, %c0_7, %c128] : memref<1x8x2x8x256xbf16, #tpu.memory_space<vmem>>, vector<1x8x1x8x128xbf16>
    %3 = vector.shape_cast %2 : vector<1x8x1x8x128xbf16> to vector<8x8x128xbf16>
    %c0_8 = arith.constant 0 : index
    %c0_9 = arith.constant 0 : index
    %c1 = arith.constant 1 : index
    %c0_10 = arith.constant 0 : index
    %c0_11 = arith.constant 0 : index
    %4 = vector.load %arg1[%c0_8, %c0_9, %c1, %c0_10, %c0_11] : memref<1x8x2x8x256xbf16, #tpu.memory_space<vmem>>, vector<1x8x1x8x128xbf16>
    %5 = vector.shape_cast %4 : vector<1x8x1x8x128xbf16> to vector<8x8x128xbf16>
    %c0_12 = arith.constant 0 : index
    %c0_13 = arith.constant 0 : index
    %c1_14 = arith.constant 1 : index
    %c0_15 = arith.constant 0 : index
    %c128_16 = arith.constant 128 : index
    %6 = vector.load %arg1[%c0_12, %c0_13, %c1_14, %c0_15, %c128_16] : memref<1x8x2x8x256xbf16, #tpu.memory_space<vmem>>, vector<1x8x1x8x128xbf16>
    %7 = vector.shape_cast %6 : vector<1x8x1x8x128xbf16> to vector<8x8x128xbf16>
    %8 = arith.maximumf %1, %3 : vector<8x8x128xbf16>
    %9 = arith.maximumf %5, %7 : vector<8x8x128xbf16>
    %10 = arith.maximumf %8, %9 : vector<8x8x128xbf16>
    %11 = vector.shape_cast %10 : vector<8x8x128xbf16> to vector<64x128xbf16>
    %cst = arith.constant 0.000000e+00 : bf16
    %12 = vector.broadcast %cst : bf16 to vector<9x128xbf16>
    %c0_17 = arith.constant 0 : index
    %c0_18 = arith.constant 0 : index
    %13 = vector.load %arg9[%c0_17, %c0_18] : memref<82x128xbf16, #tpu.memory_space<vmem>>, vector<9x128xbf16>
    tpu.vector_store %arg9[%c0_17, %c0_18], %12 {strides = array<i32>} : memref<82x128xbf16, #tpu.memory_space<vmem>>, vector<9x128xbf16>,
    %cst_19 = arith.constant 0.000000e+00 : bf16
    %14 = vector.broadcast %cst_19 : bf16 to vector<9x128xbf16>
    %c73 = arith.constant 73 : index
    %c0_20 = arith.constant 0 : index
    %15 = vector.load %arg9[%c73, %c0_20] : memref<82x128xbf16, #tpu.memory_space<vmem>>, vector<9x128xbf16>
    tpu.vector_store %arg9[%c73, %c0_20], %14 {strides = array<i32>} : memref<82x128xbf16, #tpu.memory_space<vmem>>, vector<9x128xbf16>,
    %c9 = arith.constant 9 : index
    %c0_21 = arith.constant 0 : index
    %16 = vector.load %arg9[%c9, %c0_21] : memref<82x128xbf16, #tpu.memory_space<vmem>>, vector<64x128xbf16>
    tpu.vector_store %arg9[%c9, %c0_21], %11 {strides = array<i32>} : memref<82x128xbf16, #tpu.memory_space<vmem>>, vector<64x128xbf16>,
    %c0_22 = arith.constant 0 : index
    %c0_23 = arith.constant 0 : index
    %17 = vector.load %arg6[%c0_22, %c0_23] : memref<64x1xf32, #tpu.memory_space<vmem>>, vector<64x1xf32>
    %c0_24 = arith.constant 0 : index
    %c0_25 = arith.constant 0 : index
    %18 = vector.load %arg7[%c0_24, %c0_25] : memref<64x1xf32, #tpu.memory_space<vmem>>, vector<64x1xf32>
    %cst_26 = arith.constant 0.000000e+00 : f32
    %19 = vector.broadcast %cst_26 : f32 to vector<64x128xf32>
    %c0_27 = arith.constant 0 : index
    %c0_28 = arith.constant 0 : index
    %20 = vector.load %arg9[%c0_27, %c0_28] : memref<82x128xbf16, #tpu.memory_space<vmem>>, vector<64x128xbf16>
    %c0_29 = arith.constant 0 : index
    %c0_30 = arith.constant 0 : index
    %c0_31 = arith.constant 0 : index
    %21 = vector.load %arg2[%c0_29, %c0_30, %c0_31] : memref<9x128x128xbf16, #tpu.memory_space<vmem>>, vector<1x128x128xbf16>
    %22 = vector.shape_cast %21 : vector<1x128x128xbf16> to vector<128x128xbf16>
    %cst_32 = arith.constant dense<0.000000e+00> : vector<64x128xf32>
    %23 = tpu.matmul %20, %22, %cst_32 {dimension_numbers = #tpu.dot_dimension_numbers<[1], [0], [0], [1], [0, 0, 1, 1], [], []>} : vector<64x128xbf16>, vector<128x128xbf16>, vector<64x128xf32> -> vector<64x128xf32>
    %24 = vector.broadcast %17 : vector<64x1xf32> to vector<64x128xf32>
    %25 = arith.mulf %23, %24 : vector<64x128xf32>
    %26 = arith.addf %19, %25 : vector<64x128xf32>
    %c1_33 = arith.constant 1 : index
    %c0_34 = arith.constant 0 : index
    %27 = vector.load %arg9[%c1_33, %c0_34] : memref<82x128xbf16, #tpu.memory_space<vmem>>, vector<64x128xbf16>
    %c1_35 = arith.constant 1 : index
    %c0_36 = arith.constant 0 : index
    %c0_37 = arith.constant 0 : index
    %28 = vector.load %arg2[%c1_35, %c0_36, %c0_37] : memref<9x128x128xbf16, #tpu.memory_space<vmem>>, vector<1x128x128xbf16>
    %29 = vector.shape_cast %28 : vector<1x128x128xbf16> to vector<128x128xbf16>
    %cst_38 = arith.constant dense<0.000000e+00> : vector<64x128xf32>
    %30 = tpu.matmul %27, %29, %cst_38 {dimension_numbers = #tpu.dot_dimension_numbers<[1], [0], [0], [1], [0, 0, 1, 1], [], []>} : vector<64x128xbf16>, vector<128x128xbf16>, vector<64x128xf32> -> vector<64x128xf32>
    %31 = arith.addf %26, %30 : vector<64x128xf32>
    %c2 = arith.constant 2 : index
    %c0_39 = arith.constant 0 : index
    %32 = vector.load %arg9[%c2, %c0_39] : memref<82x128xbf16, #tpu.memory_space<vmem>>, vector<64x128xbf16>
    %c2_40 = arith.constant 2 : index
    %c0_41 = arith.constant 0 : index
    %c0_42 = arith.constant 0 : index
    %33 = vector.load %arg2[%c2_40, %c0_41, %c0_42] : memref<9x128x128xbf16, #tpu.memory_space<vmem>>, vector<1x128x128xbf16>
    %34 = vector.shape_cast %33 : vector<1x128x128xbf16> to vector<128x128xbf16>
    %cst_43 = arith.constant dense<0.000000e+00> : vector<64x128xf32>
    %35 = tpu.matmul %32, %34, %cst_43 {dimension_numbers = #tpu.dot_dimension_numbers<[1], [0], [0], [1], [0, 0, 1, 1], [], []>} : vector<64x128xbf16>, vector<128x128xbf16>, vector<64x128xf32> -> vector<64x128xf32>
    %36 = vector.broadcast %18 : vector<64x1xf32> to vector<64x128xf32>
    %37 = arith.mulf %35, %36 : vector<64x128xf32>
    %38 = arith.addf %31, %37 : vector<64x128xf32>
    %c8 = arith.constant 8 : index
    %c0_44 = arith.constant 0 : index
    %39 = vector.load %arg9[%c8, %c0_44] : memref<82x128xbf16, #tpu.memory_space<vmem>>, vector<64x128xbf16>
    %c3 = arith.constant 3 : index
    %c0_45 = arith.constant 0 : index
    %c0_46 = arith.constant 0 : index
    %40 = vector.load %arg2[%c3, %c0_45, %c0_46] : memref<9x128x128xbf16, #tpu.memory_space<vmem>>, vector<1x128x128xbf16>
    %41 = vector.shape_cast %40 : vector<1x128x128xbf16> to vector<128x128xbf16>
    %cst_47 = arith.constant dense<0.000000e+00> : vector<64x128xf32>
    %42 = tpu.matmul %39, %41, %cst_47 {dimension_numbers = #tpu.dot_dimension_numbers<[1], [0], [0], [1], [0, 0, 1, 1], [], []>} : vector<64x128xbf16>, vector<128x128xbf16>, vector<64x128xf32> -> vector<64x128xf32>
    %43 = vector.broadcast %17 : vector<64x1xf32> to vector<64x128xf32>
    %44 = arith.mulf %42, %43 : vector<64x128xf32>
    %45 = arith.addf %38, %44 : vector<64x128xf32>
    %c9_48 = arith.constant 9 : index
    %c0_49 = arith.constant 0 : index
    %46 = vector.load %arg9[%c9_48, %c0_49] : memref<82x128xbf16, #tpu.memory_space<vmem>>, vector<64x128xbf16>
    %c4 = arith.constant 4 : index
    %c0_50 = arith.constant 0 : index
    %c0_51 = arith.constant 0 : index
    %47 = vector.load %arg2[%c4, %c0_50, %c0_51] : memref<9x128x128xbf16, #tpu.memory_space<vmem>>, vector<1x128x128xbf16>
    %48 = vector.shape_cast %47 : vector<1x128x128xbf16> to vector<128x128xbf16>
    %cst_52 = arith.constant dense<0.000000e+00> : vector<64x128xf32>
    %49 = tpu.matmul %46, %48, %cst_52 {dimension_numbers = #tpu.dot_dimension_numbers<[1], [0], [0], [1], [0, 0, 1, 1], [], []>} : vector<64x128xbf16>, vector<128x128xbf16>, vector<64x128xf32> -> vector<64x128xf32>
    %50 = arith.addf %45, %49 : vector<64x128xf32>
    %c10 = arith.constant 10 : index
    %c0_53 = arith.constant 0 : index
    %51 = vector.load %arg9[%c10, %c0_53] : memref<82x128xbf16, #tpu.memory_space<vmem>>, vector<64x128xbf16>
    %c5 = arith.constant 5 : index
    %c0_54 = arith.constant 0 : index
    %c0_55 = arith.constant 0 : index
    %52 = vector.load %arg2[%c5, %c0_54, %c0_55] : memref<9x128x128xbf16, #tpu.memory_space<vmem>>, vector<1x128x128xbf16>
    %53 = vector.shape_cast %52 : vector<1x128x128xbf16> to vector<128x128xbf16>
    %cst_56 = arith.constant dense<0.000000e+00> : vector<64x128xf32>
    %54 = tpu.matmul %51, %53, %cst_56 {dimension_numbers = #tpu.dot_dimension_numbers<[1], [0], [0], [1], [0, 0, 1, 1], [], []>} : vector<64x128xbf16>, vector<128x128xbf16>, vector<64x128xf32> -> vector<64x128xf32>
    %55 = vector.broadcast %18 : vector<64x1xf32> to vector<64x128xf32>
    %56 = arith.mulf %54, %55 : vector<64x128xf32>
    %57 = arith.addf %50, %56 : vector<64x128xf32>
    %c16 = arith.constant 16 : index
    %c0_57 = arith.constant 0 : index
    %58 = vector.load %arg9[%c16, %c0_57] : memref<82x128xbf16, #tpu.memory_space<vmem>>, vector<64x128xbf16>
    %c6 = arith.constant 6 : index
    %c0_58 = arith.constant 0 : index
    %c0_59 = arith.constant 0 : index
    %59 = vector.load %arg2[%c6, %c0_58, %c0_59] : memref<9x128x128xbf16, #tpu.memory_space<vmem>>, vector<1x128x128xbf16>
    %60 = vector.shape_cast %59 : vector<1x128x128xbf16> to vector<128x128xbf16>
    %cst_60 = arith.constant dense<0.000000e+00> : vector<64x128xf32>
    %61 = tpu.matmul %58, %60, %cst_60 {dimension_numbers = #tpu.dot_dimension_numbers<[1], [0], [0], [1], [0, 0, 1, 1], [], []>} : vector<64x128xbf16>, vector<128x128xbf16>, vector<64x128xf32> -> vector<64x128xf32>
    %62 = vector.broadcast %17 : vector<64x1xf32> to vector<64x128xf32>
    %63 = arith.mulf %61, %62 : vector<64x128xf32>
    %64 = arith.addf %57, %63 : vector<64x128xf32>
    %c17 = arith.constant 17 : index
    %c0_61 = arith.constant 0 : index
    %65 = vector.load %arg9[%c17, %c0_61] : memref<82x128xbf16, #tpu.memory_space<vmem>>, vector<64x128xbf16>
    %c7 = arith.constant 7 : index
    %c0_62 = arith.constant 0 : index
    %c0_63 = arith.constant 0 : index
    %66 = vector.load %arg2[%c7, %c0_62, %c0_63] : memref<9x128x128xbf16, #tpu.memory_space<vmem>>, vector<1x128x128xbf16>
    %67 = vector.shape_cast %66 : vector<1x128x128xbf16> to vector<128x128xbf16>
    %cst_64 = arith.constant dense<0.000000e+00> : vector<64x128xf32>
    %68 = tpu.matmul %65, %67, %cst_64 {dimension_numbers = #tpu.dot_dimension_numbers<[1], [0], [0], [1], [0, 0, 1, 1], [], []>} : vector<64x128xbf16>, vector<128x128xbf16>, vector<64x128xf32> -> vector<64x128xf32>
    %69 = arith.addf %64, %68 : vector<64x128xf32>
    %c18 = arith.constant 18 : index
    %c0_65 = arith.constant 0 : index
    %70 = vector.load %arg9[%c18, %c0_65] : memref<82x128xbf16, #tpu.memory_space<vmem>>, vector<64x128xbf16>
    %c8_66 = arith.constant 8 : index
    %c0_67 = arith.constant 0 : index
    %c0_68 = arith.constant 0 : index
    %71 = vector.load %arg2[%c8_66, %c0_67, %c0_68] : memref<9x128x128xbf16, #tpu.memory_space<vmem>>, vector<1x128x128xbf16>
    %72 = vector.shape_cast %71 : vector<1x128x128xbf16> to vector<128x128xbf16>
    %cst_69 = arith.constant dense<0.000000e+00> : vector<64x128xf32>
    %73 = tpu.matmul %70, %72, %cst_69 {dimension_numbers = #tpu.dot_dimension_numbers<[1], [0], [0], [1], [0, 0, 1, 1], [], []>} : vector<64x128xbf16>, vector<128x128xbf16>, vector<64x128xf32> -> vector<64x128xf32>
    %74 = vector.broadcast %18 : vector<64x1xf32> to vector<64x128xf32>
    %75 = arith.mulf %73, %74 : vector<64x128xf32>
    %76 = arith.addf %69, %75 : vector<64x128xf32>
    %c0_70 = arith.constant 0 : index
    %c0_71 = arith.constant 0 : index
    %77 = vector.load %arg3[%c0_70, %c0_71] : memref<1x128xf32, #tpu.memory_space<vmem>>, vector<1x128xf32>
    %78 = vector.broadcast %77 : vector<1x128xf32> to vector<64x128xf32>
    %79 = arith.addf %76, %78 : vector<64x128xf32>
    %cst_72 = arith.constant 0.000000e+00 : f32
    %80 = vector.broadcast %cst_72 : f32 to vector<64x128xf32>
    %81 = arith.maximumf %79, %80 : vector<64x128xf32>
    %cst_73 = arith.constant 0.000000e+00 : bf16
    %82 = vector.broadcast %cst_73 : bf16 to vector<9x128xbf16>
    %c0_74 = arith.constant 0 : index
    %c0_75 = arith.constant 0 : index
    %83 = vector.load %arg10[%c0_74, %c0_75] : memref<82x128xbf16, #tpu.memory_space<vmem>>, vector<9x128xbf16>
    tpu.vector_store %arg10[%c0_74, %c0_75], %82 {strides = array<i32>} : memref<82x128xbf16, #tpu.memory_space<vmem>>, vector<9x128xbf16>,
    %cst_76 = arith.constant 0.000000e+00 : bf16
    %84 = vector.broadcast %cst_76 : bf16 to vector<9x128xbf16>
    %c73_77 = arith.constant 73 : index
    %c0_78 = arith.constant 0 : index
    %85 = vector.load %arg10[%c73_77, %c0_78] : memref<82x128xbf16, #tpu.memory_space<vmem>>, vector<9x128xbf16>
    tpu.vector_store %arg10[%c73_77, %c0_78], %84 {strides = array<i32>} : memref<82x128xbf16, #tpu.memory_space<vmem>>, vector<9x128xbf16>,
    %86 = arith.truncf %81 : vector<64x128xf32> to vector<64x128xbf16>
    %c9_79 = arith.constant 9 : index
    %c0_80 = arith.constant 0 : index
    %87 = vector.load %arg10[%c9_79, %c0_80] : memref<82x128xbf16, #tpu.memory_space<vmem>>, vector<64x128xbf16>
    tpu.vector_store %arg10[%c9_79, %c0_80], %86 {strides = array<i32>} : memref<82x128xbf16, #tpu.memory_space<vmem>>, vector<64x128xbf16>,
    %cst_81 = arith.constant 0.000000e+00 : f32
    %88 = vector.broadcast %cst_81 : f32 to vector<64x128xf32>
    %c0_82 = arith.constant 0 : index
    %c0_83 = arith.constant 0 : index
    %89 = vector.load %arg10[%c0_82, %c0_83] : memref<82x128xbf16, #tpu.memory_space<vmem>>, vector<64x128xbf16>
    %c0_84 = arith.constant 0 : index
    %c0_85 = arith.constant 0 : index
    %c0_86 = arith.constant 0 : index
    %90 = vector.load %arg4[%c0_84, %c0_85, %c0_86] : memref<9x128x128xbf16, #tpu.memory_space<vmem>>, vector<1x128x128xbf16>
    %91 = vector.shape_cast %90 : vector<1x128x128xbf16> to vector<128x128xbf16>
    %cst_87 = arith.constant dense<0.000000e+00> : vector<64x128xf32>
    %92 = tpu.matmul %89, %91, %cst_87 {dimension_numbers = #tpu.dot_dimension_numbers<[1], [0], [0], [1], [0, 0, 1, 1], [], []>} : vector<64x128xbf16>, vector<128x128xbf16>, vector<64x128xf32> -> vector<64x128xf32>
    %93 = vector.broadcast %17 : vector<64x1xf32> to vector<64x128xf32>
    %94 = arith.mulf %92, %93 : vector<64x128xf32>
    %95 = arith.addf %88, %94 : vector<64x128xf32>
    %c1_88 = arith.constant 1 : index
    %c0_89 = arith.constant 0 : index
    %96 = vector.load %arg10[%c1_88, %c0_89] : memref<82x128xbf16, #tpu.memory_space<vmem>>, vector<64x128xbf16>
    %c1_90 = arith.constant 1 : index
    %c0_91 = arith.constant 0 : index
    %c0_92 = arith.constant 0 : index
    %97 = vector.load %arg4[%c1_90, %c0_91, %c0_92] : memref<9x128x128xbf16, #tpu.memory_space<vmem>>, vector<1x128x128xbf16>
    %98 = vector.shape_cast %97 : vector<1x128x128xbf16> to vector<128x128xbf16>
    %cst_93 = arith.constant dense<0.000000e+00> : vector<64x128xf32>
    %99 = tpu.matmul %96, %98, %cst_93 {dimension_numbers = #tpu.dot_dimension_numbers<[1], [0], [0], [1], [0, 0, 1, 1], [], []>} : vector<64x128xbf16>, vector<128x128xbf16>, vector<64x128xf32> -> vector<64x128xf32>
    %100 = arith.addf %95, %99 : vector<64x128xf32>
    %c2_94 = arith.constant 2 : index
    %c0_95 = arith.constant 0 : index
    %101 = vector.load %arg10[%c2_94, %c0_95] : memref<82x128xbf16, #tpu.memory_space<vmem>>, vector<64x128xbf16>
    %c2_96 = arith.constant 2 : index
    %c0_97 = arith.constant 0 : index
    %c0_98 = arith.constant 0 : index
    %102 = vector.load %arg4[%c2_96, %c0_97, %c0_98] : memref<9x128x128xbf16, #tpu.memory_space<vmem>>, vector<1x128x128xbf16>
    %103 = vector.shape_cast %102 : vector<1x128x128xbf16> to vector<128x128xbf16>
    %cst_99 = arith.constant dense<0.000000e+00> : vector<64x128xf32>
    %104 = tpu.matmul %101, %103, %cst_99 {dimension_numbers = #tpu.dot_dimension_numbers<[1], [0], [0], [1], [0, 0, 1, 1], [], []>} : vector<64x128xbf16>, vector<128x128xbf16>, vector<64x128xf32> -> vector<64x128xf32>
    %105 = vector.broadcast %18 : vector<64x1xf32> to vector<64x128xf32>
    %106 = arith.mulf %104, %105 : vector<64x128xf32>
    %107 = arith.addf %100, %106 : vector<64x128xf32>
    %c8_100 = arith.constant 8 : index
    %c0_101 = arith.constant 0 : index
    %108 = vector.load %arg10[%c8_100, %c0_101] : memref<82x128xbf16, #tpu.memory_space<vmem>>, vector<64x128xbf16>
    %c3_102 = arith.constant 3 : index
    %c0_103 = arith.constant 0 : index
    %c0_104 = arith.constant 0 : index
    %109 = vector.load %arg4[%c3_102, %c0_103, %c0_104] : memref<9x128x128xbf16, #tpu.memory_space<vmem>>, vector<1x128x128xbf16>
    %110 = vector.shape_cast %109 : vector<1x128x128xbf16> to vector<128x128xbf16>
    %cst_105 = arith.constant dense<0.000000e+00> : vector<64x128xf32>
    %111 = tpu.matmul %108, %110, %cst_105 {dimension_numbers = #tpu.dot_dimension_numbers<[1], [0], [0], [1], [0, 0, 1, 1], [], []>} : vector<64x128xbf16>, vector<128x128xbf16>, vector<64x128xf32> -> vector<64x128xf32>
    %112 = vector.broadcast %17 : vector<64x1xf32> to vector<64x128xf32>
    %113 = arith.mulf %111, %112 : vector<64x128xf32>
    %114 = arith.addf %107, %113 : vector<64x128xf32>
    %c9_106 = arith.constant 9 : index
    %c0_107 = arith.constant 0 : index
    %115 = vector.load %arg10[%c9_106, %c0_107] : memref<82x128xbf16, #tpu.memory_space<vmem>>, vector<64x128xbf16>
    %c4_108 = arith.constant 4 : index
    %c0_109 = arith.constant 0 : index
    %c0_110 = arith.constant 0 : index
    %116 = vector.load %arg4[%c4_108, %c0_109, %c0_110] : memref<9x128x128xbf16, #tpu.memory_space<vmem>>, vector<1x128x128xbf16>
    %117 = vector.shape_cast %116 : vector<1x128x128xbf16> to vector<128x128xbf16>
    %cst_111 = arith.constant dense<0.000000e+00> : vector<64x128xf32>
    %118 = tpu.matmul %115, %117, %cst_111 {dimension_numbers = #tpu.dot_dimension_numbers<[1], [0], [0], [1], [0, 0, 1, 1], [], []>} : vector<64x128xbf16>, vector<128x128xbf16>, vector<64x128xf32> -> vector<64x128xf32>
    %119 = arith.addf %114, %118 : vector<64x128xf32>
    %c10_112 = arith.constant 10 : index
    %c0_113 = arith.constant 0 : index
    %120 = vector.load %arg10[%c10_112, %c0_113] : memref<82x128xbf16, #tpu.memory_space<vmem>>, vector<64x128xbf16>
    %c5_114 = arith.constant 5 : index
    %c0_115 = arith.constant 0 : index
    %c0_116 = arith.constant 0 : index
    %121 = vector.load %arg4[%c5_114, %c0_115, %c0_116] : memref<9x128x128xbf16, #tpu.memory_space<vmem>>, vector<1x128x128xbf16>
    %122 = vector.shape_cast %121 : vector<1x128x128xbf16> to vector<128x128xbf16>
    %cst_117 = arith.constant dense<0.000000e+00> : vector<64x128xf32>
    %123 = tpu.matmul %120, %122, %cst_117 {dimension_numbers = #tpu.dot_dimension_numbers<[1], [0], [0], [1], [0, 0, 1, 1], [], []>} : vector<64x128xbf16>, vector<128x128xbf16>, vector<64x128xf32> -> vector<64x128xf32>
    %124 = vector.broadcast %18 : vector<64x1xf32> to vector<64x128xf32>
    %125 = arith.mulf %123, %124 : vector<64x128xf32>
    %126 = arith.addf %119, %125 : vector<64x128xf32>
    %c16_118 = arith.constant 16 : index
    %c0_119 = arith.constant 0 : index
    %127 = vector.load %arg10[%c16_118, %c0_119] : memref<82x128xbf16, #tpu.memory_space<vmem>>, vector<64x128xbf16>
    %c6_120 = arith.constant 6 : index
    %c0_121 = arith.constant 0 : index
    %c0_122 = arith.constant 0 : index
    %128 = vector.load %arg4[%c6_120, %c0_121, %c0_122] : memref<9x128x128xbf16, #tpu.memory_space<vmem>>, vector<1x128x128xbf16>
    %129 = vector.shape_cast %128 : vector<1x128x128xbf16> to vector<128x128xbf16>
    %cst_123 = arith.constant dense<0.000000e+00> : vector<64x128xf32>
    %130 = tpu.matmul %127, %129, %cst_123 {dimension_numbers = #tpu.dot_dimension_numbers<[1], [0], [0], [1], [0, 0, 1, 1], [], []>} : vector<64x128xbf16>, vector<128x128xbf16>, vector<64x128xf32> -> vector<64x128xf32>
    %131 = vector.broadcast %17 : vector<64x1xf32> to vector<64x128xf32>
    %132 = arith.mulf %130, %131 : vector<64x128xf32>
    %133 = arith.addf %126, %132 : vector<64x128xf32>
    %c17_124 = arith.constant 17 : index
    %c0_125 = arith.constant 0 : index
    %134 = vector.load %arg10[%c17_124, %c0_125] : memref<82x128xbf16, #tpu.memory_space<vmem>>, vector<64x128xbf16>
    %c7_126 = arith.constant 7 : index
    %c0_127 = arith.constant 0 : index
    %c0_128 = arith.constant 0 : index
    %135 = vector.load %arg4[%c7_126, %c0_127, %c0_128] : memref<9x128x128xbf16, #tpu.memory_space<vmem>>, vector<1x128x128xbf16>
    %136 = vector.shape_cast %135 : vector<1x128x128xbf16> to vector<128x128xbf16>
    %cst_129 = arith.constant dense<0.000000e+00> : vector<64x128xf32>
    %137 = tpu.matmul %134, %136, %cst_129 {dimension_numbers = #tpu.dot_dimension_numbers<[1], [0], [0], [1], [0, 0, 1, 1], [], []>} : vector<64x128xbf16>, vector<128x128xbf16>, vector<64x128xf32> -> vector<64x128xf32>
    %138 = arith.addf %133, %137 : vector<64x128xf32>
    %c18_130 = arith.constant 18 : index
    %c0_131 = arith.constant 0 : index
    %139 = vector.load %arg10[%c18_130, %c0_131] : memref<82x128xbf16, #tpu.memory_space<vmem>>, vector<64x128xbf16>
    %c8_132 = arith.constant 8 : index
    %c0_133 = arith.constant 0 : index
    %c0_134 = arith.constant 0 : index
    %140 = vector.load %arg4[%c8_132, %c0_133, %c0_134] : memref<9x128x128xbf16, #tpu.memory_space<vmem>>, vector<1x128x128xbf16>
    %141 = vector.shape_cast %140 : vector<1x128x128xbf16> to vector<128x128xbf16>
    %cst_135 = arith.constant dense<0.000000e+00> : vector<64x128xf32>
    %142 = tpu.matmul %139, %141, %cst_135 {dimension_numbers = #tpu.dot_dimension_numbers<[1], [0], [0], [1], [0, 0, 1, 1], [], []>} : vector<64x128xbf16>, vector<128x128xbf16>, vector<64x128xf32> -> vector<64x128xf32>
    %143 = vector.broadcast %18 : vector<64x1xf32> to vector<64x128xf32>
    %144 = arith.mulf %142, %143 : vector<64x128xf32>
    %145 = arith.addf %138, %144 : vector<64x128xf32>
    %c0_136 = arith.constant 0 : index
    %c0_137 = arith.constant 0 : index
    %146 = vector.load %arg5[%c0_136, %c0_137] : memref<1x128xf32, #tpu.memory_space<vmem>>, vector<1x128xf32>
    %147 = vector.broadcast %146 : vector<1x128xf32> to vector<64x128xf32>
    %148 = arith.addf %145, %147 : vector<64x128xf32>
    %cst_138 = arith.constant 0.000000e+00 : f32
    %149 = vector.broadcast %cst_138 : f32 to vector<64x128xf32>
    %150 = arith.maximumf %148, %149 : vector<64x128xf32>
    %c0_139 = arith.constant 0 : index
    %c0_140 = arith.constant 0 : index
    %c0_141 = arith.constant 0 : index
    %151 = vector.load %arg8[%c0_139, %c0_140, %c0_141] : memref<1x64x128xf32, #tpu.memory_space<vmem>>, vector<1x64x128xf32>
    %152 = vector.shape_cast %151 : vector<1x64x128xf32> to vector<64x128xf32>
    %153 = vector.shape_cast %150 : vector<64x128xf32> to vector<1x64x128xf32>
    tpu.vector_store %arg8[%c0_139, %c0_140, %c0_141], %153 {strides = array<i32>} : memref<1x64x128xf32, #tpu.memory_space<vmem>>, vector<1x64x128xf32>,
    return
  }
  func.func @transform_0(%arg0: i32) -> (i32, i32, i32, i32, i32) {
    %c0_i32 = arith.constant 0 : i32
    %c0_i32_0 = arith.constant 0 : i32
    %c0_i32_1 = arith.constant 0 : i32
    %c0_i32_2 = arith.constant 0 : i32
    %c0_i32_3 = arith.constant 0 : i32
    return %arg0, %c0_i32, %c0_i32_0, %c0_i32_1, %c0_i32_2 : i32, i32, i32, i32, i32
  }
  func.func @transform_1(%arg0: i32) -> (i32, i32, i32) {
    %c0_i32 = arith.constant 0 : i32
    %c0_i32_0 = arith.constant 0 : i32
    %c0_i32_1 = arith.constant 0 : i32
    %c0_i32_2 = arith.constant 0 : i32
    return %c0_i32, %c0_i32_0, %c0_i32_1 : i32, i32, i32
  }
  func.func @transform_2(%arg0: i32) -> (i32, i32) {
    %c0_i32 = arith.constant 0 : i32
    %c0_i32_0 = arith.constant 0 : i32
    %c0_i32_1 = arith.constant 0 : i32
    return %c0_i32, %c0_i32_0 : i32, i32
  }
  func.func @transform_3(%arg0: i32) -> (i32, i32, i32) {
    %c0_i32 = arith.constant 0 : i32
    %c0_i32_0 = arith.constant 0 : i32
    %c0_i32_1 = arith.constant 0 : i32
    %c0_i32_2 = arith.constant 0 : i32
    return %c0_i32, %c0_i32_0, %c0_i32_1 : i32, i32, i32
  }
  func.func @transform_4(%arg0: i32) -> (i32, i32) {
    %c0_i32 = arith.constant 0 : i32
    %c0_i32_0 = arith.constant 0 : i32
    %c0_i32_1 = arith.constant 0 : i32
    return %c0_i32, %c0_i32_0 : i32, i32
  }
  func.func @transform_5(%arg0: i32) -> (i32, i32) {
    %c0_i32 = arith.constant 0 : i32
    %c0_i32_0 = arith.constant 0 : i32
    %c0_i32_1 = arith.constant 0 : i32
    return %c0_i32, %c0_i32_0 : i32, i32
  }
  func.func @transform_6(%arg0: i32) -> (i32, i32) {
    %c0_i32 = arith.constant 0 : i32
    %c0_i32_0 = arith.constant 0 : i32
    %c0_i32_1 = arith.constant 0 : i32
    return %c0_i32, %c0_i32_0 : i32, i32
  }
  func.func @transform_7(%arg0: i32) -> (i32, i32, i32) {
    %c0_i32 = arith.constant 0 : i32
    %c0_i32_0 = arith.constant 0 : i32
    %c0_i32_1 = arith.constant 0 : i32
    return %arg0, %c0_i32, %c0_i32_0 : i32, i32, i32
  }
}

</mosaic_0001>

<llo_original>
// kernel: down_forward.1
$region0: #{down_forward.1}
  #allocation0 [shape = 'u32[]', space=smem, size = 0x4, offset = 0x4, fixed_abs, tag = 'smem constant byte address 0x4 - core index']
  #allocation1 [shape = 'u32[144,128]{1,0:T(1,128)}', space=vmem, size = 0x12000, scoped, tag = 'internal scratch']
  #allocation2 [shape = 'bf16[82,128]{1,0:T(8,128)(2,1)}', space=vmem, size = 0x5800, scoped, tag = 'scratch operand']
  #allocation3 [shape = 'bf16[82,128]{1,0:T(8,128)(2,1)}', space=vmem, size = 0x5800, scoped, tag = 'scratch operand']
  %s0 = inlined_call_operand.vmem [shape: bf16[2,8,2,8,256], index: 0, kind: input, shape index: {}]
  %s1 = inlined_call_operand.vmem [shape: bf16[9,128,128], index: 1, kind: input, shape index: {}]
  %s2 = inlined_call_operand.vmem [shape: f32[1,128], index: 2, kind: input, shape index: {}]
  %s3 = inlined_call_operand.vmem [shape: bf16[9,128,128], index: 3, kind: input, shape index: {}]
  %s4 = inlined_call_operand.vmem [shape: f32[1,128], index: 4, kind: input, shape index: {}]
  %s5 = inlined_call_operand.vmem [shape: f32[64,1], index: 5, kind: input, shape index: {}]
  %s6 = inlined_call_operand.vmem [shape: f32[64,1], index: 6, kind: input, shape index: {}]
  %s7 = inlined_call_operand.vmem [shape: f32[2,64,128], index: 7, kind: output, shape index: {}]
  %s8 = sld [smem:[#allocation0]]
  $region61: #{down_forward.1} parent=0
    _
  %s10 = ssub.s32 1, %s8
  %s11 = scalar_select 0, %s10, %s8
  loop: start=0, step=1, limit=4
  $region2: #{down_forward.1} parent=0 // loop_pre_header
    _
  $region3: #{down_forward.1} parent=0 // loop_header
    %s13 = sphi 0, %s17
    %p14 = scmp.ge.s32.totalorder %s13, 4
    %s23 = sphi 0, %s25
    %s26 = sphi 0, %s23
    %s27 = sphi 0, %s26
    %s43 = sphi 0, %s27
    %s47 = sphi 0, %s47
    %s49 = sphi 0, %s47
    %s50 = sphi 0, %s49
    %s64 = sphi 0, %s50
    %s68 = sphi 0, %s68
    %s70 = sphi 0, %s68
    %s71 = sphi 0, %s70
    %s85 = sphi 0, %s71
    %s89 = sphi 0, %s89
    %s91 = sphi 0, %s89
    %s92 = sphi 0, %s91
    %s106 = sphi 0, %s92
    %s110 = sphi 0, %s110
    %s112 = sphi 0, %s110
    %s113 = sphi 0, %s112
    %s127 = sphi 0, %s113
    %s131 = sphi 0, %s131
    %s133 = sphi 0, %s131
    %s134 = sphi 0, %s133
    %s148 = sphi 0, %s134
    %s152 = sphi 0, %s152
    %s154 = sphi 0, %s152
    %s155 = sphi 0, %s154
    %s169 = sphi 0, %s155
    %s175 = sphi 0, %s177
    %s178 = sphi 0, %s175
    %s179 = sphi 0, %s178
    %s195 = sphi 0, %s179
  $region4: #{down_forward.1} parent=0 // loop_header_branch
    %16 = sbr.rel (%p14) target = $region8
  $region5: #{down_forward.1} parent=0 // loop_body
    %s18 = ssub.s32 %s13, 1
    %s19 = ssub.s32 %s13, 2
    %s20 = sadd.s32 %s13, 1
    %s21 = ssub.s32 %s13, %s20
    %p22 = scmp.eq.s32.totalorder %s21, 0
    %s24 = sadd.s32 %s23, 1
    %s25 = scalar_select %p22, %s23, %s24
    %p28 = pneg %p22
    %p29 = scmp.eq.s32.totalorder %s13, 1
    %p30 = por %p28, %p29
    %p31 = scmp.ne.s32.totalorder %s23, %s26
    %p32 = scmp.eq.s32.totalorder %s13, 0
    %p33 = por %p31, %p32
    %p34 = scmp.ne.s32.totalorder %s23, %s26
    %p35 = scmp.eq.s32.totalorder %s18, 1
    %p36 = por %p34, %p35
    %p37 = scmp.ne.s32.totalorder %s26, %s27
    %p38 = scmp.eq.s32.totalorder %s18, 0
    %p39 = por %p37, %p38
    %p40 = scmp.ne.s32.totalorder %s26, %s27
    %p41 = scmp.eq.s32.totalorder %s19, 1
    %p42 = por %p40, %p41
    %p44 = scmp.ne.s32.totalorder %s27, %s43
    %p45 = scmp.eq.s32.totalorder %s19, 0
    %p46 = por %p44, %p45
    %s48 = sadd.s32 %s47, 1
    %p51 = scmp.eq.s32.totalorder %s13, 1
    %p52 = scmp.ne.s32.totalorder %s47, %s49
    %p53 = scmp.eq.s32.totalorder %s13, 0
    %p54 = por %p52, %p53
    %p55 = scmp.ne.s32.totalorder %s47, %s49
    %p56 = scmp.eq.s32.totalorder %s18, 1
    %p57 = por %p55, %p56
    %p58 = scmp.ne.s32.totalorder %s49, %s50
    %p59 = scmp.eq.s32.totalorder %s18, 0
    %p60 = por %p58, %p59
    %p61 = scmp.ne.s32.totalorder %s49, %s50
    %p62 = scmp.eq.s32.totalorder %s19, 1
    %p63 = por %p61, %p62
    %p65 = scmp.ne.s32.totalorder %s50, %s64
    %p66 = scmp.eq.s32.totalorder %s19, 0
    %p67 = por %p65, %p66
    %s69 = sadd.s32 %s68, 1
    %p72 = scmp.eq.s32.totalorder %s13, 1
    %p73 = scmp.ne.s32.totalorder %s68, %s70
    %p74 = scmp.eq.s32.totalorder %s13, 0
    %p75 = por %p73, %p74
    %p76 = scmp.ne.s32.totalorder %s68, %s70
    %p77 = scmp.eq.s32.totalorder %s18, 1
    %p78 = por %p76, %p77
    %p79 = scmp.ne.s32.totalorder %s70, %s71
    %p80 = scmp.eq.s32.totalorder %s18, 0
    %p81 = por %p79, %p80
    %p82 = scmp.ne.s32.totalorder %s70, %s71
    %p83 = scmp.eq.s32.totalorder %s19, 1
    %p84 = por %p82, %p83
    %p86 = scmp.ne.s32.totalorder %s71, %s85
    %p87 = scmp.eq.s32.totalorder %s19, 0
    %p88 = por %p86, %p87
    %s90 = sadd.s32 %s89, 1
    %p93 = scmp.eq.s32.totalorder %s13, 1
    %p94 = scmp.ne.s32.totalorder %s89, %s91
    %p95 = scmp.eq.s32.totalorder %s13, 0
    %p96 = por %p94, %p95
    %p97 = scmp.ne.s32.totalorder %s89, %s91
    %p98 = scmp.eq.s32.totalorder %s18, 1
    %p99 = por %p97, %p98
    %p100 = scmp.ne.s32.totalorder %s91, %s92
    %p101 = scmp.eq.s32.totalorder %s18, 0
    %p102 = por %p100, %p101
    %p103 = scmp.ne.s32.totalorder %s91, %s92
    %p104 = scmp.eq.s32.totalorder %s19, 1
    %p105 = por %p103, %p104
    %p107 = scmp.ne.s32.totalorder %s92, %s106
    %p108 = scmp.eq.s32.totalorder %s19, 0
    %p109 = por %p107, %p108
    %s111 = sadd.s32 %s110, 1
    %p114 = scmp.eq.s32.totalorder %s13, 1
    %p115 = scmp.ne.s32.totalorder %s110, %s112
    %p116 = scmp.eq.s32.totalorder %s13, 0
    %p117 = por %p115, %p116
    %p118 = scmp.ne.s32.totalorder %s110, %s112
    %p119 = scmp.eq.s32.totalorder %s18, 1
    %p120 = por %p118, %p119
    %p121 = scmp.ne.s32.totalorder %s112, %s113
    %p122 = scmp.eq.s32.totalorder %s18, 0
    %p123 = por %p121, %p122
    %p124 = scmp.ne.s32.totalorder %s112, %s113
    %p125 = scmp.eq.s32.totalorder %s19, 1
    %p126 = por %p124, %p125
    %p128 = scmp.ne.s32.totalorder %s113, %s127
    %p129 = scmp.eq.s32.totalorder %s19, 0
    %p130 = por %p128, %p129
    %s132 = sadd.s32 %s131, 1
    %p135 = scmp.eq.s32.totalorder %s13, 1
    %p136 = scmp.ne.s32.totalorder %s131, %s133
    %p137 = scmp.eq.s32.totalorder %s13, 0
    %p138 = por %p136, %p137
    %p139 = scmp.ne.s32.totalorder %s131, %s133
    %p140 = scmp.eq.s32.totalorder %s18, 1
    %p141 = por %p139, %p140
    %p142 = scmp.ne.s32.totalorder %s133, %s134
    %p143 = scmp.eq.s32.totalorder %s18, 0
    %p144 = por %p142, %p143
    %p145 = scmp.ne.s32.totalorder %s133, %s134
    %p146 = scmp.eq.s32.totalorder %s19, 1
    %p147 = por %p145, %p146
    %p149 = scmp.ne.s32.totalorder %s134, %s148
    %p150 = scmp.eq.s32.totalorder %s19, 0
    %p151 = por %p149, %p150
    %s153 = sadd.s32 %s152, 1
    %p156 = scmp.eq.s32.totalorder %s13, 1
    %p157 = scmp.ne.s32.totalorder %s152, %s154
    %p158 = scmp.eq.s32.totalorder %s13, 0
    %p159 = por %p157, %p158
    %p160 = scmp.ne.s32.totalorder %s152, %s154
    %p161 = scmp.eq.s32.totalorder %s18, 1
    %p162 = por %p160, %p161
    %p163 = scmp.ne.s32.totalorder %s154, %s155
    %p164 = scmp.eq.s32.totalorder %s18, 0
    %p165 = por %p163, %p164
    %p166 = scmp.ne.s32.totalorder %s154, %s155
    %p167 = scmp.eq.s32.totalorder %s19, 1
    %p168 = por %p166, %p167
    %p170 = scmp.ne.s32.totalorder %s155, %s169
    %p171 = scmp.eq.s32.totalorder %s19, 0
    %p172 = por %p170, %p171
    %s173 = ssub.s32 %s13, %s20
    %p174 = scmp.eq.s32.totalorder %s173, 0
    %s176 = sadd.s32 %s175, 1
    %s177 = scalar_select %p174, %s175, %s176
    %p180 = pneg %p174
    %p181 = scmp.eq.s32.totalorder %s13, 1
    %p182 = por %p180, %p181
    %p183 = scmp.ne.s32.totalorder %s175, %s178
    %p184 = scmp.eq.s32.totalorder %s13, 0
    %p185 = por %p183, %p184
    %p186 = scmp.ne.s32.totalorder %s175, %s178
    %p187 = scmp.eq.s32.totalorder %s18, 1
    %p188 = por %p186, %p187
    %p189 = scmp.ne.s32.totalorder %s178, %s179
    %p190 = scmp.eq.s32.totalorder %s18, 0
    %p191 = por %p189, %p190
    %p192 = scmp.ne.s32.totalorder %s178, %s179
    %p193 = scmp.eq.s32.totalorder %s19, 1
    %p194 = por %p192, %p193
    %p196 = scmp.ne.s32.totalorder %s179, %s195
    %p197 = scmp.eq.s32.totalorder %s19, 0
    %p198 = por %p196, %p197
    %p199 = scmp.le.s32.totalorder 1, %s13
    %p200 = scmp.lt.s32.totalorder %s13, 3
    %p201 = pnand %p199, %p200
    %p202 = pneg %p201
    // Predicated region
    $region9: #{down_forward.1} parent=5 // pred_check
      _
    $region10: #{down_forward.1} parent=5 // pred_check_branch
      %204 = sbr.rel (%p201) target = $region12
    $region11: #{down_forward.1} parent=5 // pred_region
      %s205 = ssub.s32 %s13, 1
      // Predicated region
      $region13: #{down_forward.1} parent=11 // pred_check
        %p206 = pneg %p60
      $region14: #{down_forward.1} parent=11 // pred_check_branch
        %208 = sbr.rel (%p206) target = $region16
      $region15: #{down_forward.1} parent=11 // pred_region
        _
      $region16: #{down_forward.1} parent=11 // pred_fallthru
        _
      // Predicated region
      $region17: #{down_forward.1} parent=11 // pred_check
        %p209 = pneg %p81
      $region18: #{down_forward.1} parent=11 // pred_check_branch
        %211 = sbr.rel (%p209) target = $region20
      $region19: #{down_forward.1} parent=11 // pred_region
        _
      $region20: #{down_forward.1} parent=11 // pred_fallthru
        _
      // Predicated region
      $region21: #{down_forward.1} parent=11 // pred_check
        %p212 = pneg %p102
      $region22: #{down_forward.1} parent=11 // pred_check_branch
        %214 = sbr.rel (%p212) target = $region24
      $region23: #{down_forward.1} parent=11 // pred_region
        _
      $region24: #{down_forward.1} parent=11 // pred_fallthru
        _
      // Predicated region
      $region25: #{down_forward.1} parent=11 // pred_check
        %p215 = pneg %p123
      $region26: #{down_forward.1} parent=11 // pred_check_branch
        %217 = sbr.rel (%p215) target = $region28
      $region27: #{down_forward.1} parent=11 // pred_region
        _
      $region28: #{down_forward.1} parent=11 // pred_fallthru
        _
      // Predicated region
      $region29: #{down_forward.1} parent=11 // pred_check
        %p218 = pneg %p144
      $region30: #{down_forward.1} parent=11 // pred_check_branch
        %220 = sbr.rel (%p218) target = $region32
      $region31: #{down_forward.1} parent=11 // pred_region
        _
      $region32: #{down_forward.1} parent=11 // pred_fallthru
        _
      // Predicated region
      $region33: #{down_forward.1} parent=11 // pred_check
        %p221 = pneg %p165
      $region34: #{down_forward.1} parent=11 // pred_check_branch
        %223 = sbr.rel (%p221) target = $region36
      $region35: #{down_forward.1} parent=11 // pred_region
        _
      $region36: #{down_forward.1} parent=11 // pred_fallthru
        _
    $region12: #{down_forward.1} parent=5 // pred_fallthru
      _
    %p224 = scmp.lt.s32.totalorder %s13, 2
    // Predicated region
    $region37: #{down_forward.1} parent=5 // pred_check
      %p225 = pneg %p224
    $region38: #{down_forward.1} parent=5 // pred_check_branch
      %227 = sbr.rel (%p225) target = $region40
    $region39: #{down_forward.1} parent=5 // pred_region
      // Predicated region
      $region41: #{down_forward.1} parent=39 // pred_check
        %p228 = pneg %p33
      $region42: #{down_forward.1} parent=39 // pred_check_branch
        %230 = sbr.rel (%p228) target = $region44
      $region43: #{down_forward.1} parent=39 // pred_region
        %p231 = scmp.lt.s32.totalorder %s13, 1
        %s232 = scalar_select %p231, %s13, 1
        %s233 = smul.addr %s232, 32
        %s234 = smul.addr %s233, 4
        %s235 = scalar_lea.vmem %s0, %s234
      $region44: #{down_forward.1} parent=39 // pred_fallthru
        _
    $region40: #{down_forward.1} parent=5 // pred_fallthru
      _
    %p236 = scmp.le.s32.totalorder 1, %s13
    %p237 = scmp.lt.s32.totalorder %s13, 3
    %p238 = pnand %p236, %p237
    %p239 = pneg %p238
    // Predicated region
    $region45: #{down_forward.1} parent=5 // pred_check
      _
    $region46: #{down_forward.1} parent=5 // pred_check_branch
      %241 = sbr.rel (%p238) target = $region48
    $region47: #{down_forward.1} parent=5 // pred_region
      %s242 = ssub.s32 %s13, 1
      %p243 = scmp.lt.s32.totalorder %s18, 1
      %s244 = scalar_select %p243, %s18, 1
      %s245 = smul.addr %s244, 32
      %s246 = smul.addr %s245, 4
      %s247 = scalar_lea.vmem %s0, %s246
      %p248 = pneg %p39
      %p249 = pneg %p36
      %p250 = pneg %p60
      %p251 = pneg %p57
      %p252 = pneg %p81
      %p253 = pneg %p78
      %p254 = pneg %p102
      %p255 = pneg %p99
      %p256 = pneg %p123
      %p257 = pneg %p120
      %p258 = pneg %p144
      %p259 = pneg %p141
      %p260 = pneg %p165
      %p261 = pneg %p162
      %p262 = pneg %p191
      %p263 = pneg %p188
      %p264 = scmp.lt.s32.totalorder %s18, 1
      %s265 = scalar_select %p264, %s18, 1
      %s266 = smul.addr %s265, 8
      %s267 = smul.addr %s266, 8
      %s268 = scalar_lea.vmem %s7, %s267
      %p269 = scmp.lt.s32.totalorder %s18, 1
      %s270 = scalar_select %p269, %s18, 1
      %s271 = smul.addr %s270, 32
      %s272 = smul.addr %s271, 4
      %s273 = scalar_lea.vmem %s0, %s272
      %p274 = scmp.lt.s32.totalorder %s18, 1
      %s275 = scalar_select %p274, %s18, 1
      %s276 = smul.addr %s275, 8
      %s277 = smul.addr %s276, 8
      %s278 = scalar_lea.vmem %s7, %s277
      %v280 = vld [vmem:[%s273] sm:$0xf]
      %v281 = vld [vmem:[%s273 + $0x10] sm:$0xf]
      %v282 = vld [vmem:[%s273 + $0x20] sm:$0xf]
      %v283 = vld [vmem:[%s273 + $0x30] sm:$0xf]
      %v284 = vld [vmem:[%s273 + $0x40] sm:$0xf]
      %v285 = vld [vmem:[%s273 + $0x50] sm:$0xf]
      %v286 = vld [vmem:[%s273 + $0x60] sm:$0xf]
      %v287 = vld [vmem:[%s273 + $0x70] sm:$0xf]
      %v288 = vld [vmem:[%s273 + $0x4] sm:$0xf]
      %v289 = vld [vmem:[%s273 + $0x14] sm:$0xf]
      %v290 = vld [vmem:[%s273 + $0x24] sm:$0xf]
      %v291 = vld [vmem:[%s273 + $0x34] sm:$0xf]
      %v292 = vld [vmem:[%s273 + $0x44] sm:$0xf]
      %v293 = vld [vmem:[%s273 + $0x54] sm:$0xf]
      %v294 = vld [vmem:[%s273 + $0x64] sm:$0xf]
      %v295 = vld [vmem:[%s273 + $0x74] sm:$0xf]
      %s296 = scalar_lea.vmem %s273, 8
      %v297 = vld [vmem:[%s296] sm:$0xf]
      %v298 = vld [vmem:[%s296 + $0x10] sm:$0xf]
      %v299 = vld [vmem:[%s296 + $0x20] sm:$0xf]
      %v300 = vld [vmem:[%s296 + $0x30] sm:$0xf]
      %v301 = vld [vmem:[%s296 + $0x40] sm:$0xf]
      %v302 = vld [vmem:[%s296 + $0x50] sm:$0xf]
      %v303 = vld [vmem:[%s296 + $0x60] sm:$0xf]
      %v304 = vld [vmem:[%s296 + $0x70] sm:$0xf]
      %v305 = vld [vmem:[%s296 + $0x4] sm:$0xf]
      %v306 = vld [vmem:[%s296 + $0x14] sm:$0xf]
      %v307 = vld [vmem:[%s296 + $0x24] sm:$0xf]
      %v308 = vld [vmem:[%s296 + $0x34] sm:$0xf]
      %v309 = vld [vmem:[%s296 + $0x44] sm:$0xf]
      %v310 = vld [vmem:[%s296 + $0x54] sm:$0xf]
      %v311 = vld [vmem:[%s296 + $0x64] sm:$0xf]
      %v312 = vld [vmem:[%s296 + $0x74] sm:$0xf]
      %v313 = vmax.bf16 %v280, %v288
      %v314 = vmax.bf16 %v281, %v289
      %v315 = vmax.bf16 %v282, %v290
      %v316 = vmax.bf16 %v283, %v291
      %v317 = vmax.bf16 %v284, %v292
      %v318 = vmax.bf16 %v285, %v293
      %v319 = vmax.bf16 %v286, %v294
      %v320 = vmax.bf16 %v287, %v295
      %v321 = vmax.bf16 %v297, %v305
      %v322 = vmax.bf16 %v298, %v306
      %v323 = vmax.bf16 %v299, %v307
      %v324 = vmax.bf16 %v300, %v308
      %v325 = vmax.bf16 %v301, %v309
      %v326 = vmax.bf16 %v302, %v310
      %v327 = vmax.bf16 %v303, %v311
      %v328 = vmax.bf16 %v304, %v312
      %v329 = vmax.bf16 %v313, %v321
      %v330 = vmax.bf16 %v314, %v322
      %v331 = vmax.bf16 %v315, %v323
      %v332 = vmax.bf16 %v316, %v324
      %v333 = vmax.bf16 %v317, %v325
      %v334 = vmax.bf16 %v318, %v326
      %v335 = vmax.bf16 %v319, %v327
      %v336 = vmax.bf16 %v320, %v328
      %337 = vst [vmem:[#allocation2] sm:$0xf] 0
      %vm338 = vcmask 1040384
      %vm339 = vsmask.f32 256
      %vm340 = vmand %vm338, %vm339
      %v341 = vld [vmem:[#allocation2 + $0x4] sm:$0x1]
      %v342 = vsel %vm340, 0, %v341
      %343 = vst [vmem:[#allocation2 + $0x4] sm:$0x1] %v342
      %vm344 = vcmask 1043456
      %vm345 = vsmask.f32 7938
      %vm346 = vmand %vm344, %vm345
      %v347 = vld [vmem:[#allocation2 + $0x24] sm:$0xf]
      %v348 = vsel %vm346, 0, %v347
      %349 = vst [vmem:[#allocation2 + $0x24] sm:$0xf] %v348
      %350 = vst [vmem:[#allocation2 + $0x28] sm:$0x1] 0
      %vm351 = vsmask.f32 4368
      %vm352 = vmor %vm339, %vm351
      %v354 = vshrl.u32 %v329, 16
      %v356 = vrot.slane %v354, 7
      %v357 = vshll.u32 %v329, 16
      %v359 = vor.u32 %v356, %v357
      %v360 = vrot.slane %v356, 4
      %v362 = vshrl.u32 %v330, 16
      %v364 = vrot.slane %v362, 7
      %v365 = vshll.u32 %v330, 16
      %v367 = vor.u32 %v364, %v365
      %v368 = vsel %vm352, %v360, %v367
      %v369 = vrot.slane %v364, 4
      %v371 = vshrl.u32 %v331, 16
      %v373 = vrot.slane %v371, 7
      %v374 = vshll.u32 %v331, 16
      %v376 = vor.u32 %v373, %v374
      %v377 = vsel %vm352, %v369, %v376
      %v378 = vrot.slane %v373, 4
      %v380 = vshrl.u32 %v332, 16
      %v382 = vrot.slane %v380, 7
      %v383 = vshll.u32 %v332, 16
      %v385 = vor.u32 %v382, %v383
      %v386 = vsel %vm352, %v378, %v385
      %v387 = vrot.slane %v382, 4
      %v389 = vshrl.u32 %v333, 16
      %v391 = vrot.slane %v389, 7
      %v392 = vshll.u32 %v333, 16
      %v394 = vor.u32 %v391, %v392
      %v395 = vsel %vm352, %v387, %v394
      %v396 = vrot.slane %v391, 4
      %v398 = vshrl.u32 %v334, 16
      %v400 = vrot.slane %v398, 7
      %v401 = vshll.u32 %v334, 16
      %v403 = vor.u32 %v400, %v401
      %v404 = vsel %vm352, %v396, %v403
      %v405 = vrot.slane %v400, 4
      %v407 = vshrl.u32 %v335, 16
      %v409 = vrot.slane %v407, 7
      %v410 = vshll.u32 %v335, 16
      %v412 = vor.u32 %v409, %v410
      %v413 = vsel %vm352, %v405, %v412
      %v414 = vrot.slane %v409, 4
      %v416 = vshrl.u32 %v336, 16
      %v418 = vrot.slane %v416, 7
      %v419 = vshll.u32 %v336, 16
      %v421 = vor.u32 %v418, %v419
      %v422 = vsel %vm352, %v414, %v421
      %v423 = vrot.slane %v418, 4
      %v433 = vld [vmem:[#allocation2 + $0x4] sm:$0xf]
      %v434 = vsel %vm346, %v359, %v433
      %435 = vst [vmem:[#allocation2 + $0x4] sm:$0xf] %v434
      %436 = vst [vmem:[#allocation2 + $0x8] sm:$0xf] %v368
      %437 = vst [vmem:[#allocation2 + $0xc] sm:$0xf] %v377
      %438 = vst [vmem:[#allocation2 + $0x10] sm:$0xf] %v386
      %439 = vst [vmem:[#allocation2 + $0x14] sm:$0xf] %v395
      %440 = vst [vmem:[#allocation2 + $0x18] sm:$0xf] %v404
      %441 = vst [vmem:[#allocation2 + $0x1c] sm:$0xf] %v413
      %442 = vst [vmem:[#allocation2 + $0x20] sm:$0xf] %v422
      %v443 = vld [vmem:[#allocation2 + $0x24] sm:$0x1]
      %v444 = vsel %vm340, %v423, %v443
      %445 = vst [vmem:[#allocation2 + $0x24] sm:$0x1] %v444
      %v446 = vld [vmem:[%s5] sm:$0xff]
      %v447 = vld [vmem:[%s5 + $0x8] sm:$0xff]
      %v448 = vld [vmem:[%s5 + $0x10] sm:$0xff]
      %v449 = vld [vmem:[%s5 + $0x18] sm:$0xff]
      %v450 = vld [vmem:[%s5 + $0x20] sm:$0xff]
      %v451 = vld [vmem:[%s5 + $0x28] sm:$0xff]
      %v452 = vld [vmem:[%s5 + $0x30] sm:$0xff]
      %v453 = vld [vmem:[%s5 + $0x38] sm:$0xff]
      %v454 = vld [vmem:[%s6] sm:$0xff]
      %v455 = vld [vmem:[%s6 + $0x8] sm:$0xff]
      %v456 = vld [vmem:[%s6 + $0x10] sm:$0xff]
      %v457 = vld [vmem:[%s6 + $0x18] sm:$0xff]
      %v458 = vld [vmem:[%s6 + $0x20] sm:$0xff]
      %v459 = vld [vmem:[%s6 + $0x28] sm:$0xff]
      %v460 = vld [vmem:[%s6 + $0x30] sm:$0xff]
      %v461 = vld [vmem:[%s6 + $0x38] sm:$0xff]
      %v462 = vld [vmem:[#allocation2] sm:$0xf]
      %v463 = vld [vmem:[#allocation2 + $0x4] sm:$0xf]
      %v464 = vld [vmem:[#allocation2 + $0x8] sm:$0xf]
      %v465 = vld [vmem:[#allocation2 + $0xc] sm:$0xf]
      %v466 = vld [vmem:[#allocation2 + $0x10] sm:$0xf]
      %v467 = vld [vmem:[#allocation2 + $0x14] sm:$0xf]
      %v468 = vld [vmem:[#allocation2 + $0x18] sm:$0xf]
      %v469 = vld [vmem:[#allocation2 + $0x1c] sm:$0xf]
      %v470 = vld [vmem:[%s1] sm:$0xf]
      %v471 = vld [vmem:[%s1 + $0x4] sm:$0xf]
      %v472 = vld [vmem:[%s1 + $0x8] sm:$0xf]
      %v473 = vld [vmem:[%s1 + $0xc] sm:$0xf]
      %v474 = vld [vmem:[%s1 + $0x10] sm:$0xf]
      %v475 = vld [vmem:[%s1 + $0x14] sm:$0xf]
      %v476 = vld [vmem:[%s1 + $0x18] sm:$0xf]
      %v477 = vld [vmem:[%s1 + $0x1c] sm:$0xf]
      %v478 = vld [vmem:[%s1 + $0x20] sm:$0xf]
      %v479 = vld [vmem:[%s1 + $0x24] sm:$0xf]
      %v480 = vld [vmem:[%s1 + $0x28] sm:$0xf]
      %v481 = vld [vmem:[%s1 + $0x2c] sm:$0xf]
      %v482 = vld [vmem:[%s1 + $0x30] sm:$0xf]
      %v483 = vld [vmem:[%s1 + $0x34] sm:$0xf]
      %v484 = vld [vmem:[%s1 + $0x38] sm:$0xf]
      %v485 = vld [vmem:[%s1 + $0x3c] sm:$0xf]
      %v494 = vunpack.c.l.b16 %v462
      %v495 = vunpack.c.l.b16 %v463
      %v496 = vunpack.c.l.b16 %v464
      %v497 = vunpack.c.l.b16 %v465
      %v498 = vunpack.c.l.b16 %v466
      %v499 = vunpack.c.l.b16 %v467
      %v500 = vunpack.c.l.b16 %v468
      %v501 = vunpack.c.l.b16 %v469
      %v502 = vpack.c.b16 %v495, %v494
      %v503 = vpack.c.b16 %v497, %v496
      %v504 = vpack.c.b16 %v499, %v498
      %v505 = vpack.c.b16 %v501, %v500
      %v526 = vunpack.c.l.b16 %v470
      %v527 = vunpack.c.l.b16 %v471
      %v528 = vunpack.c.l.b16 %v472
      %v529 = vunpack.c.l.b16 %v473
      %v530 = vunpack.c.l.b16 %v474
      %v531 = vunpack.c.l.b16 %v475
      %v532 = vunpack.c.l.b16 %v476
      %v533 = vunpack.c.l.b16 %v477
      %v534 = vunpack.c.l.b16 %v478
      %v535 = vunpack.c.l.b16 %v479
      %v536 = vunpack.c.l.b16 %v480
      %v537 = vunpack.c.l.b16 %v481
      %v538 = vunpack.c.l.b16 %v482
      %v539 = vunpack.c.l.b16 %v483
      %v540 = vunpack.c.l.b16 %v484
      %v541 = vunpack.c.l.b16 %v485
      %v542 = vpack.c.b16 %v527, %v526
      %v543 = vpack.c.b16 %v529, %v528
      %v544 = vpack.c.b16 %v531, %v530
      %v545 = vpack.c.b16 %v533, %v532
      %v546 = vpack.c.b16 %v535, %v534
      %v547 = vpack.c.b16 %v537, %v536
      %v548 = vpack.c.b16 %v539, %v538
      %v549 = vpack.c.b16 %v541, %v540
      %558 = vmatprep.subr.bf16.mxu0 0
      %559 = vmatpush1.bf16.msra.mxu0 %v549
      %560 = vmatprep.subr.bf16.mxu0 0
      %561 = vmatpush1.bf16.msra.mxu0 %v548
      %562 = vmatprep.subr.bf16.mxu0 0
      %563 = vmatpush1.bf16.msra.mxu0 %v547
      %564 = vmatprep.subr.bf16.mxu0 0
      %565 = vmatpush1.bf16.msra.mxu0 %v546
      %566 = vmatprep.subr.bf16.mxu0 0
      %567 = vmatpush1.bf16.msra.mxu0 %v545
      %568 = vmatprep.subr.bf16.mxu0 0
      %569 = vmatpush1.bf16.msra.mxu0 %v544
      %570 = vmatprep.subr.bf16.mxu0 0
      %571 = vmatpush1.bf16.msra.mxu0 %v543
      %572 = vmatprep.subr.bf16.mxu0 0
      %573 = vmatpush1.bf16.msra.mxu0 %v542
      %574 = vmatprep.subr.bf16.mxu0 0
      %575 = vmatpush2.bf16.msra.mxu0 0
      %576 = vmatprep.subr.bf16.mxu0 0
      %577 = vmatpush2.bf16.msra.mxu0 0
      %578 = vmatprep.subr.bf16.mxu0 0
      %579 = vmatpush2.bf16.msra.mxu0 0
      %580 = vmatprep.subr.bf16.mxu0 0
      %581 = vmatpush2.bf16.msra.mxu0 0
      %582 = vmatprep.subr.bf16.mxu0 0
      %583 = vmatpush2.bf16.msra.mxu0 0
      %584 = vmatprep.subr.bf16.mxu0 0
      %585 = vmatpush2.bf16.msra.mxu0 0
      %586 = vmatprep.subr.bf16.mxu0 0
      %587 = vmatpush2.bf16.msra.mxu0 0
      %588 = vmatprep.subr.bf16.mxu0 0
      %589 = vmatpush2.bf16.msra.mxu0 0
      %590 = vmatprep.mubr.bf16.mxu0 0
      %591 = vmatmul.mubr.bf16.gmra.mxu0 %v502
      %v592 = vpop.f32.mrf.mxu0
      %v593 = vadd.f32 0.0, %v592
      %v594 = vpop.f32.mrf.mxu0
      %v595 = vpop.f32.mrf.mxu0
      %v596 = vadd.f32 0.0, %v595
      %v597 = vpop.f32.mrf.mxu0
      %598 = vmatprep.mubr.bf16.mxu0 0
      %599 = vmatmul.mubr.bf16.gmra.mxu0 %v503
      %v600 = vpop.f32.mrf.mxu0
      %v601 = vadd.f32 0.0, %v600
      %v602 = vpop.f32.mrf.mxu0
      %v603 = vpop.f32.mrf.mxu0
      %v604 = vadd.f32 0.0, %v603
      %v605 = vpop.f32.mrf.mxu0
      %606 = vmatprep.mubr.bf16.mxu0 0
      %607 = vmatmul.mubr.bf16.gmra.mxu0 %v504
      %v608 = vpop.f32.mrf.mxu0
      %v609 = vadd.f32 0.0, %v608
      %v610 = vpop.f32.mrf.mxu0
      %v611 = vpop.f32.mrf.mxu0
      %v612 = vadd.f32 0.0, %v611
      %v613 = vpop.f32.mrf.mxu0
      %614 = vmatprep.mubr.bf16.mxu0 0
      %615 = vmatmul.mubr.bf16.gmra.mxu0 %v505
      %v616 = vpop.f32.mrf.mxu0
      %v617 = vadd.f32 0.0, %v616
      %v618 = vpop.f32.mrf.mxu0
      %v619 = vpop.f32.mrf.mxu0
      %v620 = vadd.f32 0.0, %v619
      %v621 = vpop.f32.mrf.mxu0
      %622 = vdwg.mxu0
      %624 = vset.pattern.permute.xlu0 0
      %625 = vperm.xlu0 %624, %v446
      %v626 = vpop.permute.xlu0 %625
      %629 = vset.pattern.permute.xlu0 0
      %630 = vperm.xlu0 %629, %v447
      %v631 = vpop.permute.xlu0 %630
      %634 = vset.pattern.permute.xlu0 0
      %635 = vperm.xlu0 %634, %v448
      %v636 = vpop.permute.xlu0 %635
      %639 = vset.pattern.permute.xlu0 0
      %640 = vperm.xlu0 %639, %v449
      %v641 = vpop.permute.xlu0 %640
      %644 = vset.pattern.permute.xlu0 0
      %645 = vperm.xlu0 %644, %v450
      %v646 = vpop.permute.xlu0 %645
      %649 = vset.pattern.permute.xlu0 0
      %650 = vperm.xlu0 %649, %v451
      %v651 = vpop.permute.xlu0 %650
      %654 = vset.pattern.permute.xlu0 0
      %655 = vperm.xlu0 %654, %v452
      %v656 = vpop.permute.xlu0 %655
      %659 = vset.pattern.permute.xlu0 0
      %660 = vperm.xlu0 %659, %v453
      %v661 = vpop.permute.xlu0 %660
      %v663 = vmul.f32 %v593, %v626
      %v664 = vmul.f32 %v596, %v631
      %v665 = vmul.f32 %v601, %v636
      %v666 = vmul.f32 %v604, %v641
      %v667 = vmul.f32 %v609, %v646
      %v668 = vmul.f32 %v612, %v651
      %v669 = vmul.f32 %v617, %v656
      %v670 = vmul.f32 %v620, %v661
      %v671 = vadd.f32 %v663, 0.0
      %v672 = vadd.f32 %v664, 0.0
      %v673 = vadd.f32 %v665, 0.0
      %v674 = vadd.f32 %v666, 0.0
      %v675 = vadd.f32 %v667, 0.0
      %v676 = vadd.f32 %v668, 0.0
      %v677 = vadd.f32 %v669, 0.0
      %v678 = vadd.f32 %v670, 0.0
      %v679 = vld [vmem:[#allocation2] sm:$0xf]
      %v680 = vld [vmem:[#allocation2 + $0x4] sm:$0xf]
      %v681 = vld [vmem:[#allocation2 + $0x8] sm:$0xf]
      %v682 = vld [vmem:[#allocation2 + $0xc] sm:$0xf]
      %v683 = vld [vmem:[#allocation2 + $0x10] sm:$0xf]
      %v684 = vld [vmem:[#allocation2 + $0x14] sm:$0xf]
      %v685 = vld [vmem:[#allocation2 + $0x18] sm:$0xf]
      %v686 = vld [vmem:[#allocation2 + $0x1c] sm:$0xf]
      %v687 = vld [vmem:[#allocation2 + $0x20] sm:$0x1]
      %s688 = scalar_lea.vmem %s1, 64
      %v689 = vld [vmem:[%s688] sm:$0xf]
      %v690 = vld [vmem:[%s688 + $0x4] sm:$0xf]
      %v691 = vld [vmem:[%s688 + $0x8] sm:$0xf]
      %v692 = vld [vmem:[%s688 + $0xc] sm:$0xf]
      %v693 = vld [vmem:[%s688 + $0x10] sm:$0xf]
      %v694 = vld [vmem:[%s688 + $0x14] sm:$0xf]
      %v695 = vld [vmem:[%s688 + $0x18] sm:$0xf]
      %v696 = vld [vmem:[%s688 + $0x1c] sm:$0xf]
      %v697 = vld [vmem:[%s688 + $0x20] sm:$0xf]
      %v698 = vld [vmem:[%s688 + $0x24] sm:$0xf]
      %v699 = vld [vmem:[%s688 + $0x28] sm:$0xf]
      %v700 = vld [vmem:[%s688 + $0x2c] sm:$0xf]
      %v701 = vld [vmem:[%s688 + $0x30] sm:$0xf]
      %v702 = vld [vmem:[%s688 + $0x34] sm:$0xf]
      %v703 = vld [vmem:[%s688 + $0x38] sm:$0xf]
      %v704 = vld [vmem:[%s688 + $0x3c] sm:$0xf]
      %v714 = vunpack.c.l.b16 %v679
      %v715 = vunpack.c.l.b16 %v680
      %v716 = vunpack.c.l.b16 %v681
      %v717 = vunpack.c.l.b16 %v682
      %v718 = vunpack.c.l.b16 %v683
      %v719 = vunpack.c.l.b16 %v684
      %v720 = vunpack.c.l.b16 %v685
      %v721 = vunpack.c.l.b16 %v686
      %v722 = vunpack.c.l.b16 %v687
      %v723 = vpack.c.b16 %v715, %v714
      %v724 = vpack.c.b16 %v717, %v716
      %v725 = vpack.c.b16 %v719, %v718
      %v726 = vpack.c.b16 %v721, %v720
      %v727 = vpack.c.b16 %v722, %v722
      %vm728 = vsmask.f32 7424
      %v730 = vshrl.u32 %v723, 16
      %v732 = vshll.u32 %v723, 16
      %v734 = vrot.slane %v732, 1
      %v735 = vor.u32 %v730, %v734
      %v737 = vshll.u32 %v724, 16
      %v739 = vrot.slane %v737, 1
      %v740 = vsel %vm728, %v735, %v739
      %v741 = vshrl.u32 %v724, 16
      %v743 = vor.u32 %v741, %v739
      %v745 = vshll.u32 %v725, 16
      %v747 = vrot.slane %v745, 1
      %v748 = vsel %vm728, %v743, %v747
      %v749 = vshrl.u32 %v725, 16
      %v751 = vor.u32 %v749, %v747
      %v753 = vshll.u32 %v726, 16
      %v755 = vrot.slane %v753, 1
      %v756 = vsel %vm728, %v751, %v755
      %v757 = vshrl.u32 %v726, 16
      %v759 = vor.u32 %v757, %v755
      %v761 = vshll.u32 %v727, 16
      %v763 = vrot.slane %v761, 1
      %v764 = vsel %vm728, %v759, %v763
      %v785 = vunpack.c.l.b16 %v689
      %v786 = vunpack.c.l.b16 %v690
      %v787 = vunpack.c.l.b16 %v691
      %v788 = vunpack.c.l.b16 %v692
      %v789 = vunpack.c.l.b16 %v693
      %v790 = vunpack.c.l.b16 %v694
      %v791 = vunpack.c.l.b16 %v695
      %v792 = vunpack.c.l.b16 %v696
      %v793 = vunpack.c.l.b16 %v697
      %v794 = vunpack.c.l.b16 %v698
      %v795 = vunpack.c.l.b16 %v699
      %v796 = vunpack.c.l.b16 %v700
      %v797 = vunpack.c.l.b16 %v701
      %v798 = vunpack.c.l.b16 %v702
      %v799 = vunpack.c.l.b16 %v703
      %v800 = vunpack.c.l.b16 %v704
      %v801 = vpack.c.b16 %v786, %v785
      %v802 = vpack.c.b16 %v788, %v787
      %v803 = vpack.c.b16 %v790, %v789
      %v804 = vpack.c.b16 %v792, %v791
      %v805 = vpack.c.b16 %v794, %v793
      %v806 = vpack.c.b16 %v796, %v795
      %v807 = vpack.c.b16 %v798, %v797
      %v808 = vpack.c.b16 %v800, %v799
      %817 = vmatprep.subr.bf16.mxu0 0
      %818 = vmatpush1.bf16.msra.mxu0 %v808
      %819 = vmatprep.subr.bf16.mxu0 0
      %820 = vmatpush1.bf16.msra.mxu0 %v807
      %821 = vmatprep.subr.bf16.mxu0 0
      %822 = vmatpush1.bf16.msra.mxu0 %v806
      %823 = vmatprep.subr.bf16.mxu0 0
      %824 = vmatpush1.bf16.msra.mxu0 %v805
      %825 = vmatprep.subr.bf16.mxu0 0
      %826 = vmatpush1.bf16.msra.mxu0 %v804
      %827 = vmatprep.subr.bf16.mxu0 0
      %828 = vmatpush1.bf16.msra.mxu0 %v803
      %829 = vmatprep.subr.bf16.mxu0 0
      %830 = vmatpush1.bf16.msra.mxu0 %v802
      %831 = vmatprep.subr.bf16.mxu0 0
      %832 = vmatpush1.bf16.msra.mxu0 %v801
      %833 = vmatprep.subr.bf16.mxu0 0
      %834 = vmatpush2.bf16.msra.mxu0 0
      %835 = vmatprep.subr.bf16.mxu0 0
      %836 = vmatpush2.bf16.msra.mxu0 0
      %837 = vmatprep.subr.bf16.mxu0 0
      %838 = vmatpush2.bf16.msra.mxu0 0
      %839 = vmatprep.subr.bf16.mxu0 0
      %840 = vmatpush2.bf16.msra.mxu0 0
      %841 = vmatprep.subr.bf16.mxu0 0
      %842 = vmatpush2.bf16.msra.mxu0 0
      %843 = vmatprep.subr.bf16.mxu0 0
      %844 = vmatpush2.bf16.msra.mxu0 0
      %845 = vmatprep.subr.bf16.mxu0 0
      %846 = vmatpush2.bf16.msra.mxu0 0
      %847 = vmatprep.subr.bf16.mxu0 0
      %848 = vmatpush2.bf16.msra.mxu0 0
      %849 = vmatprep.mubr.bf16.mxu0 0
      %850 = vmatmul.mubr.bf16.gmra.mxu0 %v740
      %v851 = vpop.f32.mrf.mxu0
      %v852 = vadd.f32 0.0, %v851
      %v853 = vpop.f32.mrf.mxu0
      %v854 = vpop.f32.mrf.mxu0
      %v855 = vadd.f32 0.0, %v854
      %v856 = vpop.f32.mrf.mxu0
      %857 = vmatprep.mubr.bf16.mxu0 0
      %858 = vmatmul.mubr.bf16.gmra.mxu0 %v748
      %v859 = vpop.f32.mrf.mxu0
      %v860 = vadd.f32 0.0, %v859
      %v861 = vpop.f32.mrf.mxu0
      %v862 = vpop.f32.mrf.mxu0
      %v863 = vadd.f32 0.0, %v862
      %v864 = vpop.f32.mrf.mxu0
      %865 = vmatprep.mubr.bf16.mxu0 0
      %866 = vmatmul.mubr.bf16.gmra.mxu0 %v756
      %v867 = vpop.f32.mrf.mxu0
      %v868 = vadd.f32 0.0, %v867
      %v869 = vpop.f32.mrf.mxu0
      %v870 = vpop.f32.mrf.mxu0
      %v871 = vadd.f32 0.0, %v870
      %v872 = vpop.f32.mrf.mxu0
      %873 = vmatprep.mubr.bf16.mxu0 0
      %874 = vmatmul.mubr.bf16.gmra.mxu0 %v764
      %v875 = vpop.f32.mrf.mxu0
      %v876 = vadd.f32 0.0, %v875
      %v877 = vpop.f32.mrf.mxu0
      %v878 = vpop.f32.mrf.mxu0
      %v879 = vadd.f32 0.0, %v878
      %v880 = vpop.f32.mrf.mxu0
      %881 = vdwg.mxu0
      %v882 = vadd.f32 %v671, %v852
      %v883 = vadd.f32 %v672, %v855
      %v884 = vadd.f32 %v673, %v860
      %v885 = vadd.f32 %v674, %v863
      %v886 = vadd.f32 %v675, %v868
      %v887 = vadd.f32 %v676, %v871
      %v888 = vadd.f32 %v677, %v876
      %v889 = vadd.f32 %v678, %v879
      %v890 = vld [vmem:[#allocation2] sm:$0xe]
      %s891 = scalar_lea.vmem %s1, 128
      %v892 = vld [vmem:[%s891] sm:$0xf]
      %v893 = vld [vmem:[%s891 + $0x4] sm:$0xf]
      %v894 = vld [vmem:[%s891 + $0x8] sm:$0xf]
      %v895 = vld [vmem:[%s891 + $0xc] sm:$0xf]
      %v896 = vld [vmem:[%s891 + $0x10] sm:$0xf]
      %v897 = vld [vmem:[%s891 + $0x14] sm:$0xf]
      %v898 = vld [vmem:[%s891 + $0x18] sm:$0xf]
      %v899 = vld [vmem:[%s891 + $0x1c] sm:$0xf]
      %v900 = vld [vmem:[%s891 + $0x20] sm:$0xf]
      %v901 = vld [vmem:[%s891 + $0x24] sm:$0xf]
      %v902 = vld [vmem:[%s891 + $0x28] sm:$0xf]
      %v903 = vld [vmem:[%s891 + $0x2c] sm:$0xf]
      %v904 = vld [vmem:[%s891 + $0x30] sm:$0xf]
      %v905 = vld [vmem:[%s891 + $0x34] sm:$0xf]
      %v906 = vld [vmem:[%s891 + $0x38] sm:$0xf]
      %v907 = vld [vmem:[%s891 + $0x3c] sm:$0xf]
      %v909 = vunpack.c.l.b16 %v890
      %v910 = vpack.c.b16 %v715, %v909
      %vm911 = vcmask 1046528
      %v912 = vrot.slane %v910, 1
      %v913 = vrot.slane %v724, 1
      %v914 = vsel %vm911, %v912, %v913
      %v915 = vrot.slane %v725, 1
      %v916 = vsel %vm911, %v913, %v915
      %v917 = vrot.slane %v726, 1
      %v918 = vsel %vm911, %v915, %v917
      %v919 = vrot.slane %v727, 1
      %v920 = vsel %vm911, %v917, %v919
      %v941 = vunpack.c.l.b16 %v892
      %v942 = vunpack.c.l.b16 %v893
      %v943 = vunpack.c.l.b16 %v894
      %v944 = vunpack.c.l.b16 %v895
      %v945 = vunpack.c.l.b16 %v896
      %v946 = vunpack.c.l.b16 %v897
      %v947 = vunpack.c.l.b16 %v898
      %v948 = vunpack.c.l.b16 %v899
      %v949 = vunpack.c.l.b16 %v900
      %v950 = vunpack.c.l.b16 %v901
      %v951 = vunpack.c.l.b16 %v902
      %v952 = vunpack.c.l.b16 %v903
      %v953 = vunpack.c.l.b16 %v904
      %v954 = vunpack.c.l.b16 %v905
      %v955 = vunpack.c.l.b16 %v906
      %v956 = vunpack.c.l.b16 %v907
      %v957 = vpack.c.b16 %v942, %v941
      %v958 = vpack.c.b16 %v944, %v943
      %v959 = vpack.c.b16 %v946, %v945
      %v960 = vpack.c.b16 %v948, %v947
      %v961 = vpack.c.b16 %v950, %v949
      %v962 = vpack.c.b16 %v952, %v951
      %v963 = vpack.c.b16 %v954, %v953
      %v964 = vpack.c.b16 %v956, %v955
      %973 = vmatprep.subr.bf16.mxu0 0
      %974 = vmatpush1.bf16.msra.mxu0 %v964
      %975 = vmatprep.subr.bf16.mxu0 0
      %976 = vmatpush1.bf16.msra.mxu0 %v963
      %977 = vmatprep.subr.bf16.mxu0 0
      %978 = vmatpush1.bf16.msra.mxu0 %v962
      %979 = vmatprep.subr.bf16.mxu0 0
      %980 = vmatpush1.bf16.msra.mxu0 %v961
      %981 = vmatprep.subr.bf16.mxu0 0
      %982 = vmatpush1.bf16.msra.mxu0 %v960
      %983 = vmatprep.subr.bf16.mxu0 0
      %984 = vmatpush1.bf16.msra.mxu0 %v959
      %985 = vmatprep.subr.bf16.mxu0 0
      %986 = vmatpush1.bf16.msra.mxu0 %v958
      %987 = vmatprep.subr.bf16.mxu0 0
      %988 = vmatpush1.bf16.msra.mxu0 %v957
      %989 = vmatprep.subr.bf16.mxu0 0
      %990 = vmatpush2.bf16.msra.mxu0 0
      %991 = vmatprep.subr.bf16.mxu0 0
      %992 = vmatpush2.bf16.msra.mxu0 0
      %993 = vmatprep.subr.bf16.mxu0 0
      %994 = vmatpush2.bf16.msra.mxu0 0
      %995 = vmatprep.subr.bf16.mxu0 0
      %996 = vmatpush2.bf16.msra.mxu0 0
      %997 = vmatprep.subr.bf16.mxu0 0
      %998 = vmatpush2.bf16.msra.mxu0 0
      %999 = vmatprep.subr.bf16.mxu0 0
      %1000 = vmatpush2.bf16.msra.mxu0 0
      %1001 = vmatprep.subr.bf16.mxu0 0
      %1002 = vmatpush2.bf16.msra.mxu0 0
      %1003 = vmatprep.subr.bf16.mxu0 0
      %1004 = vmatpush2.bf16.msra.mxu0 0
      %1005 = vmatprep.mubr.bf16.mxu0 0
      %1006 = vmatmul.mubr.bf16.gmra.mxu0 %v914
      %v1007 = vpop.f32.mrf.mxu0
      %v1008 = vadd.f32 0.0, %v1007
      %v1009 = vpop.f32.mrf.mxu0
      %v1010 = vpop.f32.mrf.mxu0
      %v1011 = vadd.f32 0.0, %v1010
      %v1012 = vpop.f32.mrf.mxu0
      %1013 = vmatprep.mubr.bf16.mxu0 0
      %1014 = vmatmul.mubr.bf16.gmra.mxu0 %v916
      %v1015 = vpop.f32.mrf.mxu0
      %v1016 = vadd.f32 0.0, %v1015
      %v1017 = vpop.f32.mrf.mxu0
      %v1018 = vpop.f32.mrf.mxu0
      %v1019 = vadd.f32 0.0, %v1018
      %v1020 = vpop.f32.mrf.mxu0
      %1021 = vmatprep.mubr.bf16.mxu0 0
      %1022 = vmatmul.mubr.bf16.gmra.mxu0 %v918
      %v1023 = vpop.f32.mrf.mxu0
      %v1024 = vadd.f32 0.0, %v1023
      %v1025 = vpop.f32.mrf.mxu0
      %v1026 = vpop.f32.mrf.mxu0
      %v1027 = vadd.f32 0.0, %v1026
      %v1028 = vpop.f32.mrf.mxu0
      %1029 = vmatprep.mubr.bf16.mxu0 0
      %1030 = vmatmul.mubr.bf16.gmra.mxu0 %v920
      %v1031 = vpop.f32.mrf.mxu0
      %v1032 = vadd.f32 0.0, %v1031
      %v1033 = vpop.f32.mrf.mxu0
      %v1034 = vpop.f32.mrf.mxu0
      %v1035 = vadd.f32 0.0, %v1034
      %v1036 = vpop.f32.mrf.mxu0
      %1037 = vdwg.mxu0
      %1039 = vset.pattern.permute.xlu0 0
      %1040 = vperm.xlu0 %1039, %v454
      %v1041 = vpop.permute.xlu0 %1040
      %1044 = vset.pattern.permute.xlu0 0
      %1045 = vperm.xlu0 %1044, %v455
      %v1046 = vpop.permute.xlu0 %1045
      %1049 = vset.pattern.permute.xlu0 0
      %1050 = vperm.xlu0 %1049, %v456
      %v1051 = vpop.permute.xlu0 %1050
      %1054 = vset.pattern.permute.xlu0 0
      %1055 = vperm.xlu0 %1054, %v457
      %v1056 = vpop.permute.xlu0 %1055
      %1059 = vset.pattern.permute.xlu0 0
      %1060 = vperm.xlu0 %1059, %v458
      %v1061 = vpop.permute.xlu0 %1060
      %1064 = vset.pattern.permute.xlu0 0
      %1065 = vperm.xlu0 %1064, %v459
      %v1066 = vpop.permute.xlu0 %1065
      %1069 = vset.pattern.permute.xlu0 0
      %1070 = vperm.xlu0 %1069, %v460
      %v1071 = vpop.permute.xlu0 %1070
      %1074 = vset.pattern.permute.xlu0 0
      %1075 = vperm.xlu0 %1074, %v461
      %v1076 = vpop.permute.xlu0 %1075
      %v1078 = vmul.f32 %v1008, %v1041
      %v1079 = vmul.f32 %v1011, %v1046
      %v1080 = vmul.f32 %v1016, %v1051
      %v1081 = vmul.f32 %v1019, %v1056
      %v1082 = vmul.f32 %v1024, %v1061
      %v1083 = vmul.f32 %v1027, %v1066
      %v1084 = vmul.f32 %v1032, %v1071
      %v1085 = vmul.f32 %v1035, %v1076
      %v1086 = vadd.f32 %v882, %v1078
      %v1087 = vadd.f32 %v883, %v1079
      %v1088 = vadd.f32 %v884, %v1080
      %v1089 = vadd.f32 %v885, %v1081
      %v1090 = vadd.f32 %v886, %v1082
      %v1091 = vadd.f32 %v887, %v1083
      %v1092 = vadd.f32 %v888, %v1084
      %v1093 = vadd.f32 %v889, %v1085
      %v1094 = vld [vmem:[#allocation2 + $0x20] sm:$0xf]
      %s1095 = scalar_lea.vmem %s1, 192
      %v1096 = vld [vmem:[%s1095] sm:$0xf]
      %v1097 = vld [vmem:[%s1095 + $0x4] sm:$0xf]
      %v1098 = vld [vmem:[%s1095 + $0x8] sm:$0xf]
      %v1099 = vld [vmem:[%s1095 + $0xc] sm:$0xf]
      %v1100 = vld [vmem:[%s1095 + $0x10] sm:$0xf]
      %v1101 = vld [vmem:[%s1095 + $0x14] sm:$0xf]
      %v1102 = vld [vmem:[%s1095 + $0x18] sm:$0xf]
      %v1103 = vld [vmem:[%s1095 + $0x1c] sm:$0xf]
      %v1104 = vld [vmem:[%s1095 + $0x20] sm:$0xf]
      %v1105 = vld [vmem:[%s1095 + $0x24] sm:$0xf]
      %v1106 = vld [vmem:[%s1095 + $0x28] sm:$0xf]
      %v1107 = vld [vmem:[%s1095 + $0x2c] sm:$0xf]
      %v1108 = vld [vmem:[%s1095 + $0x30] sm:$0xf]
      %v1109 = vld [vmem:[%s1095 + $0x34] sm:$0xf]
      %v1110 = vld [vmem:[%s1095 + $0x38] sm:$0xf]
      %v1111 = vld [vmem:[%s1095 + $0x3c] sm:$0xf]
      %v1113 = vunpack.c.l.b16 %v1094
      %v1114 = vpack.c.b16 %v716, %v715
      %v1115 = vpack.c.b16 %v718, %v717
      %v1116 = vpack.c.b16 %v720, %v719
      %v1117 = vpack.c.b16 %v1113, %v721
      %v1138 = vunpack.c.l.b16 %v1096
      %v1139 = vunpack.c.l.b16 %v1097
      %v1140 = vunpack.c.l.b16 %v1098
      %v1141 = vunpack.c.l.b16 %v1099
      %v1142 = vunpack.c.l.b16 %v1100
      %v1143 = vunpack.c.l.b16 %v1101
      %v1144 = vunpack.c.l.b16 %v1102
      %v1145 = vunpack.c.l.b16 %v1103
      %v1146 = vunpack.c.l.b16 %v1104
      %v1147 = vunpack.c.l.b16 %v1105
      %v1148 = vunpack.c.l.b16 %v1106
      %v1149 = vunpack.c.l.b16 %v1107
      %v1150 = vunpack.c.l.b16 %v1108
      %v1151 = vunpack.c.l.b16 %v1109
      %v1152 = vunpack.c.l.b16 %v1110
      %v1153 = vunpack.c.l.b16 %v1111
      %v1154 = vpack.c.b16 %v1139, %v1138
      %v1155 = vpack.c.b16 %v1141, %v1140
      %v1156 = vpack.c.b16 %v1143, %v1142
      %v1157 = vpack.c.b16 %v1145, %v1144
      %v1158 = vpack.c.b16 %v1147, %v1146
      %v1159 = vpack.c.b16 %v1149, %v1148
      %v1160 = vpack.c.b16 %v1151, %v1150
      %v1161 = vpack.c.b16 %v1153, %v1152
      %1170 = vmatprep.subr.bf16.mxu0 0
      %1171 = vmatpush1.bf16.msra.mxu0 %v1161
      %1172 = vmatprep.subr.bf16.mxu0 0
      %1173 = vmatpush1.bf16.msra.mxu0 %v1160
      %1174 = vmatprep.subr.bf16.mxu0 0
      %1175 = vmatpush1.bf16.msra.mxu0 %v1159
      %1176 = vmatprep.subr.bf16.mxu0 0
      %1177 = vmatpush1.bf16.msra.mxu0 %v1158
      %1178 = vmatprep.subr.bf16.mxu0 0
      %1179 = vmatpush1.bf16.msra.mxu0 %v1157
      %1180 = vmatprep.subr.bf16.mxu0 0
      %1181 = vmatpush1.bf16.msra.mxu0 %v1156
      %1182 = vmatprep.subr.bf16.mxu0 0
      %1183 = vmatpush1.bf16.msra.mxu0 %v1155
      %1184 = vmatprep.subr.bf16.mxu0 0
      %1185 = vmatpush1.bf16.msra.mxu0 %v1154
      %1186 = vmatprep.subr.bf16.mxu0 0
      %1187 = vmatpush2.bf16.msra.mxu0 0
      %1188 = vmatprep.subr.bf16.mxu0 0
      %1189 = vmatpush2.bf16.msra.mxu0 0
      %1190 = vmatprep.subr.bf16.mxu0 0
      %1191 = vmatpush2.bf16.msra.mxu0 0
      %1192 = vmatprep.subr.bf16.mxu0 0
      %1193 = vmatpush2.bf16.msra.mxu0 0
      %1194 = vmatprep.subr.bf16.mxu0 0
      %1195 = vmatpush2.bf16.msra.mxu0 0
      %1196 = vmatprep.subr.bf16.mxu0 0
      %1197 = vmatpush2.bf16.msra.mxu0 0
      %1198 = vmatprep.subr.bf16.mxu0 0
      %1199 = vmatpush2.bf16.msra.mxu0 0
      %1200 = vmatprep.subr.bf16.mxu0 0
      %1201 = vmatpush2.bf16.msra.mxu0 0
      %1202 = vmatprep.mubr.bf16.mxu0 0
      %1203 = vmatmul.mubr.bf16.gmra.mxu0 %v1114
      %v1204 = vpop.f32.mrf.mxu0
      %v1205 = vadd.f32 0.0, %v1204
      %v1206 = vpop.f32.mrf.mxu0
      %v1207 = vpop.f32.mrf.mxu0
      %v1208 = vadd.f32 0.0, %v1207
      %v1209 = vpop.f32.mrf.mxu0
      %1210 = vmatprep.mubr.bf16.mxu0 0
      %1211 = vmatmul.mubr.bf16.gmra.mxu0 %v1115
      %v1212 = vpop.f32.mrf.mxu0
      %v1213 = vadd.f32 0.0, %v1212
      %v1214 = vpop.f32.mrf.mxu0
      %v1215 = vpop.f32.mrf.mxu0
      %v1216 = vadd.f32 0.0, %v1215
      %v1217 = vpop.f32.mrf.mxu0
      %1218 = vmatprep.mubr.bf16.mxu0 0
      %1219 = vmatmul.mubr.bf16.gmra.mxu0 %v1116
      %v1220 = vpop.f32.mrf.mxu0
      %v1221 = vadd.f32 0.0, %v1220
      %v1222 = vpop.f32.mrf.mxu0
      %v1223 = vpop.f32.mrf.mxu0
      %v1224 = vadd.f32 0.0, %v1223
      %v1225 = vpop.f32.mrf.mxu0
      %1226 = vmatprep.mubr.bf16.mxu0 0
      %1227 = vmatmul.mubr.bf16.gmra.mxu0 %v1117
      %v1228 = vpop.f32.mrf.mxu0
      %v1229 = vadd.f32 0.0, %v1228
      %v1230 = vpop.f32.mrf.mxu0
      %v1231 = vpop.f32.mrf.mxu0
      %v1232 = vadd.f32 0.0, %v1231
      %v1233 = vpop.f32.mrf.mxu0
      %1234 = vdwg.mxu0
      %v1235 = vmul.f32 %v1205, %v626
      %v1236 = vmul.f32 %v1208, %v631
      %v1237 = vmul.f32 %v1213, %v636
      %v1238 = vmul.f32 %v1216, %v641
      %v1239 = vmul.f32 %v1221, %v646
      %v1240 = vmul.f32 %v1224, %v651
      %v1241 = vmul.f32 %v1229, %v656
      %v1242 = vmul.f32 %v1232, %v661
      %v1243 = vadd.f32 %v1086, %v1235
      %v1244 = vadd.f32 %v1087, %v1236
      %v1245 = vadd.f32 %v1088, %v1237
      %v1246 = vadd.f32 %v1089, %v1238
      %v1247 = vadd.f32 %v1090, %v1239
      %v1248 = vadd.f32 %v1091, %v1240
      %v1249 = vadd.f32 %v1092, %v1241
      %v1250 = vadd.f32 %v1093, %v1242
      %v1251 = vld [vmem:[#allocation2 + $0x4] sm:$0xf]
      %v1252 = vld [vmem:[#allocation2 + $0x8] sm:$0xf]
      %v1253 = vld [vmem:[#allocation2 + $0xc] sm:$0xf]
      %v1254 = vld [vmem:[#allocation2 + $0x10] sm:$0xf]
      %v1255 = vld [vmem:[#allocation2 + $0x14] sm:$0xf]
      %v1256 = vld [vmem:[#allocation2 + $0x18] sm:$0xf]
      %v1257 = vld [vmem:[#allocation2 + $0x1c] sm:$0xf]
      %v1258 = vld [vmem:[#allocation2 + $0x20] sm:$0xf]
      %v1259 = vld [vmem:[#allocation2 + $0x24] sm:$0x1]
      %s1260 = scalar_lea.vmem %s1, 256
      %v1261 = vld [vmem:[%s1260] sm:$0xf]
      %v1262 = vld [vmem:[%s1260 + $0x4] sm:$0xf]
      %v1263 = vld [vmem:[%s1260 + $0x8] sm:$0xf]
      %v1264 = vld [vmem:[%s1260 + $0xc] sm:$0xf]
      %v1265 = vld [vmem:[%s1260 + $0x10] sm:$0xf]
      %v1266 = vld [vmem:[%s1260 + $0x14] sm:$0xf]
      %v1267 = vld [vmem:[%s1260 + $0x18] sm:$0xf]
      %v1268 = vld [vmem:[%s1260 + $0x1c] sm:$0xf]
      %v1269 = vld [vmem:[%s1260 + $0x20] sm:$0xf]
      %v1270 = vld [vmem:[%s1260 + $0x24] sm:$0xf]
      %v1271 = vld [vmem:[%s1260 + $0x28] sm:$0xf]
      %v1272 = vld [vmem:[%s1260 + $0x2c] sm:$0xf]
      %v1273 = vld [vmem:[%s1260 + $0x30] sm:$0xf]
      %v1274 = vld [vmem:[%s1260 + $0x34] sm:$0xf]
      %v1275 = vld [vmem:[%s1260 + $0x38] sm:$0xf]
      %v1276 = vld [vmem:[%s1260 + $0x3c] sm:$0xf]
      %v1286 = vunpack.c.l.b16 %v1251
      %v1287 = vunpack.c.l.b16 %v1252
      %v1288 = vunpack.c.l.b16 %v1253
      %v1289 = vunpack.c.l.b16 %v1254
      %v1290 = vunpack.c.l.b16 %v1255
      %v1291 = vunpack.c.l.b16 %v1256
      %v1292 = vunpack.c.l.b16 %v1257
      %v1293 = vunpack.c.l.b16 %v1258
      %v1294 = vunpack.c.l.b16 %v1259
      %v1295 = vpack.c.b16 %v1287, %v1286
      %v1296 = vpack.c.b16 %v1289, %v1288
      %v1297 = vpack.c.b16 %v1291, %v1290
      %v1298 = vpack.c.b16 %v1293, %v1292
      %v1299 = vpack.c.b16 %v1294, %v1294
      %v1301 = vshrl.u32 %v1295, 16
      %v1303 = vshll.u32 %v1295, 16
      %v1305 = vrot.slane %v1303, 1
      %v1306 = vor.u32 %v1301, %v1305
      %v1308 = vshll.u32 %v1296, 16
      %v1310 = vrot.slane %v1308, 1
      %v1311 = vsel %vm728, %v1306, %v1310
      %v1312 = vshrl.u32 %v1296, 16
      %v1314 = vor.u32 %v1312, %v1310
      %v1316 = vshll.u32 %v1297, 16
      %v1318 = vrot.slane %v1316, 1
      %v1319 = vsel %vm728, %v1314, %v1318
      %v1320 = vshrl.u32 %v1297, 16
      %v1322 = vor.u32 %v1320, %v1318
      %v1324 = vshll.u32 %v1298, 16
      %v1326 = vrot.slane %v1324, 1
      %v1327 = vsel %vm728, %v1322, %v1326
      %v1328 = vshrl.u32 %v1298, 16
      %v1330 = vor.u32 %v1328, %v1326
      %v1332 = vshll.u32 %v1299, 16
      %v1334 = vrot.slane %v1332, 1
      %v1335 = vsel %vm728, %v1330, %v1334
      %v1356 = vunpack.c.l.b16 %v1261
      %v1357 = vunpack.c.l.b16 %v1262
      %v1358 = vunpack.c.l.b16 %v1263
      %v1359 = vunpack.c.l.b16 %v1264
      %v1360 = vunpack.c.l.b16 %v1265
      %v1361 = vunpack.c.l.b16 %v1266
      %v1362 = vunpack.c.l.b16 %v1267
      %v1363 = vunpack.c.l.b16 %v1268
      %v1364 = vunpack.c.l.b16 %v1269
      %v1365 = vunpack.c.l.b16 %v1270
      %v1366 = vunpack.c.l.b16 %v1271
      %v1367 = vunpack.c.l.b16 %v1272
      %v1368 = vunpack.c.l.b16 %v1273
      %v1369 = vunpack.c.l.b16 %v1274
      %v1370 = vunpack.c.l.b16 %v1275
      %v1371 = vunpack.c.l.b16 %v1276
      %v1372 = vpack.c.b16 %v1357, %v1356
      %v1373 = vpack.c.b16 %v1359, %v1358
      %v1374 = vpack.c.b16 %v1361, %v1360
      %v1375 = vpack.c.b16 %v1363, %v1362
      %v1376 = vpack.c.b16 %v1365, %v1364
      %v1377 = vpack.c.b16 %v1367, %v1366
      %v1378 = vpack.c.b16 %v1369, %v1368
      %v1379 = vpack.c.b16 %v1371, %v1370
      %1388 = vmatprep.subr.bf16.mxu0 0
      %1389 = vmatpush1.bf16.msra.mxu0 %v1379
      %1390 = vmatprep.subr.bf16.mxu0 0
      %1391 = vmatpush1.bf16.msra.mxu0 %v1378
      %1392 = vmatprep.subr.bf16.mxu0 0
      %1393 = vmatpush1.bf16.msra.mxu0 %v1377
      %1394 = vmatprep.subr.bf16.mxu0 0
      %1395 = vmatpush1.bf16.msra.mxu0 %v1376
      %1396 = vmatprep.subr.bf16.mxu0 0
      %1397 = vmatpush1.bf16.msra.mxu0 %v1375
      %1398 = vmatprep.subr.bf16.mxu0 0
      %1399 = vmatpush1.bf16.msra.mxu0 %v1374
      %1400 = vmatprep.subr.bf16.mxu0 0
      %1401 = vmatpush1.bf16.msra.mxu0 %v1373
      %1402 = vmatprep.subr.bf16.mxu0 0
      %1403 = vmatpush1.bf16.msra.mxu0 %v1372
      %1404 = vmatprep.subr.bf16.mxu0 0
      %1405 = vmatpush2.bf16.msra.mxu0 0
      %1406 = vmatprep.subr.bf16.mxu0 0
      %1407 = vmatpush2.bf16.msra.mxu0 0
      %1408 = vmatprep.subr.bf16.mxu0 0
      %1409 = vmatpush2.bf16.msra.mxu0 0
      %1410 = vmatprep.subr.bf16.mxu0 0
      %1411 = vmatpush2.bf16.msra.mxu0 0
      %1412 = vmatprep.subr.bf16.mxu0 0
      %1413 = vmatpush2.bf16.msra.mxu0 0
      %1414 = vmatprep.subr.bf16.mxu0 0
      %1415 = vmatpush2.bf16.msra.mxu0 0
      %1416 = vmatprep.subr.bf16.mxu0 0
      %1417 = vmatpush2.bf16.msra.mxu0 0
      %1418 = vmatprep.subr.bf16.mxu0 0
      %1419 = vmatpush2.bf16.msra.mxu0 0
      %1420 = vmatprep.mubr.bf16.mxu0 0
      %1421 = vmatmul.mubr.bf16.gmra.mxu0 %v1311
      %v1422 = vpop.f32.mrf.mxu0
      %v1423 = vadd.f32 0.0, %v1422
      %v1424 = vpop.f32.mrf.mxu0
      %v1425 = vpop.f32.mrf.mxu0
      %v1426 = vadd.f32 0.0, %v1425
      %v1427 = vpop.f32.mrf.mxu0
      %1428 = vmatprep.mubr.bf16.mxu0 0
      %1429 = vmatmul.mubr.bf16.gmra.mxu0 %v1319
      %v1430 = vpop.f32.mrf.mxu0
      %v1431 = vadd.f32 0.0, %v1430
      %v1432 = vpop.f32.mrf.mxu0
      %v1433 = vpop.f32.mrf.mxu0
      %v1434 = vadd.f32 0.0, %v1433
      %v1435 = vpop.f32.mrf.mxu0
      %1436 = vmatprep.mubr.bf16.mxu0 0
      %1437 = vmatmul.mubr.bf16.gmra.mxu0 %v1327
      %v1438 = vpop.f32.mrf.mxu0
      %v1439 = vadd.f32 0.0, %v1438
      %v1440 = vpop.f32.mrf.mxu0
      %v1441 = vpop.f32.mrf.mxu0
      %v1442 = vadd.f32 0.0, %v1441
      %v1443 = vpop.f32.mrf.mxu0
      %1444 = vmatprep.mubr.bf16.mxu0 0
      %1445 = vmatmul.mubr.bf16.gmra.mxu0 %v1335
      %v1446 = vpop.f32.mrf.mxu0
      %v1447 = vadd.f32 0.0, %v1446
      %v1448 = vpop.f32.mrf.mxu0
      %v1449 = vpop.f32.mrf.mxu0
      %v1450 = vadd.f32 0.0, %v1449
      %v1451 = vpop.f32.mrf.mxu0
      %1452 = vdwg.mxu0
      %v1453 = vadd.f32 %v1243, %v1423
      %v1454 = vadd.f32 %v1244, %v1426
      %v1455 = vadd.f32 %v1245, %v1431
      %v1456 = vadd.f32 %v1246, %v1434
      %v1457 = vadd.f32 %v1247, %v1439
      %v1458 = vadd.f32 %v1248, %v1442
      %v1459 = vadd.f32 %v1249, %v1447
      %v1460 = vadd.f32 %v1250, %v1450
      %v1461 = vld [vmem:[#allocation2 + $0x4] sm:$0xe]
      %s1462 = scalar_lea.vmem %s1, 320
      %v1463 = vld [vmem:[%s1462] sm:$0xf]
      %v1464 = vld [vmem:[%s1462 + $0x4] sm:$0xf]
      %v1465 = vld [vmem:[%s1462 + $0x8] sm:$0xf]
      %v1466 = vld [vmem:[%s1462 + $0xc] sm:$0xf]
      %v1467 = vld [vmem:[%s1462 + $0x10] sm:$0xf]
      %v1468 = vld [vmem:[%s1462 + $0x14] sm:$0xf]
      %v1469 = vld [vmem:[%s1462 + $0x18] sm:$0xf]
      %v1470 = vld [vmem:[%s1462 + $0x1c] sm:$0xf]
      %v1471 = vld [vmem:[%s1462 + $0x20] sm:$0xf]
      %v1472 = vld [vmem:[%s1462 + $0x24] sm:$0xf]
      %v1473 = vld [vmem:[%s1462 + $0x28] sm:$0xf]
      %v1474 = vld [vmem:[%s1462 + $0x2c] sm:$0xf]
      %v1475 = vld [vmem:[%s1462 + $0x30] sm:$0xf]
      %v1476 = vld [vmem:[%s1462 + $0x34] sm:$0xf]
      %v1477 = vld [vmem:[%s1462 + $0x38] sm:$0xf]
      %v1478 = vld [vmem:[%s1462 + $0x3c] sm:$0xf]
      %v1480 = vunpack.c.l.b16 %v1461
      %v1481 = vpack.c.b16 %v1287, %v1480
      %v1482 = vrot.slane %v1481, 1
      %v1483 = vrot.slane %v1296, 1
      %v1484 = vsel %vm911, %v1482, %v1483
      %v1485 = vrot.slane %v1297, 1
      %v1486 = vsel %vm911, %v1483, %v1485
      %v1487 = vrot.slane %v1298, 1
      %v1488 = vsel %vm911, %v1485, %v1487
      %v1489 = vrot.slane %v1299, 1
      %v1490 = vsel %vm911, %v1487, %v1489
      %v1511 = vunpack.c.l.b16 %v1463
      %v1512 = vunpack.c.l.b16 %v1464
      %v1513 = vunpack.c.l.b16 %v1465
      %v1514 = vunpack.c.l.b16 %v1466
      %v1515 = vunpack.c.l.b16 %v1467
      %v1516 = vunpack.c.l.b16 %v1468
      %v1517 = vunpack.c.l.b16 %v1469
      %v1518 = vunpack.c.l.b16 %v1470
      %v1519 = vunpack.c.l.b16 %v1471
      %v1520 = vunpack.c.l.b16 %v1472
      %v1521 = vunpack.c.l.b16 %v1473
      %v1522 = vunpack.c.l.b16 %v1474
      %v1523 = vunpack.c.l.b16 %v1475
      %v1524 = vunpack.c.l.b16 %v1476
      %v1525 = vunpack.c.l.b16 %v1477
      %v1526 = vunpack.c.l.b16 %v1478
      %v1527 = vpack.c.b16 %v1512, %v1511
      %v1528 = vpack.c.b16 %v1514, %v1513
      %v1529 = vpack.c.b16 %v1516, %v1515
      %v1530 = vpack.c.b16 %v1518, %v1517
      %v1531 = vpack.c.b16 %v1520, %v1519
      %v1532 = vpack.c.b16 %v1522, %v1521
      %v1533 = vpack.c.b16 %v1524, %v1523
      %v1534 = vpack.c.b16 %v1526, %v1525
      %1543 = vmatprep.subr.bf16.mxu0 0
      %1544 = vmatpush1.bf16.msra.mxu0 %v1534
      %1545 = vmatprep.subr.bf16.mxu0 0
      %1546 = vmatpush1.bf16.msra.mxu0 %v1533
      %1547 = vmatprep.subr.bf16.mxu0 0
      %1548 = vmatpush1.bf16.msra.mxu0 %v1532
      %1549 = vmatprep.subr.bf16.mxu0 0
      %1550 = vmatpush1.bf16.msra.mxu0 %v1531
      %1551 = vmatprep.subr.bf16.mxu0 0
      %1552 = vmatpush1.bf16.msra.mxu0 %v1530
      %1553 = vmatprep.subr.bf16.mxu0 0
      %1554 = vmatpush1.bf16.msra.mxu0 %v1529
      %1555 = vmatprep.subr.bf16.mxu0 0
      %1556 = vmatpush1.bf16.msra.mxu0 %v1528
      %1557 = vmatprep.subr.bf16.mxu0 0
      %1558 = vmatpush1.bf16.msra.mxu0 %v1527
      %1559 = vmatprep.subr.bf16.mxu0 0
      %1560 = vmatpush2.bf16.msra.mxu0 0
      %1561 = vmatprep.subr.bf16.mxu0 0
      %1562 = vmatpush2.bf16.msra.mxu0 0
      %1563 = vmatprep.subr.bf16.mxu0 0
      %1564 = vmatpush2.bf16.msra.mxu0 0
      %1565 = vmatprep.subr.bf16.mxu0 0
      %1566 = vmatpush2.bf16.msra.mxu0 0
      %1567 = vmatprep.subr.bf16.mxu0 0
      %1568 = vmatpush2.bf16.msra.mxu0 0
      %1569 = vmatprep.subr.bf16.mxu0 0
      %1570 = vmatpush2.bf16.msra.mxu0 0
      %1571 = vmatprep.subr.bf16.mxu0 0
      %1572 = vmatpush2.bf16.msra.mxu0 0
      %1573 = vmatprep.subr.bf16.mxu0 0
      %1574 = vmatpush2.bf16.msra.mxu0 0
      %1575 = vmatprep.mubr.bf16.mxu0 0
      %1576 = vmatmul.mubr.bf16.gmra.mxu0 %v1484
      %v1577 = vpop.f32.mrf.mxu0
      %v1578 = vadd.f32 0.0, %v1577
      %v1579 = vpop.f32.mrf.mxu0
      %v1580 = vpop.f32.mrf.mxu0
      %v1581 = vadd.f32 0.0, %v1580
      %v1582 = vpop.f32.mrf.mxu0
      %1583 = vmatprep.mubr.bf16.mxu0 0
      %1584 = vmatmul.mubr.bf16.gmra.mxu0 %v1486
      %v1585 = vpop.f32.mrf.mxu0
      %v1586 = vadd.f32 0.0, %v1585
      %v1587 = vpop.f32.mrf.mxu0
      %v1588 = vpop.f32.mrf.mxu0
      %v1589 = vadd.f32 0.0, %v1588
      %v1590 = vpop.f32.mrf.mxu0
      %1591 = vmatprep.mubr.bf16.mxu0 0
      %1592 = vmatmul.mubr.bf16.gmra.mxu0 %v1488
      %v1593 = vpop.f32.mrf.mxu0
      %v1594 = vadd.f32 0.0, %v1593
      %v1595 = vpop.f32.mrf.mxu0
      %v1596 = vpop.f32.mrf.mxu0
      %v1597 = vadd.f32 0.0, %v1596
      %v1598 = vpop.f32.mrf.mxu0
      %1599 = vmatprep.mubr.bf16.mxu0 0
      %1600 = vmatmul.mubr.bf16.gmra.mxu0 %v1490
      %v1601 = vpop.f32.mrf.mxu0
      %v1602 = vadd.f32 0.0, %v1601
      %v1603 = vpop.f32.mrf.mxu0
      %v1604 = vpop.f32.mrf.mxu0
      %v1605 = vadd.f32 0.0, %v1604
      %v1606 = vpop.f32.mrf.mxu0
      %1607 = vdwg.mxu0
      %v1608 = vmul.f32 %v1578, %v1041
      %v1609 = vmul.f32 %v1581, %v1046
      %v1610 = vmul.f32 %v1586, %v1051
      %v1611 = vmul.f32 %v1589, %v1056
      %v1612 = vmul.f32 %v1594, %v1061
      %v1613 = vmul.f32 %v1597, %v1066
      %v1614 = vmul.f32 %v1602, %v1071
      %v1615 = vmul.f32 %v1605, %v1076
      %v1616 = vadd.f32 %v1453, %v1608
      %v1617 = vadd.f32 %v1454, %v1609
      %v1618 = vadd.f32 %v1455, %v1610
      %v1619 = vadd.f32 %v1456, %v1611
      %v1620 = vadd.f32 %v1457, %v1612
      %v1621 = vadd.f32 %v1458, %v1613
      %v1622 = vadd.f32 %v1459, %v1614
      %v1623 = vadd.f32 %v1460, %v1615
      %v1624 = vld [vmem:[#allocation2 + $0x24] sm:$0xf]
      %s1625 = scalar_lea.vmem %s1, 384
      %v1626 = vld [vmem:[%s1625] sm:$0xf]
      %v1627 = vld [vmem:[%s1625 + $0x4] sm:$0xf]
      %v1628 = vld [vmem:[%s1625 + $0x8] sm:$0xf]
      %v1629 = vld [vmem:[%s1625 + $0xc] sm:$0xf]
      %v1630 = vld [vmem:[%s1625 + $0x10] sm:$0xf]
      %v1631 = vld [vmem:[%s1625 + $0x14] sm:$0xf]
      %v1632 = vld [vmem:[%s1625 + $0x18] sm:$0xf]
      %v1633 = vld [vmem:[%s1625 + $0x1c] sm:$0xf]
      %v1634 = vld [vmem:[%s1625 + $0x20] sm:$0xf]
      %v1635 = vld [vmem:[%s1625 + $0x24] sm:$0xf]
      %v1636 = vld [vmem:[%s1625 + $0x28] sm:$0xf]
      %v1637 = vld [vmem:[%s1625 + $0x2c] sm:$0xf]
      %v1638 = vld [vmem:[%s1625 + $0x30] sm:$0xf]
      %v1639 = vld [vmem:[%s1625 + $0x34] sm:$0xf]
      %v1640 = vld [vmem:[%s1625 + $0x38] sm:$0xf]
      %v1641 = vld [vmem:[%s1625 + $0x3c] sm:$0xf]
      %v1643 = vunpack.c.l.b16 %v1624
      %v1644 = vpack.c.b16 %v1288, %v1287
      %v1645 = vpack.c.b16 %v1290, %v1289
      %v1646 = vpack.c.b16 %v1292, %v1291
      %v1647 = vpack.c.b16 %v1643, %v1293
      %v1668 = vunpack.c.l.b16 %v1626
      %v1669 = vunpack.c.l.b16 %v1627
      %v1670 = vunpack.c.l.b16 %v1628
      %v1671 = vunpack.c.l.b16 %v1629
      %v1672 = vunpack.c.l.b16 %v1630
      %v1673 = vunpack.c.l.b16 %v1631
      %v1674 = vunpack.c.l.b16 %v1632
      %v1675 = vunpack.c.l.b16 %v1633
      %v1676 = vunpack.c.l.b16 %v1634
      %v1677 = vunpack.c.l.b16 %v1635
      %v1678 = vunpack.c.l.b16 %v1636
      %v1679 = vunpack.c.l.b16 %v1637
      %v1680 = vunpack.c.l.b16 %v1638
      %v1681 = vunpack.c.l.b16 %v1639
      %v1682 = vunpack.c.l.b16 %v1640
      %v1683 = vunpack.c.l.b16 %v1641
      %v1684 = vpack.c.b16 %v1669, %v1668
      %v1685 = vpack.c.b16 %v1671, %v1670
      %v1686 = vpack.c.b16 %v1673, %v1672
      %v1687 = vpack.c.b16 %v1675, %v1674
      %v1688 = vpack.c.b16 %v1677, %v1676
      %v1689 = vpack.c.b16 %v1679, %v1678
      %v1690 = vpack.c.b16 %v1681, %v1680
      %v1691 = vpack.c.b16 %v1683, %v1682
      %1700 = vmatprep.subr.bf16.mxu0 0
      %1701 = vmatpush1.bf16.msra.mxu0 %v1691
      %1702 = vmatprep.subr.bf16.mxu0 0
      %1703 = vmatpush1.bf16.msra.mxu0 %v1690
      %1704 = vmatprep.subr.bf16.mxu0 0
      %1705 = vmatpush1.bf16.msra.mxu0 %v1689
      %1706 = vmatprep.subr.bf16.mxu0 0
      %1707 = vmatpush1.bf16.msra.mxu0 %v1688
      %1708 = vmatprep.subr.bf16.mxu0 0
      %1709 = vmatpush1.bf16.msra.mxu0 %v1687
      %1710 = vmatprep.subr.bf16.mxu0 0
      %1711 = vmatpush1.bf16.msra.mxu0 %v1686
      %1712 = vmatprep.subr.bf16.mxu0 0
      %1713 = vmatpush1.bf16.msra.mxu0 %v1685
      %1714 = vmatprep.subr.bf16.mxu0 0
      %1715 = vmatpush1.bf16.msra.mxu0 %v1684
      %1716 = vmatprep.subr.bf16.mxu0 0
      %1717 = vmatpush2.bf16.msra.mxu0 0
      %1718 = vmatprep.subr.bf16.mxu0 0
      %1719 = vmatpush2.bf16.msra.mxu0 0
      %1720 = vmatprep.subr.bf16.mxu0 0
      %1721 = vmatpush2.bf16.msra.mxu0 0
      %1722 = vmatprep.subr.bf16.mxu0 0
      %1723 = vmatpush2.bf16.msra.mxu0 0
      %1724 = vmatprep.subr.bf16.mxu0 0
      %1725 = vmatpush2.bf16.msra.mxu0 0
      %1726 = vmatprep.subr.bf16.mxu0 0
      %1727 = vmatpush2.bf16.msra.mxu0 0
      %1728 = vmatprep.subr.bf16.mxu0 0
      %1729 = vmatpush2.bf16.msra.mxu0 0
      %1730 = vmatprep.subr.bf16.mxu0 0
      %1731 = vmatpush2.bf16.msra.mxu0 0
      %1732 = vmatprep.mubr.bf16.mxu0 0
      %1733 = vmatmul.mubr.bf16.gmra.mxu0 %v1644
      %v1734 = vpop.f32.mrf.mxu0
      %v1735 = vadd.f32 0.0, %v1734
      %v1736 = vpop.f32.mrf.mxu0
      %v1737 = vpop.f32.mrf.mxu0
      %v1738 = vadd.f32 0.0, %v1737
      %v1739 = vpop.f32.mrf.mxu0
      %1740 = vmatprep.mubr.bf16.mxu0 0
      %1741 = vmatmul.mubr.bf16.gmra.mxu0 %v1645
      %v1742 = vpop.f32.mrf.mxu0
      %v1743 = vadd.f32 0.0, %v1742
      %v1744 = vpop.f32.mrf.mxu0
      %v1745 = vpop.f32.mrf.mxu0
      %v1746 = vadd.f32 0.0, %v1745
      %v1747 = vpop.f32.mrf.mxu0
      %1748 = vmatprep.mubr.bf16.mxu0 0
      %1749 = vmatmul.mubr.bf16.gmra.mxu0 %v1646
      %v1750 = vpop.f32.mrf.mxu0
      %v1751 = vadd.f32 0.0, %v1750
      %v1752 = vpop.f32.mrf.mxu0
      %v1753 = vpop.f32.mrf.mxu0
      %v1754 = vadd.f32 0.0, %v1753
      %v1755 = vpop.f32.mrf.mxu0
      %1756 = vmatprep.mubr.bf16.mxu0 0
      %1757 = vmatmul.mubr.bf16.gmra.mxu0 %v1647
      %v1758 = vpop.f32.mrf.mxu0
      %v1759 = vadd.f32 0.0, %v1758
      %v1760 = vpop.f32.mrf.mxu0
      %v1761 = vpop.f32.mrf.mxu0
      %v1762 = vadd.f32 0.0, %v1761
      %v1763 = vpop.f32.mrf.mxu0
      %1764 = vdwg.mxu0
      %v1765 = vmul.f32 %v1735, %v626
      %v1766 = vmul.f32 %v1738, %v631
      %v1767 = vmul.f32 %v1743, %v636
      %v1768 = vmul.f32 %v1746, %v641
      %v1769 = vmul.f32 %v1751, %v646
      %v1770 = vmul.f32 %v1754, %v651
      %v1771 = vmul.f32 %v1759, %v656
      %v1772 = vmul.f32 %v1762, %v661
      %v1773 = vadd.f32 %v1616, %v1765
      %v1774 = vadd.f32 %v1617, %v1766
      %v1775 = vadd.f32 %v1618, %v1767
      %v1776 = vadd.f32 %v1619, %v1768
      %v1777 = vadd.f32 %v1620, %v1769
      %v1778 = vadd.f32 %v1621, %v1770
      %v1779 = vadd.f32 %v1622, %v1771
      %v1780 = vadd.f32 %v1623, %v1772
      %v1781 = vld [vmem:[#allocation2 + $0x8] sm:$0xf]
      %v1782 = vld [vmem:[#allocation2 + $0xc] sm:$0xf]
      %v1783 = vld [vmem:[#allocation2 + $0x10] sm:$0xf]
      %v1784 = vld [vmem:[#allocation2 + $0x14] sm:$0xf]
      %v1785 = vld [vmem:[#allocation2 + $0x18] sm:$0xf]
      %v1786 = vld [vmem:[#allocation2 + $0x1c] sm:$0xf]
      %v1787 = vld [vmem:[#allocation2 + $0x20] sm:$0xf]
      %v1788 = vld [vmem:[#allocation2 + $0x24] sm:$0xf]
      %v1789 = vld [vmem:[#allocation2 + $0x28] sm:$0x1]
      %s1790 = scalar_lea.vmem %s1, 448
      %v1791 = vld [vmem:[%s1790] sm:$0xf]
      %v1792 = vld [vmem:[%s1790 + $0x4] sm:$0xf]
      %v1793 = vld [vmem:[%s1790 + $0x8] sm:$0xf]
      %v1794 = vld [vmem:[%s1790 + $0xc] sm:$0xf]
      %v1795 = vld [vmem:[%s1790 + $0x10] sm:$0xf]
      %v1796 = vld [vmem:[%s1790 + $0x14] sm:$0xf]
      %v1797 = vld [vmem:[%s1790 + $0x18] sm:$0xf]
      %v1798 = vld [vmem:[%s1790 + $0x1c] sm:$0xf]
      %v1799 = vld [vmem:[%s1790 + $0x20] sm:$0xf]
      %v1800 = vld [vmem:[%s1790 + $0x24] sm:$0xf]
      %v1801 = vld [vmem:[%s1790 + $0x28] sm:$0xf]
      %v1802 = vld [vmem:[%s1790 + $0x2c] sm:$0xf]
      %v1803 = vld [vmem:[%s1790 + $0x30] sm:$0xf]
      %v1804 = vld [vmem:[%s1790 + $0x34] sm:$0xf]
      %v1805 = vld [vmem:[%s1790 + $0x38] sm:$0xf]
      %v1806 = vld [vmem:[%s1790 + $0x3c] sm:$0xf]
      %v1816 = vunpack.c.l.b16 %v1781
      %v1817 = vunpack.c.l.b16 %v1782
      %v1818 = vunpack.c.l.b16 %v1783
      %v1819 = vunpack.c.l.b16 %v1784
      %v1820 = vunpack.c.l.b16 %v1785
      %v1821 = vunpack.c.l.b16 %v1786
      %v1822 = vunpack.c.l.b16 %v1787
      %v1823 = vunpack.c.l.b16 %v1788
      %v1824 = vunpack.c.l.b16 %v1789
      %v1825 = vpack.c.b16 %v1817, %v1816
      %v1826 = vpack.c.b16 %v1819, %v1818
      %v1827 = vpack.c.b16 %v1821, %v1820
      %v1828 = vpack.c.b16 %v1823, %v1822
      %v1829 = vpack.c.b16 %v1824, %v1824
      %v1831 = vshrl.u32 %v1825, 16
      %v1833 = vshll.u32 %v1825, 16
      %v1835 = vrot.slane %v1833, 1
      %v1836 = vor.u32 %v1831, %v1835
      %v1838 = vshll.u32 %v1826, 16
      %v1840 = vrot.slane %v1838, 1
      %v1841 = vsel %vm728, %v1836, %v1840
      %v1842 = vshrl.u32 %v1826, 16
      %v1844 = vor.u32 %v1842, %v1840
      %v1846 = vshll.u32 %v1827, 16
      %v1848 = vrot.slane %v1846, 1
      %v1849 = vsel %vm728, %v1844, %v1848
      %v1850 = vshrl.u32 %v1827, 16
      %v1852 = vor.u32 %v1850, %v1848
      %v1854 = vshll.u32 %v1828, 16
      %v1856 = vrot.slane %v1854, 1
      %v1857 = vsel %vm728, %v1852, %v1856
      %v1858 = vshrl.u32 %v1828, 16
      %v1860 = vor.u32 %v1858, %v1856
      %v1862 = vshll.u32 %v1829, 16
      %v1864 = vrot.slane %v1862, 1
      %v1865 = vsel %vm728, %v1860, %v1864
      %v1886 = vunpack.c.l.b16 %v1791
      %v1887 = vunpack.c.l.b16 %v1792
      %v1888 = vunpack.c.l.b16 %v1793
      %v1889 = vunpack.c.l.b16 %v1794
      %v1890 = vunpack.c.l.b16 %v1795
      %v1891 = vunpack.c.l.b16 %v1796
      %v1892 = vunpack.c.l.b16 %v1797
      %v1893 = vunpack.c.l.b16 %v1798
      %v1894 = vunpack.c.l.b16 %v1799
      %v1895 = vunpack.c.l.b16 %v1800
      %v1896 = vunpack.c.l.b16 %v1801
      %v1897 = vunpack.c.l.b16 %v1802
      %v1898 = vunpack.c.l.b16 %v1803
      %v1899 = vunpack.c.l.b16 %v1804
      %v1900 = vunpack.c.l.b16 %v1805
      %v1901 = vunpack.c.l.b16 %v1806
      %v1902 = vpack.c.b16 %v1887, %v1886
      %v1903 = vpack.c.b16 %v1889, %v1888
      %v1904 = vpack.c.b16 %v1891, %v1890
      %v1905 = vpack.c.b16 %v1893, %v1892
      %v1906 = vpack.c.b16 %v1895, %v1894
      %v1907 = vpack.c.b16 %v1897, %v1896
      %v1908 = vpack.c.b16 %v1899, %v1898
      %v1909 = vpack.c.b16 %v1901, %v1900
      %1918 = vmatprep.subr.bf16.mxu0 0
      %1919 = vmatpush1.bf16.msra.mxu0 %v1909
      %1920 = vmatprep.subr.bf16.mxu0 0
      %1921 = vmatpush1.bf16.msra.mxu0 %v1908
      %1922 = vmatprep.subr.bf16.mxu0 0
      %1923 = vmatpush1.bf16.msra.mxu0 %v1907
      %1924 = vmatprep.subr.bf16.mxu0 0
      %1925 = vmatpush1.bf16.msra.mxu0 %v1906
      %1926 = vmatprep.subr.bf16.mxu0 0
      %1927 = vmatpush1.bf16.msra.mxu0 %v1905
      %1928 = vmatprep.subr.bf16.mxu0 0
      %1929 = vmatpush1.bf16.msra.mxu0 %v1904
      %1930 = vmatprep.subr.bf16.mxu0 0
      %1931 = vmatpush1.bf16.msra.mxu0 %v1903
      %1932 = vmatprep.subr.bf16.mxu0 0
      %1933 = vmatpush1.bf16.msra.mxu0 %v1902
      %1934 = vmatprep.subr.bf16.mxu0 0
      %1935 = vmatpush2.bf16.msra.mxu0 0
      %1936 = vmatprep.subr.bf16.mxu0 0
      %1937 = vmatpush2.bf16.msra.mxu0 0
      %1938 = vmatprep.subr.bf16.mxu0 0
      %1939 = vmatpush2.bf16.msra.mxu0 0
      %1940 = vmatprep.subr.bf16.mxu0 0
      %1941 = vmatpush2.bf16.msra.mxu0 0
      %1942 = vmatprep.subr.bf16.mxu0 0
      %1943 = vmatpush2.bf16.msra.mxu0 0
      %1944 = vmatprep.subr.bf16.mxu0 0
      %1945 = vmatpush2.bf16.msra.mxu0 0
      %1946 = vmatprep.subr.bf16.mxu0 0
      %1947 = vmatpush2.bf16.msra.mxu0 0
      %1948 = vmatprep.subr.bf16.mxu0 0
      %1949 = vmatpush2.bf16.msra.mxu0 0
      %1950 = vmatprep.mubr.bf16.mxu0 0
      %1951 = vmatmul.mubr.bf16.gmra.mxu0 %v1841
      %v1952 = vpop.f32.mrf.mxu0
      %v1953 = vadd.f32 0.0, %v1952
      %v1954 = vpop.f32.mrf.mxu0
      %v1955 = vpop.f32.mrf.mxu0
      %v1956 = vadd.f32 0.0, %v1955
      %v1957 = vpop.f32.mrf.mxu0
      %1958 = vmatprep.mubr.bf16.mxu0 0
      %1959 = vmatmul.mubr.bf16.gmra.mxu0 %v1849
      %v1960 = vpop.f32.mrf.mxu0
      %v1961 = vadd.f32 0.0, %v1960
      %v1962 = vpop.f32.mrf.mxu0
      %v1963 = vpop.f32.mrf.mxu0
      %v1964 = vadd.f32 0.0, %v1963
      %v1965 = vpop.f32.mrf.mxu0
      %1966 = vmatprep.mubr.bf16.mxu0 0
      %1967 = vmatmul.mubr.bf16.gmra.mxu0 %v1857
      %v1968 = vpop.f32.mrf.mxu0
      %v1969 = vadd.f32 0.0, %v1968
      %v1970 = vpop.f32.mrf.mxu0
      %v1971 = vpop.f32.mrf.mxu0
      %v1972 = vadd.f32 0.0, %v1971
      %v1973 = vpop.f32.mrf.mxu0
      %1974 = vmatprep.mubr.bf16.mxu0 0
      %1975 = vmatmul.mubr.bf16.gmra.mxu0 %v1865
      %v1976 = vpop.f32.mrf.mxu0
      %v1977 = vadd.f32 0.0, %v1976
      %v1978 = vpop.f32.mrf.mxu0
      %v1979 = vpop.f32.mrf.mxu0
      %v1980 = vadd.f32 0.0, %v1979
      %v1981 = vpop.f32.mrf.mxu0
      %1982 = vdwg.mxu0
      %v1983 = vadd.f32 %v1773, %v1953
      %v1984 = vadd.f32 %v1774, %v1956
      %v1985 = vadd.f32 %v1775, %v1961
      %v1986 = vadd.f32 %v1776, %v1964
      %v1987 = vadd.f32 %v1777, %v1969
      %v1988 = vadd.f32 %v1778, %v1972
      %v1989 = vadd.f32 %v1779, %v1977
      %v1990 = vadd.f32 %v1780, %v1980
      %v1991 = vld [vmem:[#allocation2 + $0x8] sm:$0xe]
      %s1992 = scalar_lea.vmem %s1, 512
      %v1993 = vld [vmem:[%s1992] sm:$0xf]
      %v1994 = vld [vmem:[%s1992 + $0x4] sm:$0xf]
      %v1995 = vld [vmem:[%s1992 + $0x8] sm:$0xf]
      %v1996 = vld [vmem:[%s1992 + $0xc] sm:$0xf]
      %v1997 = vld [vmem:[%s1992 + $0x10] sm:$0xf]
      %v1998 = vld [vmem:[%s1992 + $0x14] sm:$0xf]
      %v1999 = vld [vmem:[%s1992 + $0x18] sm:$0xf]
      %v2000 = vld [vmem:[%s1992 + $0x1c] sm:$0xf]
      %v2001 = vld [vmem:[%s1992 + $0x20] sm:$0xf]
      %v2002 = vld [vmem:[%s1992 + $0x24] sm:$0xf]
      %v2003 = vld [vmem:[%s1992 + $0x28] sm:$0xf]
      %v2004 = vld [vmem:[%s1992 + $0x2c] sm:$0xf]
      %v2005 = vld [vmem:[%s1992 + $0x30] sm:$0xf]
      %v2006 = vld [vmem:[%s1992 + $0x34] sm:$0xf]
      %v2007 = vld [vmem:[%s1992 + $0x38] sm:$0xf]
      %v2008 = vld [vmem:[%s1992 + $0x3c] sm:$0xf]
      %v2010 = vunpack.c.l.b16 %v1991
      %v2011 = vpack.c.b16 %v1817, %v2010
      %v2012 = vrot.slane %v2011, 1
      %v2013 = vrot.slane %v1826, 1
      %v2014 = vsel %vm911, %v2012, %v2013
      %v2015 = vrot.slane %v1827, 1
      %v2016 = vsel %vm911, %v2013, %v2015
      %v2017 = vrot.slane %v1828, 1
      %v2018 = vsel %vm911, %v2015, %v2017
      %v2019 = vrot.slane %v1829, 1
      %v2020 = vsel %vm911, %v2017, %v2019
      %v2041 = vunpack.c.l.b16 %v1993
      %v2042 = vunpack.c.l.b16 %v1994
      %v2043 = vunpack.c.l.b16 %v1995
      %v2044 = vunpack.c.l.b16 %v1996
      %v2045 = vunpack.c.l.b16 %v1997
      %v2046 = vunpack.c.l.b16 %v1998
      %v2047 = vunpack.c.l.b16 %v1999
      %v2048 = vunpack.c.l.b16 %v2000
      %v2049 = vunpack.c.l.b16 %v2001
      %v2050 = vunpack.c.l.b16 %v2002
      %v2051 = vunpack.c.l.b16 %v2003
      %v2052 = vunpack.c.l.b16 %v2004
      %v2053 = vunpack.c.l.b16 %v2005
      %v2054 = vunpack.c.l.b16 %v2006
      %v2055 = vunpack.c.l.b16 %v2007
      %v2056 = vunpack.c.l.b16 %v2008
      %v2057 = vpack.c.b16 %v2042, %v2041
      %v2058 = vpack.c.b16 %v2044, %v2043
      %v2059 = vpack.c.b16 %v2046, %v2045
      %v2060 = vpack.c.b16 %v2048, %v2047
      %v2061 = vpack.c.b16 %v2050, %v2049
      %v2062 = vpack.c.b16 %v2052, %v2051
      %v2063 = vpack.c.b16 %v2054, %v2053
      %v2064 = vpack.c.b16 %v2056, %v2055
      %2073 = vmatprep.subr.bf16.mxu0 0
      %2074 = vmatpush1.bf16.msra.mxu0 %v2064
      %2075 = vmatprep.subr.bf16.mxu0 0
      %2076 = vmatpush1.bf16.msra.mxu0 %v2063
      %2077 = vmatprep.subr.bf16.mxu0 0
      %2078 = vmatpush1.bf16.msra.mxu0 %v2062
      %2079 = vmatprep.subr.bf16.mxu0 0
      %2080 = vmatpush1.bf16.msra.mxu0 %v2061
      %2081 = vmatprep.subr.bf16.mxu0 0
      %2082 = vmatpush1.bf16.msra.mxu0 %v2060
      %2083 = vmatprep.subr.bf16.mxu0 0
      %2084 = vmatpush1.bf16.msra.mxu0 %v2059
      %2085 = vmatprep.subr.bf16.mxu0 0
      %2086 = vmatpush1.bf16.msra.mxu0 %v2058
      %2087 = vmatprep.subr.bf16.mxu0 0
      %2088 = vmatpush1.bf16.msra.mxu0 %v2057
      %2089 = vmatprep.subr.bf16.mxu0 0
      %2090 = vmatpush2.bf16.msra.mxu0 0
      %2091 = vmatprep.subr.bf16.mxu0 0
      %2092 = vmatpush2.bf16.msra.mxu0 0
      %2093 = vmatprep.subr.bf16.mxu0 0
      %2094 = vmatpush2.bf16.msra.mxu0 0
      %2095 = vmatprep.subr.bf16.mxu0 0
      %2096 = vmatpush2.bf16.msra.mxu0 0
      %2097 = vmatprep.subr.bf16.mxu0 0
      %2098 = vmatpush2.bf16.msra.mxu0 0
      %2099 = vmatprep.subr.bf16.mxu0 0
      %2100 = vmatpush2.bf16.msra.mxu0 0
      %2101 = vmatprep.subr.bf16.mxu0 0
      %2102 = vmatpush2.bf16.msra.mxu0 0
      %2103 = vmatprep.subr.bf16.mxu0 0
      %2104 = vmatpush2.bf16.msra.mxu0 0
      %2105 = vmatprep.mubr.bf16.mxu0 0
      %2106 = vmatmul.mubr.bf16.gmra.mxu0 %v2014
      %v2107 = vpop.f32.mrf.mxu0
      %v2108 = vadd.f32 0.0, %v2107
      %v2109 = vpop.f32.mrf.mxu0
      %v2110 = vpop.f32.mrf.mxu0
      %v2111 = vadd.f32 0.0, %v2110
      %v2112 = vpop.f32.mrf.mxu0
      %2113 = vmatprep.mubr.bf16.mxu0 0
      %2114 = vmatmul.mubr.bf16.gmra.mxu0 %v2016
      %v2115 = vpop.f32.mrf.mxu0
      %v2116 = vadd.f32 0.0, %v2115
      %v2117 = vpop.f32.mrf.mxu0
      %v2118 = vpop.f32.mrf.mxu0
      %v2119 = vadd.f32 0.0, %v2118
      %v2120 = vpop.f32.mrf.mxu0
      %2121 = vmatprep.mubr.bf16.mxu0 0
      %2122 = vmatmul.mubr.bf16.gmra.mxu0 %v2018
      %v2123 = vpop.f32.mrf.mxu0
      %v2124 = vadd.f32 0.0, %v2123
      %v2125 = vpop.f32.mrf.mxu0
      %v2126 = vpop.f32.mrf.mxu0
      %v2127 = vadd.f32 0.0, %v2126
      %v2128 = vpop.f32.mrf.mxu0
      %2129 = vmatprep.mubr.bf16.mxu0 0
      %2130 = vmatmul.mubr.bf16.gmra.mxu0 %v2020
      %v2131 = vpop.f32.mrf.mxu0
      %v2132 = vadd.f32 0.0, %v2131
      %v2133 = vpop.f32.mrf.mxu0
      %v2134 = vpop.f32.mrf.mxu0
      %v2135 = vadd.f32 0.0, %v2134
      %v2136 = vpop.f32.mrf.mxu0
      %2137 = vdwg.mxu0
      %v2138 = vmul.f32 %v2108, %v1041
      %v2139 = vmul.f32 %v2111, %v1046
      %v2140 = vmul.f32 %v2116, %v1051
      %v2141 = vmul.f32 %v2119, %v1056
      %v2142 = vmul.f32 %v2124, %v1061
      %v2143 = vmul.f32 %v2127, %v1066
      %v2144 = vmul.f32 %v2132, %v1071
      %v2145 = vmul.f32 %v2135, %v1076
      %v2146 = vadd.f32 %v1983, %v2138
      %v2147 = vadd.f32 %v1984, %v2139
      %v2148 = vadd.f32 %v1985, %v2140
      %v2149 = vadd.f32 %v1986, %v2141
      %v2150 = vadd.f32 %v1987, %v2142
      %v2151 = vadd.f32 %v1988, %v2143
      %v2152 = vadd.f32 %v1989, %v2144
      %v2153 = vadd.f32 %v1990, %v2145
      %v2154 = vld [vmem:[%s2] sm:$0x1]
      %v2156 = vlaneseq
      %v2157 = vshrl.u32 %v2156, 7
      %v2158 = vsub.s32 0, %v2157
      %v2159 = vrot.slane %v2154, %v2158
      %v2161 = vadd.f32 %v2146, %v2159
      %v2162 = vadd.f32 %v2147, %v2159
      %v2163 = vadd.f32 %v2148, %v2159
      %v2164 = vadd.f32 %v2149, %v2159
      %v2165 = vadd.f32 %v2150, %v2159
      %v2166 = vadd.f32 %v2151, %v2159
      %v2167 = vadd.f32 %v2152, %v2159
      %v2168 = vadd.f32 %v2153, %v2159
      %v2169 = vmax.f32 %v2161, 0.0
      %v2170 = vmax.f32 %v2162, 0.0
      %v2171 = vmax.f32 %v2163, 0.0
      %v2172 = vmax.f32 %v2164, 0.0
      %v2173 = vmax.f32 %v2165, 0.0
      %v2174 = vmax.f32 %v2166, 0.0
      %v2175 = vmax.f32 %v2167, 0.0
      %v2176 = vmax.f32 %v2168, 0.0
      %2177 = vst [vmem:[#allocation3] sm:$0xf] 0
      %v2178 = vld [vmem:[#allocation3 + $0x4] sm:$0x1]
      %v2179 = vsel %vm340, 0, %v2178
      %2180 = vst [vmem:[#allocation3 + $0x4] sm:$0x1] %v2179
      %v2181 = vld [vmem:[#allocation3 + $0x24] sm:$0xf]
      %v2182 = vsel %vm346, 0, %v2181
      %2183 = vst [vmem:[#allocation3 + $0x24] sm:$0xf] %v2182
      %2184 = vst [vmem:[#allocation3 + $0x28] sm:$0x1] 0
      %v2185 = vpack.c.bf16 %v2170, %v2169
      %v2186 = vpack.c.bf16 %v2172, %v2171
      %v2187 = vpack.c.bf16 %v2174, %v2173
      %v2188 = vpack.c.bf16 %v2176, %v2175
      %v2193 = vunpack.c.l.b16 %v2185
      %v2194 = vunpack.c.h.b16 %v2185
      %v2195 = vunpack.c.l.b16 %v2186
      %v2196 = vunpack.c.h.b16 %v2186
      %v2197 = vunpack.c.l.b16 %v2187
      %v2198 = vunpack.c.h.b16 %v2187
      %v2199 = vunpack.c.l.b16 %v2188
      %v2200 = vunpack.c.h.b16 %v2188
      %v2201 = vpack.c.b16 %v2193, %v2193
      %v2202 = vpack.c.b16 %v2194, %v2194
      %v2203 = vpack.c.b16 %v2195, %v2195
      %v2204 = vpack.c.b16 %v2196, %v2196
      %v2205 = vpack.c.b16 %v2197, %v2197
      %v2206 = vpack.c.b16 %v2198, %v2198
      %v2207 = vpack.c.b16 %v2199, %v2199
      %v2208 = vpack.c.b16 %v2200, %v2200
      %v2210 = vshrl.u32 %v2201, 16
      %v2212 = vrot.slane %v2210, 7
      %v2213 = vshll.u32 %v2201, 16
      %v2215 = vor.u32 %v2212, %v2213
      %v2216 = vrot.slane %v2212, 4
      %v2218 = vshrl.u32 %v2202, 16
      %v2220 = vrot.slane %v2218, 7
      %v2221 = vshll.u32 %v2202, 16
      %v2223 = vor.u32 %v2220, %v2221
      %v2224 = vsel %vm352, %v2216, %v2223
      %v2225 = vrot.slane %v2220, 4
      %v2227 = vshrl.u32 %v2203, 16
      %v2229 = vrot.slane %v2227, 7
      %v2230 = vshll.u32 %v2203, 16
      %v2232 = vor.u32 %v2229, %v2230
      %v2233 = vsel %vm352, %v2225, %v2232
      %v2234 = vrot.slane %v2229, 4
      %v2236 = vshrl.u32 %v2204, 16
      %v2238 = vrot.slane %v2236, 7
      %v2239 = vshll.u32 %v2204, 16
      %v2241 = vor.u32 %v2238, %v2239
      %v2242 = vsel %vm352, %v2234, %v2241
      %v2243 = vrot.slane %v2238, 4
      %v2245 = vshrl.u32 %v2205, 16
      %v2247 = vrot.slane %v2245, 7
      %v2248 = vshll.u32 %v2205, 16
      %v2250 = vor.u32 %v2247, %v2248
      %v2251 = vsel %vm352, %v2243, %v2250
      %v2252 = vrot.slane %v2247, 4
      %v2254 = vshrl.u32 %v2206, 16
      %v2256 = vrot.slane %v2254, 7
      %v2257 = vshll.u32 %v2206, 16
      %v2259 = vor.u32 %v2256, %v2257
      %v2260 = vsel %vm352, %v2252, %v2259
      %v2261 = vrot.slane %v2256, 4
      %v2263 = vshrl.u32 %v2207, 16
      %v2265 = vrot.slane %v2263, 7
      %v2266 = vshll.u32 %v2207, 16
      %v2268 = vor.u32 %v2265, %v2266
      %v2269 = vsel %vm352, %v2261, %v2268
      %v2270 = vrot.slane %v2265, 4
      %v2272 = vshrl.u32 %v2208, 16
      %v2274 = vrot.slane %v2272, 7
      %v2275 = vshll.u32 %v2208, 16
      %v2277 = vor.u32 %v2274, %v2275
      %v2278 = vsel %vm352, %v2270, %v2277
      %v2279 = vrot.slane %v2274, 4
      %v2289 = vld [vmem:[#allocation3 + $0x4] sm:$0xf]
      %v2290 = vsel %vm346, %v2215, %v2289
      %2291 = vst [vmem:[#allocation3 + $0x4] sm:$0xf] %v2290
      %2292 = vst [vmem:[#allocation3 + $0x8] sm:$0xf] %v2224
      %2293 = vst [vmem:[#allocation3 + $0xc] sm:$0xf] %v2233
      %2294 = vst [vmem:[#allocation3 + $0x10] sm:$0xf] %v2242
      %2295 = vst [vmem:[#allocation3 + $0x14] sm:$0xf] %v2251
      %2296 = vst [vmem:[#allocation3 + $0x18] sm:$0xf] %v2260
      %2297 = vst [vmem:[#allocation3 + $0x1c] sm:$0xf] %v2269
      %2298 = vst [vmem:[#allocation3 + $0x20] sm:$0xf] %v2278
      %v2299 = vld [vmem:[#allocation3 + $0x24] sm:$0x1]
      %v2300 = vsel %vm340, %v2279, %v2299
      %2301 = vst [vmem:[#allocation3 + $0x24] sm:$0x1] %v2300
      %v2302 = vld [vmem:[#allocation3] sm:$0xf]
      %v2303 = vld [vmem:[#allocation3 + $0x4] sm:$0xf]
      %v2304 = vld [vmem:[#allocation3 + $0x8] sm:$0xf]
      %v2305 = vld [vmem:[#allocation3 + $0xc] sm:$0xf]
      %v2306 = vld [vmem:[#allocation3 + $0x10] sm:$0xf]
      %v2307 = vld [vmem:[#allocation3 + $0x14] sm:$0xf]
      %v2308 = vld [vmem:[#allocation3 + $0x18] sm:$0xf]
      %v2309 = vld [vmem:[#allocation3 + $0x1c] sm:$0xf]
      %v2310 = vld [vmem:[%s3] sm:$0xf]
      %v2311 = vld [vmem:[%s3 + $0x4] sm:$0xf]
      %v2312 = vld [vmem:[%s3 + $0x8] sm:$0xf]
      %v2313 = vld [vmem:[%s3 + $0xc] sm:$0xf]
      %v2314 = vld [vmem:[%s3 + $0x10] sm:$0xf]
      %v2315 = vld [vmem:[%s3 + $0x14] sm:$0xf]
      %v2316 = vld [vmem:[%s3 + $0x18] sm:$0xf]
      %v2317 = vld [vmem:[%s3 + $0x1c] sm:$0xf]
      %v2318 = vld [vmem:[%s3 + $0x20] sm:$0xf]
      %v2319 = vld [vmem:[%s3 + $0x24] sm:$0xf]
      %v2320 = vld [vmem:[%s3 + $0x28] sm:$0xf]
      %v2321 = vld [vmem:[%s3 + $0x2c] sm:$0xf]
      %v2322 = vld [vmem:[%s3 + $0x30] sm:$0xf]
      %v2323 = vld [vmem:[%s3 + $0x34] sm:$0xf]
      %v2324 = vld [vmem:[%s3 + $0x38] sm:$0xf]
      %v2325 = vld [vmem:[%s3 + $0x3c] sm:$0xf]
      %v2334 = vunpack.c.l.b16 %v2302
      %v2335 = vunpack.c.l.b16 %v2303
      %v2336 = vunpack.c.l.b16 %v2304
      %v2337 = vunpack.c.l.b16 %v2305
      %v2338 = vunpack.c.l.b16 %v2306
      %v2339 = vunpack.c.l.b16 %v2307
      %v2340 = vunpack.c.l.b16 %v2308
      %v2341 = vunpack.c.l.b16 %v2309
      %v2342 = vpack.c.b16 %v2335, %v2334
      %v2343 = vpack.c.b16 %v2337, %v2336
      %v2344 = vpack.c.b16 %v2339, %v2338
      %v2345 = vpack.c.b16 %v2341, %v2340
      %v2366 = vunpack.c.l.b16 %v2310
      %v2367 = vunpack.c.l.b16 %v2311
      %v2368 = vunpack.c.l.b16 %v2312
      %v2369 = vunpack.c.l.b16 %v2313
      %v2370 = vunpack.c.l.b16 %v2314
      %v2371 = vunpack.c.l.b16 %v2315
      %v2372 = vunpack.c.l.b16 %v2316
      %v2373 = vunpack.c.l.b16 %v2317
      %v2374 = vunpack.c.l.b16 %v2318
      %v2375 = vunpack.c.l.b16 %v2319
      %v2376 = vunpack.c.l.b16 %v2320
      %v2377 = vunpack.c.l.b16 %v2321
      %v2378 = vunpack.c.l.b16 %v2322
      %v2379 = vunpack.c.l.b16 %v2323
      %v2380 = vunpack.c.l.b16 %v2324
      %v2381 = vunpack.c.l.b16 %v2325
      %v2382 = vpack.c.b16 %v2367, %v2366
      %v2383 = vpack.c.b16 %v2369, %v2368
      %v2384 = vpack.c.b16 %v2371, %v2370
      %v2385 = vpack.c.b16 %v2373, %v2372
      %v2386 = vpack.c.b16 %v2375, %v2374
      %v2387 = vpack.c.b16 %v2377, %v2376
      %v2388 = vpack.c.b16 %v2379, %v2378
      %v2389 = vpack.c.b16 %v2381, %v2380
      %2398 = vmatprep.subr.bf16.mxu0 0
      %2399 = vmatpush1.bf16.msra.mxu0 %v2389
      %2400 = vmatprep.subr.bf16.mxu0 0
      %2401 = vmatpush1.bf16.msra.mxu0 %v2388
      %2402 = vmatprep.subr.bf16.mxu0 0
      %2403 = vmatpush1.bf16.msra.mxu0 %v2387
      %2404 = vmatprep.subr.bf16.mxu0 0
      %2405 = vmatpush1.bf16.msra.mxu0 %v2386
      %2406 = vmatprep.subr.bf16.mxu0 0
      %2407 = vmatpush1.bf16.msra.mxu0 %v2385
      %2408 = vmatprep.subr.bf16.mxu0 0
      %2409 = vmatpush1.bf16.msra.mxu0 %v2384
      %2410 = vmatprep.subr.bf16.mxu0 0
      %2411 = vmatpush1.bf16.msra.mxu0 %v2383
      %2412 = vmatprep.subr.bf16.mxu0 0
      %2413 = vmatpush1.bf16.msra.mxu0 %v2382
      %2414 = vmatprep.subr.bf16.mxu0 0
      %2415 = vmatpush2.bf16.msra.mxu0 0
      %2416 = vmatprep.subr.bf16.mxu0 0
      %2417 = vmatpush2.bf16.msra.mxu0 0
      %2418 = vmatprep.subr.bf16.mxu0 0
      %2419 = vmatpush2.bf16.msra.mxu0 0
      %2420 = vmatprep.subr.bf16.mxu0 0
      %2421 = vmatpush2.bf16.msra.mxu0 0
      %2422 = vmatprep.subr.bf16.mxu0 0
      %2423 = vmatpush2.bf16.msra.mxu0 0
      %2424 = vmatprep.subr.bf16.mxu0 0
      %2425 = vmatpush2.bf16.msra.mxu0 0
      %2426 = vmatprep.subr.bf16.mxu0 0
      %2427 = vmatpush2.bf16.msra.mxu0 0
      %2428 = vmatprep.subr.bf16.mxu0 0
      %2429 = vmatpush2.bf16.msra.mxu0 0
      %2430 = vmatprep.mubr.bf16.mxu0 0
      %2431 = vmatmul.mubr.bf16.gmra.mxu0 %v2342
      %v2432 = vpop.f32.mrf.mxu0
      %v2433 = vadd.f32 0.0, %v2432
      %v2434 = vpop.f32.mrf.mxu0
      %v2435 = vpop.f32.mrf.mxu0
      %v2436 = vadd.f32 0.0, %v2435
      %v2437 = vpop.f32.mrf.mxu0
      %2438 = vmatprep.mubr.bf16.mxu0 0
      %2439 = vmatmul.mubr.bf16.gmra.mxu0 %v2343
      %v2440 = vpop.f32.mrf.mxu0
      %v2441 = vadd.f32 0.0, %v2440
      %v2442 = vpop.f32.mrf.mxu0
      %v2443 = vpop.f32.mrf.mxu0
      %v2444 = vadd.f32 0.0, %v2443
      %v2445 = vpop.f32.mrf.mxu0
      %2446 = vmatprep.mubr.bf16.mxu0 0
      %2447 = vmatmul.mubr.bf16.gmra.mxu0 %v2344
      %v2448 = vpop.f32.mrf.mxu0
      %v2449 = vadd.f32 0.0, %v2448
      %v2450 = vpop.f32.mrf.mxu0
      %v2451 = vpop.f32.mrf.mxu0
      %v2452 = vadd.f32 0.0, %v2451
      %v2453 = vpop.f32.mrf.mxu0
      %2454 = vmatprep.mubr.bf16.mxu0 0
      %2455 = vmatmul.mubr.bf16.gmra.mxu0 %v2345
      %v2456 = vpop.f32.mrf.mxu0
      %v2457 = vadd.f32 0.0, %v2456
      %v2458 = vpop.f32.mrf.mxu0
      %v2459 = vpop.f32.mrf.mxu0
      %v2460 = vadd.f32 0.0, %v2459
      %v2461 = vpop.f32.mrf.mxu0
      %2462 = vdwg.mxu0
      %v2463 = vmul.f32 %v2433, %v626
      %v2464 = vmul.f32 %v2436, %v631
      %v2465 = vmul.f32 %v2441, %v636
      %v2466 = vmul.f32 %v2444, %v641
      %v2467 = vmul.f32 %v2449, %v646
      %v2468 = vmul.f32 %v2452, %v651
      %v2469 = vmul.f32 %v2457, %v656
      %v2470 = vmul.f32 %v2460, %v661
      %v2471 = vadd.f32 %v2463, 0.0
      %v2472 = vadd.f32 %v2464, 0.0
      %v2473 = vadd.f32 %v2465, 0.0
      %v2474 = vadd.f32 %v2466, 0.0
      %v2475 = vadd.f32 %v2467, 0.0
      %v2476 = vadd.f32 %v2468, 0.0
      %v2477 = vadd.f32 %v2469, 0.0
      %v2478 = vadd.f32 %v2470, 0.0
      %v2479 = vld [vmem:[#allocation3] sm:$0xf]
      %v2480 = vld [vmem:[#allocation3 + $0x4] sm:$0xf]
      %v2481 = vld [vmem:[#allocation3 + $0x8] sm:$0xf]
      %v2482 = vld [vmem:[#allocation3 + $0xc] sm:$0xf]
      %v2483 = vld [vmem:[#allocation3 + $0x10] sm:$0xf]
      %v2484 = vld [vmem:[#allocation3 + $0x14] sm:$0xf]
      %v2485 = vld [vmem:[#allocation3 + $0x18] sm:$0xf]
      %v2486 = vld [vmem:[#allocation3 + $0x1c] sm:$0xf]
      %v2487 = vld [vmem:[#allocation3 + $0x20] sm:$0x1]
      %s2488 = scalar_lea.vmem %s3, 64
      %v2489 = vld [vmem:[%s2488] sm:$0xf]
      %v2490 = vld [vmem:[%s2488 + $0x4] sm:$0xf]
      %v2491 = vld [vmem:[%s2488 + $0x8] sm:$0xf]
      %v2492 = vld [vmem:[%s2488 + $0xc] sm:$0xf]
      %v2493 = vld [vmem:[%s2488 + $0x10] sm:$0xf]
      %v2494 = vld [vmem:[%s2488 + $0x14] sm:$0xf]
      %v2495 = vld [vmem:[%s2488 + $0x18] sm:$0xf]
      %v2496 = vld [vmem:[%s2488 + $0x1c] sm:$0xf]
      %v2497 = vld [vmem:[%s2488 + $0x20] sm:$0xf]
      %v2498 = vld [vmem:[%s2488 + $0x24] sm:$0xf]
      %v2499 = vld [vmem:[%s2488 + $0x28] sm:$0xf]
      %v2500 = vld [vmem:[%s2488 + $0x2c] sm:$0xf]
      %v2501 = vld [vmem:[%s2488 + $0x30] sm:$0xf]
      %v2502 = vld [vmem:[%s2488 + $0x34] sm:$0xf]
      %v2503 = vld [vmem:[%s2488 + $0x38] sm:$0xf]
      %v2504 = vld [vmem:[%s2488 + $0x3c] sm:$0xf]
      %v2514 = vunpack.c.l.b16 %v2479
      %v2515 = vunpack.c.l.b16 %v2480
      %v2516 = vunpack.c.l.b16 %v2481
      %v2517 = vunpack.c.l.b16 %v2482
      %v2518 = vunpack.c.l.b16 %v2483
      %v2519 = vunpack.c.l.b16 %v2484
      %v2520 = vunpack.c.l.b16 %v2485
      %v2521 = vunpack.c.l.b16 %v2486
      %v2522 = vunpack.c.l.b16 %v2487
      %v2523 = vpack.c.b16 %v2515, %v2514
      %v2524 = vpack.c.b16 %v2517, %v2516
      %v2525 = vpack.c.b16 %v2519, %v2518
      %v2526 = vpack.c.b16 %v2521, %v2520
      %v2527 = vpack.c.b16 %v2522, %v2522
      %v2529 = vshrl.u32 %v2523, 16
      %v2531 = vshll.u32 %v2523, 16
      %v2533 = vrot.slane %v2531, 1
      %v2534 = vor.u32 %v2529, %v2533
      %v2536 = vshll.u32 %v2524, 16
      %v2538 = vrot.slane %v2536, 1
      %v2539 = vsel %vm728, %v2534, %v2538
      %v2540 = vshrl.u32 %v2524, 16
      %v2542 = vor.u32 %v2540, %v2538
      %v2544 = vshll.u32 %v2525, 16
      %v2546 = vrot.slane %v2544, 1
      %v2547 = vsel %vm728, %v2542, %v2546
      %v2548 = vshrl.u32 %v2525, 16
      %v2550 = vor.u32 %v2548, %v2546
      %v2552 = vshll.u32 %v2526, 16
      %v2554 = vrot.slane %v2552, 1
      %v2555 = vsel %vm728, %v2550, %v2554
      %v2556 = vshrl.u32 %v2526, 16
      %v2558 = vor.u32 %v2556, %v2554
      %v2560 = vshll.u32 %v2527, 16
      %v2562 = vrot.slane %v2560, 1
      %v2563 = vsel %vm728, %v2558, %v2562
      %v2584 = vunpack.c.l.b16 %v2489
      %v2585 = vunpack.c.l.b16 %v2490
      %v2586 = vunpack.c.l.b16 %v2491
      %v2587 = vunpack.c.l.b16 %v2492
      %v2588 = vunpack.c.l.b16 %v2493
      %v2589 = vunpack.c.l.b16 %v2494
      %v2590 = vunpack.c.l.b16 %v2495
      %v2591 = vunpack.c.l.b16 %v2496
      %v2592 = vunpack.c.l.b16 %v2497
      %v2593 = vunpack.c.l.b16 %v2498
      %v2594 = vunpack.c.l.b16 %v2499
      %v2595 = vunpack.c.l.b16 %v2500
      %v2596 = vunpack.c.l.b16 %v2501
      %v2597 = vunpack.c.l.b16 %v2502
      %v2598 = vunpack.c.l.b16 %v2503
      %v2599 = vunpack.c.l.b16 %v2504
      %v2600 = vpack.c.b16 %v2585, %v2584
      %v2601 = vpack.c.b16 %v2587, %v2586
      %v2602 = vpack.c.b16 %v2589, %v2588
      %v2603 = vpack.c.b16 %v2591, %v2590
      %v2604 = vpack.c.b16 %v2593, %v2592
      %v2605 = vpack.c.b16 %v2595, %v2594
      %v2606 = vpack.c.b16 %v2597, %v2596
      %v2607 = vpack.c.b16 %v2599, %v2598
      %2616 = vmatprep.subr.bf16.mxu0 0
      %2617 = vmatpush1.bf16.msra.mxu0 %v2607
      %2618 = vmatprep.subr.bf16.mxu0 0
      %2619 = vmatpush1.bf16.msra.mxu0 %v2606
      %2620 = vmatprep.subr.bf16.mxu0 0
      %2621 = vmatpush1.bf16.msra.mxu0 %v2605
      %2622 = vmatprep.subr.bf16.mxu0 0
      %2623 = vmatpush1.bf16.msra.mxu0 %v2604
      %2624 = vmatprep.subr.bf16.mxu0 0
      %2625 = vmatpush1.bf16.msra.mxu0 %v2603
      %2626 = vmatprep.subr.bf16.mxu0 0
      %2627 = vmatpush1.bf16.msra.mxu0 %v2602
      %2628 = vmatprep.subr.bf16.mxu0 0
      %2629 = vmatpush1.bf16.msra.mxu0 %v2601
      %2630 = vmatprep.subr.bf16.mxu0 0
      %2631 = vmatpush1.bf16.msra.mxu0 %v2600
      %2632 = vmatprep.subr.bf16.mxu0 0
      %2633 = vmatpush2.bf16.msra.mxu0 0
      %2634 = vmatprep.subr.bf16.mxu0 0
      %2635 = vmatpush2.bf16.msra.mxu0 0
      %2636 = vmatprep.subr.bf16.mxu0 0
      %2637 = vmatpush2.bf16.msra.mxu0 0
      %2638 = vmatprep.subr.bf16.mxu0 0
      %2639 = vmatpush2.bf16.msra.mxu0 0
      %2640 = vmatprep.subr.bf16.mxu0 0
      %2641 = vmatpush2.bf16.msra.mxu0 0
      %2642 = vmatprep.subr.bf16.mxu0 0
      %2643 = vmatpush2.bf16.msra.mxu0 0
      %2644 = vmatprep.subr.bf16.mxu0 0
      %2645 = vmatpush2.bf16.msra.mxu0 0
      %2646 = vmatprep.subr.bf16.mxu0 0
      %2647 = vmatpush2.bf16.msra.mxu0 0
      %2648 = vmatprep.mubr.bf16.mxu0 0
      %2649 = vmatmul.mubr.bf16.gmra.mxu0 %v2539
      %v2650 = vpop.f32.mrf.mxu0
      %v2651 = vadd.f32 0.0, %v2650
      %v2652 = vpop.f32.mrf.mxu0
      %v2653 = vpop.f32.mrf.mxu0
      %v2654 = vadd.f32 0.0, %v2653
      %v2655 = vpop.f32.mrf.mxu0
      %2656 = vmatprep.mubr.bf16.mxu0 0
      %2657 = vmatmul.mubr.bf16.gmra.mxu0 %v2547
      %v2658 = vpop.f32.mrf.mxu0
      %v2659 = vadd.f32 0.0, %v2658
      %v2660 = vpop.f32.mrf.mxu0
      %v2661 = vpop.f32.mrf.mxu0
      %v2662 = vadd.f32 0.0, %v2661
      %v2663 = vpop.f32.mrf.mxu0
      %2664 = vmatprep.mubr.bf16.mxu0 0
      %2665 = vmatmul.mubr.bf16.gmra.mxu0 %v2555
      %v2666 = vpop.f32.mrf.mxu0
      %v2667 = vadd.f32 0.0, %v2666
      %v2668 = vpop.f32.mrf.mxu0
      %v2669 = vpop.f32.mrf.mxu0
      %v2670 = vadd.f32 0.0, %v2669
      %v2671 = vpop.f32.mrf.mxu0
      %2672 = vmatprep.mubr.bf16.mxu0 0
      %2673 = vmatmul.mubr.bf16.gmra.mxu0 %v2563
      %v2674 = vpop.f32.mrf.mxu0
      %v2675 = vadd.f32 0.0, %v2674
      %v2676 = vpop.f32.mrf.mxu0
      %v2677 = vpop.f32.mrf.mxu0
      %v2678 = vadd.f32 0.0, %v2677
      %v2679 = vpop.f32.mrf.mxu0
      %2680 = vdwg.mxu0
      %v2681 = vadd.f32 %v2471, %v2651
      %v2682 = vadd.f32 %v2472, %v2654
      %v2683 = vadd.f32 %v2473, %v2659
      %v2684 = vadd.f32 %v2474, %v2662
      %v2685 = vadd.f32 %v2475, %v2667
      %v2686 = vadd.f32 %v2476, %v2670
      %v2687 = vadd.f32 %v2477, %v2675
      %v2688 = vadd.f32 %v2478, %v2678
      %v2689 = vld [vmem:[#allocation3] sm:$0xe]
      %s2690 = scalar_lea.vmem %s3, 128
      %v2691 = vld [vmem:[%s2690] sm:$0xf]
      %v2692 = vld [vmem:[%s2690 + $0x4] sm:$0xf]
      %v2693 = vld [vmem:[%s2690 + $0x8] sm:$0xf]
      %v2694 = vld [vmem:[%s2690 + $0xc] sm:$0xf]
      %v2695 = vld [vmem:[%s2690 + $0x10] sm:$0xf]
      %v2696 = vld [vmem:[%s2690 + $0x14] sm:$0xf]
      %v2697 = vld [vmem:[%s2690 + $0x18] sm:$0xf]
      %v2698 = vld [vmem:[%s2690 + $0x1c] sm:$0xf]
      %v2699 = vld [vmem:[%s2690 + $0x20] sm:$0xf]
      %v2700 = vld [vmem:[%s2690 + $0x24] sm:$0xf]
      %v2701 = vld [vmem:[%s2690 + $0x28] sm:$0xf]
      %v2702 = vld [vmem:[%s2690 + $0x2c] sm:$0xf]
      %v2703 = vld [vmem:[%s2690 + $0x30] sm:$0xf]
      %v2704 = vld [vmem:[%s2690 + $0x34] sm:$0xf]
      %v2705 = vld [vmem:[%s2690 + $0x38] sm:$0xf]
      %v2706 = vld [vmem:[%s2690 + $0x3c] sm:$0xf]
      %v2708 = vunpack.c.l.b16 %v2689
      %v2709 = vpack.c.b16 %v2515, %v2708
      %v2710 = vrot.slane %v2709, 1
      %v2711 = vrot.slane %v2524, 1
      %v2712 = vsel %vm911, %v2710, %v2711
      %v2713 = vrot.slane %v2525, 1
      %v2714 = vsel %vm911, %v2711, %v2713
      %v2715 = vrot.slane %v2526, 1
      %v2716 = vsel %vm911, %v2713, %v2715
      %v2717 = vrot.slane %v2527, 1
      %v2718 = vsel %vm911, %v2715, %v2717
      %v2739 = vunpack.c.l.b16 %v2691
      %v2740 = vunpack.c.l.b16 %v2692
      %v2741 = vunpack.c.l.b16 %v2693
      %v2742 = vunpack.c.l.b16 %v2694
      %v2743 = vunpack.c.l.b16 %v2695
      %v2744 = vunpack.c.l.b16 %v2696
      %v2745 = vunpack.c.l.b16 %v2697
      %v2746 = vunpack.c.l.b16 %v2698
      %v2747 = vunpack.c.l.b16 %v2699
      %v2748 = vunpack.c.l.b16 %v2700
      %v2749 = vunpack.c.l.b16 %v2701
      %v2750 = vunpack.c.l.b16 %v2702
      %v2751 = vunpack.c.l.b16 %v2703
      %v2752 = vunpack.c.l.b16 %v2704
      %v2753 = vunpack.c.l.b16 %v2705
      %v2754 = vunpack.c.l.b16 %v2706
      %v2755 = vpack.c.b16 %v2740, %v2739
      %v2756 = vpack.c.b16 %v2742, %v2741
      %v2757 = vpack.c.b16 %v2744, %v2743
      %v2758 = vpack.c.b16 %v2746, %v2745
      %v2759 = vpack.c.b16 %v2748, %v2747
      %v2760 = vpack.c.b16 %v2750, %v2749
      %v2761 = vpack.c.b16 %v2752, %v2751
      %v2762 = vpack.c.b16 %v2754, %v2753
      %2771 = vmatprep.subr.bf16.mxu0 0
      %2772 = vmatpush1.bf16.msra.mxu0 %v2762
      %2773 = vmatprep.subr.bf16.mxu0 0
      %2774 = vmatpush1.bf16.msra.mxu0 %v2761
      %2775 = vmatprep.subr.bf16.mxu0 0
      %2776 = vmatpush1.bf16.msra.mxu0 %v2760
      %2777 = vmatprep.subr.bf16.mxu0 0
      %2778 = vmatpush1.bf16.msra.mxu0 %v2759
      %2779 = vmatprep.subr.bf16.mxu0 0
      %2780 = vmatpush1.bf16.msra.mxu0 %v2758
      %2781 = vmatprep.subr.bf16.mxu0 0
      %2782 = vmatpush1.bf16.msra.mxu0 %v2757
      %2783 = vmatprep.subr.bf16.mxu0 0
      %2784 = vmatpush1.bf16.msra.mxu0 %v2756
      %2785 = vmatprep.subr.bf16.mxu0 0
      %2786 = vmatpush1.bf16.msra.mxu0 %v2755
      %2787 = vmatprep.subr.bf16.mxu0 0
      %2788 = vmatpush2.bf16.msra.mxu0 0
      %2789 = vmatprep.subr.bf16.mxu0 0
      %2790 = vmatpush2.bf16.msra.mxu0 0
      %2791 = vmatprep.subr.bf16.mxu0 0
      %2792 = vmatpush2.bf16.msra.mxu0 0
      %2793 = vmatprep.subr.bf16.mxu0 0
      %2794 = vmatpush2.bf16.msra.mxu0 0
      %2795 = vmatprep.subr.bf16.mxu0 0
      %2796 = vmatpush2.bf16.msra.mxu0 0
      %2797 = vmatprep.subr.bf16.mxu0 0
      %2798 = vmatpush2.bf16.msra.mxu0 0
      %2799 = vmatprep.subr.bf16.mxu0 0
      %2800 = vmatpush2.bf16.msra.mxu0 0
      %2801 = vmatprep.subr.bf16.mxu0 0
      %2802 = vmatpush2.bf16.msra.mxu0 0
      %2803 = vmatprep.mubr.bf16.mxu0 0
      %2804 = vmatmul.mubr.bf16.gmra.mxu0 %v2712
      %v2805 = vpop.f32.mrf.mxu0
      %v2806 = vadd.f32 0.0, %v2805
      %v2807 = vpop.f32.mrf.mxu0
      %v2808 = vpop.f32.mrf.mxu0
      %v2809 = vadd.f32 0.0, %v2808
      %v2810 = vpop.f32.mrf.mxu0
      %2811 = vmatprep.mubr.bf16.mxu0 0
      %2812 = vmatmul.mubr.bf16.gmra.mxu0 %v2714
      %v2813 = vpop.f32.mrf.mxu0
      %v2814 = vadd.f32 0.0, %v2813
      %v2815 = vpop.f32.mrf.mxu0
      %v2816 = vpop.f32.mrf.mxu0
      %v2817 = vadd.f32 0.0, %v2816
      %v2818 = vpop.f32.mrf.mxu0
      %2819 = vmatprep.mubr.bf16.mxu0 0
      %2820 = vmatmul.mubr.bf16.gmra.mxu0 %v2716
      %v2821 = vpop.f32.mrf.mxu0
      %v2822 = vadd.f32 0.0, %v2821
      %v2823 = vpop.f32.mrf.mxu0
      %v2824 = vpop.f32.mrf.mxu0
      %v2825 = vadd.f32 0.0, %v2824
      %v2826 = vpop.f32.mrf.mxu0
      %2827 = vmatprep.mubr.bf16.mxu0 0
      %2828 = vmatmul.mubr.bf16.gmra.mxu0 %v2718
      %v2829 = vpop.f32.mrf.mxu0
      %v2830 = vadd.f32 0.0, %v2829
      %v2831 = vpop.f32.mrf.mxu0
      %v2832 = vpop.f32.mrf.mxu0
      %v2833 = vadd.f32 0.0, %v2832
      %v2834 = vpop.f32.mrf.mxu0
      %2835 = vdwg.mxu0
      %v2836 = vmul.f32 %v2806, %v1041
      %v2837 = vmul.f32 %v2809, %v1046
      %v2838 = vmul.f32 %v2814, %v1051
      %v2839 = vmul.f32 %v2817, %v1056
      %v2840 = vmul.f32 %v2822, %v1061
      %v2841 = vmul.f32 %v2825, %v1066
      %v2842 = vmul.f32 %v2830, %v1071
      %v2843 = vmul.f32 %v2833, %v1076
      %v2844 = vadd.f32 %v2681, %v2836
      %v2845 = vadd.f32 %v2682, %v2837
      %v2846 = vadd.f32 %v2683, %v2838
      %v2847 = vadd.f32 %v2684, %v2839
      %v2848 = vadd.f32 %v2685, %v2840
      %v2849 = vadd.f32 %v2686, %v2841
      %v2850 = vadd.f32 %v2687, %v2842
      %v2851 = vadd.f32 %v2688, %v2843
      %v2852 = vld [vmem:[#allocation3 + $0x20] sm:$0xf]
      %s2853 = scalar_lea.vmem %s3, 192
      %v2854 = vld [vmem:[%s2853] sm:$0xf]
      %v2855 = vld [vmem:[%s2853 + $0x4] sm:$0xf]
      %v2856 = vld [vmem:[%s2853 + $0x8] sm:$0xf]
      %v2857 = vld [vmem:[%s2853 + $0xc] sm:$0xf]
      %v2858 = vld [vmem:[%s2853 + $0x10] sm:$0xf]
      %v2859 = vld [vmem:[%s2853 + $0x14] sm:$0xf]
      %v2860 = vld [vmem:[%s2853 + $0x18] sm:$0xf]
      %v2861 = vld [vmem:[%s2853 + $0x1c] sm:$0xf]
      %v2862 = vld [vmem:[%s2853 + $0x20] sm:$0xf]
      %v2863 = vld [vmem:[%s2853 + $0x24] sm:$0xf]
      %v2864 = vld [vmem:[%s2853 + $0x28] sm:$0xf]
      %v2865 = vld [vmem:[%s2853 + $0x2c] sm:$0xf]
      %v2866 = vld [vmem:[%s2853 + $0x30] sm:$0xf]
      %v2867 = vld [vmem:[%s2853 + $0x34] sm:$0xf]
      %v2868 = vld [vmem:[%s2853 + $0x38] sm:$0xf]
      %v2869 = vld [vmem:[%s2853 + $0x3c] sm:$0xf]
      %v2871 = vunpack.c.l.b16 %v2852
      %v2872 = vpack.c.b16 %v2516, %v2515
      %v2873 = vpack.c.b16 %v2518, %v2517
      %v2874 = vpack.c.b16 %v2520, %v2519
      %v2875 = vpack.c.b16 %v2871, %v2521
      %v2896 = vunpack.c.l.b16 %v2854
      %v2897 = vunpack.c.l.b16 %v2855
      %v2898 = vunpack.c.l.b16 %v2856
      %v2899 = vunpack.c.l.b16 %v2857
      %v2900 = vunpack.c.l.b16 %v2858
      %v2901 = vunpack.c.l.b16 %v2859
      %v2902 = vunpack.c.l.b16 %v2860
      %v2903 = vunpack.c.l.b16 %v2861
      %v2904 = vunpack.c.l.b16 %v2862
      %v2905 = vunpack.c.l.b16 %v2863
      %v2906 = vunpack.c.l.b16 %v2864
      %v2907 = vunpack.c.l.b16 %v2865
      %v2908 = vunpack.c.l.b16 %v2866
      %v2909 = vunpack.c.l.b16 %v2867
      %v2910 = vunpack.c.l.b16 %v2868
      %v2911 = vunpack.c.l.b16 %v2869
      %v2912 = vpack.c.b16 %v2897, %v2896
      %v2913 = vpack.c.b16 %v2899, %v2898
      %v2914 = vpack.c.b16 %v2901, %v2900
      %v2915 = vpack.c.b16 %v2903, %v2902
      %v2916 = vpack.c.b16 %v2905, %v2904
      %v2917 = vpack.c.b16 %v2907, %v2906
      %v2918 = vpack.c.b16 %v2909, %v2908
      %v2919 = vpack.c.b16 %v2911, %v2910
      %2928 = vmatprep.subr.bf16.mxu0 0
      %2929 = vmatpush1.bf16.msra.mxu0 %v2919
      %2930 = vmatprep.subr.bf16.mxu0 0
      %2931 = vmatpush1.bf16.msra.mxu0 %v2918
      %2932 = vmatprep.subr.bf16.mxu0 0
      %2933 = vmatpush1.bf16.msra.mxu0 %v2917
      %2934 = vmatprep.subr.bf16.mxu0 0
      %2935 = vmatpush1.bf16.msra.mxu0 %v2916
      %2936 = vmatprep.subr.bf16.mxu0 0
      %2937 = vmatpush1.bf16.msra.mxu0 %v2915
      %2938 = vmatprep.subr.bf16.mxu0 0
      %2939 = vmatpush1.bf16.msra.mxu0 %v2914
      %2940 = vmatprep.subr.bf16.mxu0 0
      %2941 = vmatpush1.bf16.msra.mxu0 %v2913
      %2942 = vmatprep.subr.bf16.mxu0 0
      %2943 = vmatpush1.bf16.msra.mxu0 %v2912
      %2944 = vmatprep.subr.bf16.mxu0 0
      %2945 = vmatpush2.bf16.msra.mxu0 0
      %2946 = vmatprep.subr.bf16.mxu0 0
      %2947 = vmatpush2.bf16.msra.mxu0 0
      %2948 = vmatprep.subr.bf16.mxu0 0
      %2949 = vmatpush2.bf16.msra.mxu0 0
      %2950 = vmatprep.subr.bf16.mxu0 0
      %2951 = vmatpush2.bf16.msra.mxu0 0
      %2952 = vmatprep.subr.bf16.mxu0 0
      %2953 = vmatpush2.bf16.msra.mxu0 0
      %2954 = vmatprep.subr.bf16.mxu0 0
      %2955 = vmatpush2.bf16.msra.mxu0 0
      %2956 = vmatprep.subr.bf16.mxu0 0
      %2957 = vmatpush2.bf16.msra.mxu0 0
      %2958 = vmatprep.subr.bf16.mxu0 0
      %2959 = vmatpush2.bf16.msra.mxu0 0
      %2960 = vmatprep.mubr.bf16.mxu0 0
      %2961 = vmatmul.mubr.bf16.gmra.mxu0 %v2872
      %v2962 = vpop.f32.mrf.mxu0
      %v2963 = vadd.f32 0.0, %v2962
      %v2964 = vpop.f32.mrf.mxu0
      %v2965 = vpop.f32.mrf.mxu0
      %v2966 = vadd.f32 0.0, %v2965
      %v2967 = vpop.f32.mrf.mxu0
      %2968 = vmatprep.mubr.bf16.mxu0 0
      %2969 = vmatmul.mubr.bf16.gmra.mxu0 %v2873
      %v2970 = vpop.f32.mrf.mxu0
      %v2971 = vadd.f32 0.0, %v2970
      %v2972 = vpop.f32.mrf.mxu0
      %v2973 = vpop.f32.mrf.mxu0
      %v2974 = vadd.f32 0.0, %v2973
      %v2975 = vpop.f32.mrf.mxu0
      %2976 = vmatprep.mubr.bf16.mxu0 0
      %2977 = vmatmul.mubr.bf16.gmra.mxu0 %v2874
      %v2978 = vpop.f32.mrf.mxu0
      %v2979 = vadd.f32 0.0, %v2978
      %v2980 = vpop.f32.mrf.mxu0
      %v2981 = vpop.f32.mrf.mxu0
      %v2982 = vadd.f32 0.0, %v2981
      %v2983 = vpop.f32.mrf.mxu0
      %2984 = vmatprep.mubr.bf16.mxu0 0
      %2985 = vmatmul.mubr.bf16.gmra.mxu0 %v2875
      %v2986 = vpop.f32.mrf.mxu0
      %v2987 = vadd.f32 0.0, %v2986
      %v2988 = vpop.f32.mrf.mxu0
      %v2989 = vpop.f32.mrf.mxu0
      %v2990 = vadd.f32 0.0, %v2989
      %v2991 = vpop.f32.mrf.mxu0
      %2992 = vdwg.mxu0
      %v2993 = vmul.f32 %v2963, %v626
      %v2994 = vmul.f32 %v2966, %v631
      %v2995 = vmul.f32 %v2971, %v636
      %v2996 = vmul.f32 %v2974, %v641
      %v2997 = vmul.f32 %v2979, %v646
      %v2998 = vmul.f32 %v2982, %v651
      %v2999 = vmul.f32 %v2987, %v656
      %v3000 = vmul.f32 %v2990, %v661
      %v3001 = vadd.f32 %v2844, %v2993
      %v3002 = vadd.f32 %v2845, %v2994
      %v3003 = vadd.f32 %v2846, %v2995
      %v3004 = vadd.f32 %v2847, %v2996
      %v3005 = vadd.f32 %v2848, %v2997
      %v3006 = vadd.f32 %v2849, %v2998
      %v3007 = vadd.f32 %v2850, %v2999
      %v3008 = vadd.f32 %v2851, %v3000
      %v3009 = vld [vmem:[#allocation3 + $0x4] sm:$0xf]
      %v3010 = vld [vmem:[#allocation3 + $0x8] sm:$0xf]
      %v3011 = vld [vmem:[#allocation3 + $0xc] sm:$0xf]
      %v3012 = vld [vmem:[#allocation3 + $0x10] sm:$0xf]
      %v3013 = vld [vmem:[#allocation3 + $0x14] sm:$0xf]
      %v3014 = vld [vmem:[#allocation3 + $0x18] sm:$0xf]
      %v3015 = vld [vmem:[#allocation3 + $0x1c] sm:$0xf]
      %v3016 = vld [vmem:[#allocation3 + $0x20] sm:$0xf]
      %v3017 = vld [vmem:[#allocation3 + $0x24] sm:$0x1]
      %s3018 = scalar_lea.vmem %s3, 256
      %v3019 = vld [vmem:[%s3018] sm:$0xf]
      %v3020 = vld [vmem:[%s3018 + $0x4] sm:$0xf]
      %v3021 = vld [vmem:[%s3018 + $0x8] sm:$0xf]
      %v3022 = vld [vmem:[%s3018 + $0xc] sm:$0xf]
      %v3023 = vld [vmem:[%s3018 + $0x10] sm:$0xf]
      %v3024 = vld [vmem:[%s3018 + $0x14] sm:$0xf]
      %v3025 = vld [vmem:[%s3018 + $0x18] sm:$0xf]
      %v3026 = vld [vmem:[%s3018 + $0x1c] sm:$0xf]
      %v3027 = vld [vmem:[%s3018 + $0x20] sm:$0xf]
      %v3028 = vld [vmem:[%s3018 + $0x24] sm:$0xf]
      %v3029 = vld [vmem:[%s3018 + $0x28] sm:$0xf]
      %v3030 = vld [vmem:[%s3018 + $0x2c] sm:$0xf]
      %v3031 = vld [vmem:[%s3018 + $0x30] sm:$0xf]
      %v3032 = vld [vmem:[%s3018 + $0x34] sm:$0xf]
      %v3033 = vld [vmem:[%s3018 + $0x38] sm:$0xf]
      %v3034 = vld [vmem:[%s3018 + $0x3c] sm:$0xf]
      %v3044 = vunpack.c.l.b16 %v3009
      %v3045 = vunpack.c.l.b16 %v3010
      %v3046 = vunpack.c.l.b16 %v3011
      %v3047 = vunpack.c.l.b16 %v3012
      %v3048 = vunpack.c.l.b16 %v3013
      %v3049 = vunpack.c.l.b16 %v3014
      %v3050 = vunpack.c.l.b16 %v3015
      %v3051 = vunpack.c.l.b16 %v3016
      %v3052 = vunpack.c.l.b16 %v3017
      %v3053 = vpack.c.b16 %v3045, %v3044
      %v3054 = vpack.c.b16 %v3047, %v3046
      %v3055 = vpack.c.b16 %v3049, %v3048
      %v3056 = vpack.c.b16 %v3051, %v3050
      %v3057 = vpack.c.b16 %v3052, %v3052
      %v3059 = vshrl.u32 %v3053, 16
      %v3061 = vshll.u32 %v3053, 16
      %v3063 = vrot.slane %v3061, 1
      %v3064 = vor.u32 %v3059, %v3063
      %v3066 = vshll.u32 %v3054, 16
      %v3068 = vrot.slane %v3066, 1
      %v3069 = vsel %vm728, %v3064, %v3068
      %v3070 = vshrl.u32 %v3054, 16
      %v3072 = vor.u32 %v3070, %v3068
      %v3074 = vshll.u32 %v3055, 16
      %v3076 = vrot.slane %v3074, 1
      %v3077 = vsel %vm728, %v3072, %v3076
      %v3078 = vshrl.u32 %v3055, 16
      %v3080 = vor.u32 %v3078, %v3076
      %v3082 = vshll.u32 %v3056, 16
      %v3084 = vrot.slane %v3082, 1
      %v3085 = vsel %vm728, %v3080, %v3084
      %v3086 = vshrl.u32 %v3056, 16
      %v3088 = vor.u32 %v3086, %v3084
      %v3090 = vshll.u32 %v3057, 16
      %v3092 = vrot.slane %v3090, 1
      %v3093 = vsel %vm728, %v3088, %v3092
      %v3114 = vunpack.c.l.b16 %v3019
      %v3115 = vunpack.c.l.b16 %v3020
      %v3116 = vunpack.c.l.b16 %v3021
      %v3117 = vunpack.c.l.b16 %v3022
      %v3118 = vunpack.c.l.b16 %v3023
      %v3119 = vunpack.c.l.b16 %v3024
      %v3120 = vunpack.c.l.b16 %v3025
      %v3121 = vunpack.c.l.b16 %v3026
      %v3122 = vunpack.c.l.b16 %v3027
      %v3123 = vunpack.c.l.b16 %v3028
      %v3124 = vunpack.c.l.b16 %v3029
      %v3125 = vunpack.c.l.b16 %v3030
      %v3126 = vunpack.c.l.b16 %v3031
      %v3127 = vunpack.c.l.b16 %v3032
      %v3128 = vunpack.c.l.b16 %v3033
      %v3129 = vunpack.c.l.b16 %v3034
      %v3130 = vpack.c.b16 %v3115, %v3114
      %v3131 = vpack.c.b16 %v3117, %v3116
      %v3132 = vpack.c.b16 %v3119, %v3118
      %v3133 = vpack.c.b16 %v3121, %v3120
      %v3134 = vpack.c.b16 %v3123, %v3122
      %v3135 = vpack.c.b16 %v3125, %v3124
      %v3136 = vpack.c.b16 %v3127, %v3126
      %v3137 = vpack.c.b16 %v3129, %v3128
      %3146 = vmatprep.subr.bf16.mxu0 0
      %3147 = vmatpush1.bf16.msra.mxu0 %v3137
      %3148 = vmatprep.subr.bf16.mxu0 0
      %3149 = vmatpush1.bf16.msra.mxu0 %v3136
      %3150 = vmatprep.subr.bf16.mxu0 0
      %3151 = vmatpush1.bf16.msra.mxu0 %v3135
      %3152 = vmatprep.subr.bf16.mxu0 0
      %3153 = vmatpush1.bf16.msra.mxu0 %v3134
      %3154 = vmatprep.subr.bf16.mxu0 0
      %3155 = vmatpush1.bf16.msra.mxu0 %v3133
      %3156 = vmatprep.subr.bf16.mxu0 0
      %3157 = vmatpush1.bf16.msra.mxu0 %v3132
      %3158 = vmatprep.subr.bf16.mxu0 0
      %3159 = vmatpush1.bf16.msra.mxu0 %v3131
      %3160 = vmatprep.subr.bf16.mxu0 0
      %3161 = vmatpush1.bf16.msra.mxu0 %v3130
      %3162 = vmatprep.subr.bf16.mxu0 0
      %3163 = vmatpush2.bf16.msra.mxu0 0
      %3164 = vmatprep.subr.bf16.mxu0 0
      %3165 = vmatpush2.bf16.msra.mxu0 0
      %3166 = vmatprep.subr.bf16.mxu0 0
      %3167 = vmatpush2.bf16.msra.mxu0 0
      %3168 = vmatprep.subr.bf16.mxu0 0
      %3169 = vmatpush2.bf16.msra.mxu0 0
      %3170 = vmatprep.subr.bf16.mxu0 0
      %3171 = vmatpush2.bf16.msra.mxu0 0
      %3172 = vmatprep.subr.bf16.mxu0 0
      %3173 = vmatpush2.bf16.msra.mxu0 0
      %3174 = vmatprep.subr.bf16.mxu0 0
      %3175 = vmatpush2.bf16.msra.mxu0 0
      %3176 = vmatprep.subr.bf16.mxu0 0
      %3177 = vmatpush2.bf16.msra.mxu0 0
      %3178 = vmatprep.mubr.bf16.mxu0 0
      %3179 = vmatmul.mubr.bf16.gmra.mxu0 %v3069
      %v3180 = vpop.f32.mrf.mxu0
      %v3181 = vadd.f32 0.0, %v3180
      %v3182 = vpop.f32.mrf.mxu0
      %v3183 = vpop.f32.mrf.mxu0
      %v3184 = vadd.f32 0.0, %v3183
      %v3185 = vpop.f32.mrf.mxu0
      %3186 = vmatprep.mubr.bf16.mxu0 0
      %3187 = vmatmul.mubr.bf16.gmra.mxu0 %v3077
      %v3188 = vpop.f32.mrf.mxu0
      %v3189 = vadd.f32 0.0, %v3188
      %v3190 = vpop.f32.mrf.mxu0
      %v3191 = vpop.f32.mrf.mxu0
      %v3192 = vadd.f32 0.0, %v3191
      %v3193 = vpop.f32.mrf.mxu0
      %3194 = vmatprep.mubr.bf16.mxu0 0
      %3195 = vmatmul.mubr.bf16.gmra.mxu0 %v3085
      %v3196 = vpop.f32.mrf.mxu0
      %v3197 = vadd.f32 0.0, %v3196
      %v3198 = vpop.f32.mrf.mxu0
      %v3199 = vpop.f32.mrf.mxu0
      %v3200 = vadd.f32 0.0, %v3199
      %v3201 = vpop.f32.mrf.mxu0
      %3202 = vmatprep.mubr.bf16.mxu0 0
      %3203 = vmatmul.mubr.bf16.gmra.mxu0 %v3093
      %v3204 = vpop.f32.mrf.mxu0
      %v3205 = vadd.f32 0.0, %v3204
      %v3206 = vpop.f32.mrf.mxu0
      %v3207 = vpop.f32.mrf.mxu0
      %v3208 = vadd.f32 0.0, %v3207
      %v3209 = vpop.f32.mrf.mxu0
      %3210 = vdwg.mxu0
      %v3211 = vadd.f32 %v3001, %v3181
      %v3212 = vadd.f32 %v3002, %v3184
      %v3213 = vadd.f32 %v3003, %v3189
      %v3214 = vadd.f32 %v3004, %v3192
      %v3215 = vadd.f32 %v3005, %v3197
      %v3216 = vadd.f32 %v3006, %v3200
      %v3217 = vadd.f32 %v3007, %v3205
      %v3218 = vadd.f32 %v3008, %v3208
      %v3219 = vld [vmem:[#allocation3 + $0x4] sm:$0xe]
      %s3220 = scalar_lea.vmem %s3, 320
      %v3221 = vld [vmem:[%s3220] sm:$0xf]
      %v3222 = vld [vmem:[%s3220 + $0x4] sm:$0xf]
      %v3223 = vld [vmem:[%s3220 + $0x8] sm:$0xf]
      %v3224 = vld [vmem:[%s3220 + $0xc] sm:$0xf]
      %v3225 = vld [vmem:[%s3220 + $0x10] sm:$0xf]
      %v3226 = vld [vmem:[%s3220 + $0x14] sm:$0xf]
      %v3227 = vld [vmem:[%s3220 + $0x18] sm:$0xf]
      %v3228 = vld [vmem:[%s3220 + $0x1c] sm:$0xf]
      %v3229 = vld [vmem:[%s3220 + $0x20] sm:$0xf]
      %v3230 = vld [vmem:[%s3220 + $0x24] sm:$0xf]
      %v3231 = vld [vmem:[%s3220 + $0x28] sm:$0xf]
      %v3232 = vld [vmem:[%s3220 + $0x2c] sm:$0xf]
      %v3233 = vld [vmem:[%s3220 + $0x30] sm:$0xf]
      %v3234 = vld [vmem:[%s3220 + $0x34] sm:$0xf]
      %v3235 = vld [vmem:[%s3220 + $0x38] sm:$0xf]
      %v3236 = vld [vmem:[%s3220 + $0x3c] sm:$0xf]
      %v3238 = vunpack.c.l.b16 %v3219
      %v3239 = vpack.c.b16 %v3045, %v3238
      %v3240 = vrot.slane %v3239, 1
      %v3241 = vrot.slane %v3054, 1
      %v3242 = vsel %vm911, %v3240, %v3241
      %v3243 = vrot.slane %v3055, 1
      %v3244 = vsel %vm911, %v3241, %v3243
      %v3245 = vrot.slane %v3056, 1
      %v3246 = vsel %vm911, %v3243, %v3245
      %v3247 = vrot.slane %v3057, 1
      %v3248 = vsel %vm911, %v3245, %v3247
      %v3269 = vunpack.c.l.b16 %v3221
      %v3270 = vunpack.c.l.b16 %v3222
      %v3271 = vunpack.c.l.b16 %v3223
      %v3272 = vunpack.c.l.b16 %v3224
      %v3273 = vunpack.c.l.b16 %v3225
      %v3274 = vunpack.c.l.b16 %v3226
      %v3275 = vunpack.c.l.b16 %v3227
      %v3276 = vunpack.c.l.b16 %v3228
      %v3277 = vunpack.c.l.b16 %v3229
      %v3278 = vunpack.c.l.b16 %v3230
      %v3279 = vunpack.c.l.b16 %v3231
      %v3280 = vunpack.c.l.b16 %v3232
      %v3281 = vunpack.c.l.b16 %v3233
      %v3282 = vunpack.c.l.b16 %v3234
      %v3283 = vunpack.c.l.b16 %v3235
      %v3284 = vunpack.c.l.b16 %v3236
      %v3285 = vpack.c.b16 %v3270, %v3269
      %v3286 = vpack.c.b16 %v3272, %v3271
      %v3287 = vpack.c.b16 %v3274, %v3273
      %v3288 = vpack.c.b16 %v3276, %v3275
      %v3289 = vpack.c.b16 %v3278, %v3277
      %v3290 = vpack.c.b16 %v3280, %v3279
      %v3291 = vpack.c.b16 %v3282, %v3281
      %v3292 = vpack.c.b16 %v3284, %v3283
      %3301 = vmatprep.subr.bf16.mxu0 0
      %3302 = vmatpush1.bf16.msra.mxu0 %v3292
      %3303 = vmatprep.subr.bf16.mxu0 0
      %3304 = vmatpush1.bf16.msra.mxu0 %v3291
      %3305 = vmatprep.subr.bf16.mxu0 0
      %3306 = vmatpush1.bf16.msra.mxu0 %v3290
      %3307 = vmatprep.subr.bf16.mxu0 0
      %3308 = vmatpush1.bf16.msra.mxu0 %v3289
      %3309 = vmatprep.subr.bf16.mxu0 0
      %3310 = vmatpush1.bf16.msra.mxu0 %v3288
      %3311 = vmatprep.subr.bf16.mxu0 0
      %3312 = vmatpush1.bf16.msra.mxu0 %v3287
      %3313 = vmatprep.subr.bf16.mxu0 0
      %3314 = vmatpush1.bf16.msra.mxu0 %v3286
      %3315 = vmatprep.subr.bf16.mxu0 0
      %3316 = vmatpush1.bf16.msra.mxu0 %v3285
      %3317 = vmatprep.subr.bf16.mxu0 0
      %3318 = vmatpush2.bf16.msra.mxu0 0
      %3319 = vmatprep.subr.bf16.mxu0 0
      %3320 = vmatpush2.bf16.msra.mxu0 0
      %3321 = vmatprep.subr.bf16.mxu0 0
      %3322 = vmatpush2.bf16.msra.mxu0 0
      %3323 = vmatprep.subr.bf16.mxu0 0
      %3324 = vmatpush2.bf16.msra.mxu0 0
      %3325 = vmatprep.subr.bf16.mxu0 0
      %3326 = vmatpush2.bf16.msra.mxu0 0
      %3327 = vmatprep.subr.bf16.mxu0 0
      %3328 = vmatpush2.bf16.msra.mxu0 0
      %3329 = vmatprep.subr.bf16.mxu0 0
      %3330 = vmatpush2.bf16.msra.mxu0 0
      %3331 = vmatprep.subr.bf16.mxu0 0
      %3332 = vmatpush2.bf16.msra.mxu0 0
      %3333 = vmatprep.mubr.bf16.mxu0 0
      %3334 = vmatmul.mubr.bf16.gmra.mxu0 %v3242
      %v3335 = vpop.f32.mrf.mxu0
      %v3336 = vadd.f32 0.0, %v3335
      %v3337 = vpop.f32.mrf.mxu0
      %v3338 = vpop.f32.mrf.mxu0
      %v3339 = vadd.f32 0.0, %v3338
      %v3340 = vpop.f32.mrf.mxu0
      %3341 = vmatprep.mubr.bf16.mxu0 0
      %3342 = vmatmul.mubr.bf16.gmra.mxu0 %v3244
      %v3343 = vpop.f32.mrf.mxu0
      %v3344 = vadd.f32 0.0, %v3343
      %v3345 = vpop.f32.mrf.mxu0
      %v3346 = vpop.f32.mrf.mxu0
      %v3347 = vadd.f32 0.0, %v3346
      %v3348 = vpop.f32.mrf.mxu0
      %3349 = vmatprep.mubr.bf16.mxu0 0
      %3350 = vmatmul.mubr.bf16.gmra.mxu0 %v3246
      %v3351 = vpop.f32.mrf.mxu0
      %v3352 = vadd.f32 0.0, %v3351
      %v3353 = vpop.f32.mrf.mxu0
      %v3354 = vpop.f32.mrf.mxu0
      %v3355 = vadd.f32 0.0, %v3354
      %v3356 = vpop.f32.mrf.mxu0
      %3357 = vmatprep.mubr.bf16.mxu0 0
      %3358 = vmatmul.mubr.bf16.gmra.mxu0 %v3248
      %v3359 = vpop.f32.mrf.mxu0
      %v3360 = vadd.f32 0.0, %v3359
      %v3361 = vpop.f32.mrf.mxu0
      %v3362 = vpop.f32.mrf.mxu0
      %v3363 = vadd.f32 0.0, %v3362
      %v3364 = vpop.f32.mrf.mxu0
      %3365 = vdwg.mxu0
      %v3366 = vmul.f32 %v3336, %v1041
      %v3367 = vmul.f32 %v3339, %v1046
      %v3368 = vmul.f32 %v3344, %v1051
      %v3369 = vmul.f32 %v3347, %v1056
      %v3370 = vmul.f32 %v3352, %v1061
      %v3371 = vmul.f32 %v3355, %v1066
      %v3372 = vmul.f32 %v3360, %v1071
      %v3373 = vmul.f32 %v3363, %v1076
      %v3374 = vadd.f32 %v3211, %v3366
      %v3375 = vadd.f32 %v3212, %v3367
      %v3376 = vadd.f32 %v3213, %v3368
      %v3377 = vadd.f32 %v3214, %v3369
      %v3378 = vadd.f32 %v3215, %v3370
      %v3379 = vadd.f32 %v3216, %v3371
      %v3380 = vadd.f32 %v3217, %v3372
      %v3381 = vadd.f32 %v3218, %v3373
      %v3382 = vld [vmem:[#allocation3 + $0x24] sm:$0xf]
      %s3383 = scalar_lea.vmem %s3, 384
      %v3384 = vld [vmem:[%s3383] sm:$0xf]
      %v3385 = vld [vmem:[%s3383 + $0x4] sm:$0xf]
      %v3386 = vld [vmem:[%s3383 + $0x8] sm:$0xf]
      %v3387 = vld [vmem:[%s3383 + $0xc] sm:$0xf]
      %v3388 = vld [vmem:[%s3383 + $0x10] sm:$0xf]
      %v3389 = vld [vmem:[%s3383 + $0x14] sm:$0xf]
      %v3390 = vld [vmem:[%s3383 + $0x18] sm:$0xf]
      %v3391 = vld [vmem:[%s3383 + $0x1c] sm:$0xf]
      %v3392 = vld [vmem:[%s3383 + $0x20] sm:$0xf]
      %v3393 = vld [vmem:[%s3383 + $0x24] sm:$0xf]
      %v3394 = vld [vmem:[%s3383 + $0x28] sm:$0xf]
      %v3395 = vld [vmem:[%s3383 + $0x2c] sm:$0xf]
      %v3396 = vld [vmem:[%s3383 + $0x30] sm:$0xf]
      %v3397 = vld [vmem:[%s3383 + $0x34] sm:$0xf]
      %v3398 = vld [vmem:[%s3383 + $0x38] sm:$0xf]
      %v3399 = vld [vmem:[%s3383 + $0x3c] sm:$0xf]
      %v3401 = vunpack.c.l.b16 %v3382
      %v3402 = vpack.c.b16 %v3046, %v3045
      %v3403 = vpack.c.b16 %v3048, %v3047
      %v3404 = vpack.c.b16 %v3050, %v3049
      %v3405 = vpack.c.b16 %v3401, %v3051
      %v3426 = vunpack.c.l.b16 %v3384
      %v3427 = vunpack.c.l.b16 %v3385
      %v3428 = vunpack.c.l.b16 %v3386
      %v3429 = vunpack.c.l.b16 %v3387
      %v3430 = vunpack.c.l.b16 %v3388
      %v3431 = vunpack.c.l.b16 %v3389
      %v3432 = vunpack.c.l.b16 %v3390
      %v3433 = vunpack.c.l.b16 %v3391
      %v3434 = vunpack.c.l.b16 %v3392
      %v3435 = vunpack.c.l.b16 %v3393
      %v3436 = vunpack.c.l.b16 %v3394
      %v3437 = vunpack.c.l.b16 %v3395
      %v3438 = vunpack.c.l.b16 %v3396
      %v3439 = vunpack.c.l.b16 %v3397
      %v3440 = vunpack.c.l.b16 %v3398
      %v3441 = vunpack.c.l.b16 %v3399
      %v3442 = vpack.c.b16 %v3427, %v3426
      %v3443 = vpack.c.b16 %v3429, %v3428
      %v3444 = vpack.c.b16 %v3431, %v3430
      %v3445 = vpack.c.b16 %v3433, %v3432
      %v3446 = vpack.c.b16 %v3435, %v3434
      %v3447 = vpack.c.b16 %v3437, %v3436
      %v3448 = vpack.c.b16 %v3439, %v3438
      %v3449 = vpack.c.b16 %v3441, %v3440
      %3458 = vmatprep.subr.bf16.mxu0 0
      %3459 = vmatpush1.bf16.msra.mxu0 %v3449
      %3460 = vmatprep.subr.bf16.mxu0 0
      %3461 = vmatpush1.bf16.msra.mxu0 %v3448
      %3462 = vmatprep.subr.bf16.mxu0 0
      %3463 = vmatpush1.bf16.msra.mxu0 %v3447
      %3464 = vmatprep.subr.bf16.mxu0 0
      %3465 = vmatpush1.bf16.msra.mxu0 %v3446
      %3466 = vmatprep.subr.bf16.mxu0 0
      %3467 = vmatpush1.bf16.msra.mxu0 %v3445
      %3468 = vmatprep.subr.bf16.mxu0 0
      %3469 = vmatpush1.bf16.msra.mxu0 %v3444
      %3470 = vmatprep.subr.bf16.mxu0 0
      %3471 = vmatpush1.bf16.msra.mxu0 %v3443
      %3472 = vmatprep.subr.bf16.mxu0 0
      %3473 = vmatpush1.bf16.msra.mxu0 %v3442
      %3474 = vmatprep.subr.bf16.mxu0 0
      %3475 = vmatpush2.bf16.msra.mxu0 0
      %3476 = vmatprep.subr.bf16.mxu0 0
      %3477 = vmatpush2.bf16.msra.mxu0 0
      %3478 = vmatprep.subr.bf16.mxu0 0
      %3479 = vmatpush2.bf16.msra.mxu0 0
      %3480 = vmatprep.subr.bf16.mxu0 0
      %3481 = vmatpush2.bf16.msra.mxu0 0
      %3482 = vmatprep.subr.bf16.mxu0 0
      %3483 = vmatpush2.bf16.msra.mxu0 0
      %3484 = vmatprep.subr.bf16.mxu0 0
      %3485 = vmatpush2.bf16.msra.mxu0 0
      %3486 = vmatprep.subr.bf16.mxu0 0
      %3487 = vmatpush2.bf16.msra.mxu0 0
      %3488 = vmatprep.subr.bf16.mxu0 0
      %3489 = vmatpush2.bf16.msra.mxu0 0
      %3490 = vmatprep.mubr.bf16.mxu0 0
      %3491 = vmatmul.mubr.bf16.gmra.mxu0 %v3402
      %v3492 = vpop.f32.mrf.mxu0
      %v3493 = vadd.f32 0.0, %v3492
      %v3494 = vpop.f32.mrf.mxu0
      %v3495 = vpop.f32.mrf.mxu0
      %v3496 = vadd.f32 0.0, %v3495
      %v3497 = vpop.f32.mrf.mxu0
      %3498 = vmatprep.mubr.bf16.mxu0 0
      %3499 = vmatmul.mubr.bf16.gmra.mxu0 %v3403
      %v3500 = vpop.f32.mrf.mxu0
      %v3501 = vadd.f32 0.0, %v3500
      %v3502 = vpop.f32.mrf.mxu0
      %v3503 = vpop.f32.mrf.mxu0
      %v3504 = vadd.f32 0.0, %v3503
      %v3505 = vpop.f32.mrf.mxu0
      %3506 = vmatprep.mubr.bf16.mxu0 0
      %3507 = vmatmul.mubr.bf16.gmra.mxu0 %v3404
      %v3508 = vpop.f32.mrf.mxu0
      %v3509 = vadd.f32 0.0, %v3508
      %v3510 = vpop.f32.mrf.mxu0
      %v3511 = vpop.f32.mrf.mxu0
      %v3512 = vadd.f32 0.0, %v3511
      %v3513 = vpop.f32.mrf.mxu0
      %3514 = vmatprep.mubr.bf16.mxu0 0
      %3515 = vmatmul.mubr.bf16.gmra.mxu0 %v3405
      %v3516 = vpop.f32.mrf.mxu0
      %v3517 = vadd.f32 0.0, %v3516
      %v3518 = vpop.f32.mrf.mxu0
      %v3519 = vpop.f32.mrf.mxu0
      %v3520 = vadd.f32 0.0, %v3519
      %v3521 = vpop.f32.mrf.mxu0
      %3522 = vdwg.mxu0
      %v3523 = vmul.f32 %v3493, %v626
      %v3524 = vmul.f32 %v3496, %v631
      %v3525 = vmul.f32 %v3501, %v636
      %v3526 = vmul.f32 %v3504, %v641
      %v3527 = vmul.f32 %v3509, %v646
      %v3528 = vmul.f32 %v3512, %v651
      %v3529 = vmul.f32 %v3517, %v656
      %v3530 = vmul.f32 %v3520, %v661
      %v3531 = vadd.f32 %v3374, %v3523
      %v3532 = vadd.f32 %v3375, %v3524
      %v3533 = vadd.f32 %v3376, %v3525
      %v3534 = vadd.f32 %v3377, %v3526
      %v3535 = vadd.f32 %v3378, %v3527
      %v3536 = vadd.f32 %v3379, %v3528
      %v3537 = vadd.f32 %v3380, %v3529
      %v3538 = vadd.f32 %v3381, %v3530
      %v3539 = vld [vmem:[#allocation3 + $0x8] sm:$0xf]
      %v3540 = vld [vmem:[#allocation3 + $0xc] sm:$0xf]
      %v3541 = vld [vmem:[#allocation3 + $0x10] sm:$0xf]
      %v3542 = vld [vmem:[#allocation3 + $0x14] sm:$0xf]
      %v3543 = vld [vmem:[#allocation3 + $0x18] sm:$0xf]
      %v3544 = vld [vmem:[#allocation3 + $0x1c] sm:$0xf]
      %v3545 = vld [vmem:[#allocation3 + $0x20] sm:$0xf]
      %v3546 = vld [vmem:[#allocation3 + $0x24] sm:$0xf]
      %v3547 = vld [vmem:[#allocation3 + $0x28] sm:$0x1]
      %s3548 = scalar_lea.vmem %s3, 448
      %v3549 = vld [vmem:[%s3548] sm:$0xf]
      %v3550 = vld [vmem:[%s3548 + $0x4] sm:$0xf]
      %v3551 = vld [vmem:[%s3548 + $0x8] sm:$0xf]
      %v3552 = vld [vmem:[%s3548 + $0xc] sm:$0xf]
      %v3553 = vld [vmem:[%s3548 + $0x10] sm:$0xf]
      %v3554 = vld [vmem:[%s3548 + $0x14] sm:$0xf]
      %v3555 = vld [vmem:[%s3548 + $0x18] sm:$0xf]
      %v3556 = vld [vmem:[%s3548 + $0x1c] sm:$0xf]
      %v3557 = vld [vmem:[%s3548 + $0x20] sm:$0xf]
      %v3558 = vld [vmem:[%s3548 + $0x24] sm:$0xf]
      %v3559 = vld [vmem:[%s3548 + $0x28] sm:$0xf]
      %v3560 = vld [vmem:[%s3548 + $0x2c] sm:$0xf]
      %v3561 = vld [vmem:[%s3548 + $0x30] sm:$0xf]
      %v3562 = vld [vmem:[%s3548 + $0x34] sm:$0xf]
      %v3563 = vld [vmem:[%s3548 + $0x38] sm:$0xf]
      %v3564 = vld [vmem:[%s3548 + $0x3c] sm:$0xf]
      %v3574 = vunpack.c.l.b16 %v3539
      %v3575 = vunpack.c.l.b16 %v3540
      %v3576 = vunpack.c.l.b16 %v3541
      %v3577 = vunpack.c.l.b16 %v3542
      %v3578 = vunpack.c.l.b16 %v3543
      %v3579 = vunpack.c.l.b16 %v3544
      %v3580 = vunpack.c.l.b16 %v3545
      %v3581 = vunpack.c.l.b16 %v3546
      %v3582 = vunpack.c.l.b16 %v3547
      %v3583 = vpack.c.b16 %v3575, %v3574
      %v3584 = vpack.c.b16 %v3577, %v3576
      %v3585 = vpack.c.b16 %v3579, %v3578
      %v3586 = vpack.c.b16 %v3581, %v3580
      %v3587 = vpack.c.b16 %v3582, %v3582
      %v3589 = vshrl.u32 %v3583, 16
      %v3591 = vshll.u32 %v3583, 16
      %v3593 = vrot.slane %v3591, 1
      %v3594 = vor.u32 %v3589, %v3593
      %v3596 = vshll.u32 %v3584, 16
      %v3598 = vrot.slane %v3596, 1
      %v3599 = vsel %vm728, %v3594, %v3598
      %v3600 = vshrl.u32 %v3584, 16
      %v3602 = vor.u32 %v3600, %v3598
      %v3604 = vshll.u32 %v3585, 16
      %v3606 = vrot.slane %v3604, 1
      %v3607 = vsel %vm728, %v3602, %v3606
      %v3608 = vshrl.u32 %v3585, 16
      %v3610 = vor.u32 %v3608, %v3606
      %v3612 = vshll.u32 %v3586, 16
      %v3614 = vrot.slane %v3612, 1
      %v3615 = vsel %vm728, %v3610, %v3614
      %v3616 = vshrl.u32 %v3586, 16
      %v3618 = vor.u32 %v3616, %v3614
      %v3620 = vshll.u32 %v3587, 16
      %v3622 = vrot.slane %v3620, 1
      %v3623 = vsel %vm728, %v3618, %v3622
      %v3644 = vunpack.c.l.b16 %v3549
      %v3645 = vunpack.c.l.b16 %v3550
      %v3646 = vunpack.c.l.b16 %v3551
      %v3647 = vunpack.c.l.b16 %v3552
      %v3648 = vunpack.c.l.b16 %v3553
      %v3649 = vunpack.c.l.b16 %v3554
      %v3650 = vunpack.c.l.b16 %v3555
      %v3651 = vunpack.c.l.b16 %v3556
      %v3652 = vunpack.c.l.b16 %v3557
      %v3653 = vunpack.c.l.b16 %v3558
      %v3654 = vunpack.c.l.b16 %v3559
      %v3655 = vunpack.c.l.b16 %v3560
      %v3656 = vunpack.c.l.b16 %v3561
      %v3657 = vunpack.c.l.b16 %v3562
      %v3658 = vunpack.c.l.b16 %v3563
      %v3659 = vunpack.c.l.b16 %v3564
      %v3660 = vpack.c.b16 %v3645, %v3644
      %v3661 = vpack.c.b16 %v3647, %v3646
      %v3662 = vpack.c.b16 %v3649, %v3648
      %v3663 = vpack.c.b16 %v3651, %v3650
      %v3664 = vpack.c.b16 %v3653, %v3652
      %v3665 = vpack.c.b16 %v3655, %v3654
      %v3666 = vpack.c.b16 %v3657, %v3656
      %v3667 = vpack.c.b16 %v3659, %v3658
      %3676 = vmatprep.subr.bf16.mxu0 0
      %3677 = vmatpush1.bf16.msra.mxu0 %v3667
      %3678 = vmatprep.subr.bf16.mxu0 0
      %3679 = vmatpush1.bf16.msra.mxu0 %v3666
      %3680 = vmatprep.subr.bf16.mxu0 0
      %3681 = vmatpush1.bf16.msra.mxu0 %v3665
      %3682 = vmatprep.subr.bf16.mxu0 0
      %3683 = vmatpush1.bf16.msra.mxu0 %v3664
      %3684 = vmatprep.subr.bf16.mxu0 0
      %3685 = vmatpush1.bf16.msra.mxu0 %v3663
      %3686 = vmatprep.subr.bf16.mxu0 0
      %3687 = vmatpush1.bf16.msra.mxu0 %v3662
      %3688 = vmatprep.subr.bf16.mxu0 0
      %3689 = vmatpush1.bf16.msra.mxu0 %v3661
      %3690 = vmatprep.subr.bf16.mxu0 0
      %3691 = vmatpush1.bf16.msra.mxu0 %v3660
      %3692 = vmatprep.subr.bf16.mxu0 0
      %3693 = vmatpush2.bf16.msra.mxu0 0
      %3694 = vmatprep.subr.bf16.mxu0 0
      %3695 = vmatpush2.bf16.msra.mxu0 0
      %3696 = vmatprep.subr.bf16.mxu0 0
      %3697 = vmatpush2.bf16.msra.mxu0 0
      %3698 = vmatprep.subr.bf16.mxu0 0
      %3699 = vmatpush2.bf16.msra.mxu0 0
      %3700 = vmatprep.subr.bf16.mxu0 0
      %3701 = vmatpush2.bf16.msra.mxu0 0
      %3702 = vmatprep.subr.bf16.mxu0 0
      %3703 = vmatpush2.bf16.msra.mxu0 0
      %3704 = vmatprep.subr.bf16.mxu0 0
      %3705 = vmatpush2.bf16.msra.mxu0 0
      %3706 = vmatprep.subr.bf16.mxu0 0
      %3707 = vmatpush2.bf16.msra.mxu0 0
      %3708 = vmatprep.mubr.bf16.mxu0 0
      %3709 = vmatmul.mubr.bf16.gmra.mxu0 %v3599
      %v3710 = vpop.f32.mrf.mxu0
      %v3711 = vadd.f32 0.0, %v3710
      %v3712 = vpop.f32.mrf.mxu0
      %v3713 = vpop.f32.mrf.mxu0
      %v3714 = vadd.f32 0.0, %v3713
      %v3715 = vpop.f32.mrf.mxu0
      %3716 = vmatprep.mubr.bf16.mxu0 0
      %3717 = vmatmul.mubr.bf16.gmra.mxu0 %v3607
      %v3718 = vpop.f32.mrf.mxu0
      %v3719 = vadd.f32 0.0, %v3718
      %v3720 = vpop.f32.mrf.mxu0
      %v3721 = vpop.f32.mrf.mxu0
      %v3722 = vadd.f32 0.0, %v3721
      %v3723 = vpop.f32.mrf.mxu0
      %3724 = vmatprep.mubr.bf16.mxu0 0
      %3725 = vmatmul.mubr.bf16.gmra.mxu0 %v3615
      %v3726 = vpop.f32.mrf.mxu0
      %v3727 = vadd.f32 0.0, %v3726
      %v3728 = vpop.f32.mrf.mxu0
      %v3729 = vpop.f32.mrf.mxu0
      %v3730 = vadd.f32 0.0, %v3729
      %v3731 = vpop.f32.mrf.mxu0
      %3732 = vmatprep.mubr.bf16.mxu0 0
      %3733 = vmatmul.mubr.bf16.gmra.mxu0 %v3623
      %v3734 = vpop.f32.mrf.mxu0
      %v3735 = vadd.f32 0.0, %v3734
      %v3736 = vpop.f32.mrf.mxu0
      %v3737 = vpop.f32.mrf.mxu0
      %v3738 = vadd.f32 0.0, %v3737
      %v3739 = vpop.f32.mrf.mxu0
      %3740 = vdwg.mxu0
      %v3741 = vadd.f32 %v3531, %v3711
      %v3742 = vadd.f32 %v3532, %v3714
      %v3743 = vadd.f32 %v3533, %v3719
      %v3744 = vadd.f32 %v3534, %v3722
      %v3745 = vadd.f32 %v3535, %v3727
      %v3746 = vadd.f32 %v3536, %v3730
      %v3747 = vadd.f32 %v3537, %v3735
      %v3748 = vadd.f32 %v3538, %v3738
      %v3749 = vld [vmem:[#allocation3 + $0x8] sm:$0xe]
      %s3750 = scalar_lea.vmem %s3, 512
      %v3751 = vld [vmem:[%s3750] sm:$0xf]
      %v3752 = vld [vmem:[%s3750 + $0x4] sm:$0xf]
      %v3753 = vld [vmem:[%s3750 + $0x8] sm:$0xf]
      %v3754 = vld [vmem:[%s3750 + $0xc] sm:$0xf]
      %v3755 = vld [vmem:[%s3750 + $0x10] sm:$0xf]
      %v3756 = vld [vmem:[%s3750 + $0x14] sm:$0xf]
      %v3757 = vld [vmem:[%s3750 + $0x18] sm:$0xf]
      %v3758 = vld [vmem:[%s3750 + $0x1c] sm:$0xf]
      %v3759 = vld [vmem:[%s3750 + $0x20] sm:$0xf]
      %v3760 = vld [vmem:[%s3750 + $0x24] sm:$0xf]
      %v3761 = vld [vmem:[%s3750 + $0x28] sm:$0xf]
      %v3762 = vld [vmem:[%s3750 + $0x2c] sm:$0xf]
      %v3763 = vld [vmem:[%s3750 + $0x30] sm:$0xf]
      %v3764 = vld [vmem:[%s3750 + $0x34] sm:$0xf]
      %v3765 = vld [vmem:[%s3750 + $0x38] sm:$0xf]
      %v3766 = vld [vmem:[%s3750 + $0x3c] sm:$0xf]
      %v3768 = vunpack.c.l.b16 %v3749
      %v3769 = vpack.c.b16 %v3575, %v3768
      %v3770 = vrot.slane %v3769, 1
      %v3771 = vrot.slane %v3584, 1
      %v3772 = vsel %vm911, %v3770, %v3771
      %v3773 = vrot.slane %v3585, 1
      %v3774 = vsel %vm911, %v3771, %v3773
      %v3775 = vrot.slane %v3586, 1
      %v3776 = vsel %vm911, %v3773, %v3775
      %v3777 = vrot.slane %v3587, 1
      %v3778 = vsel %vm911, %v3775, %v3777
      %v3799 = vunpack.c.l.b16 %v3751
      %v3800 = vunpack.c.l.b16 %v3752
      %v3801 = vunpack.c.l.b16 %v3753
      %v3802 = vunpack.c.l.b16 %v3754
      %v3803 = vunpack.c.l.b16 %v3755
      %v3804 = vunpack.c.l.b16 %v3756
      %v3805 = vunpack.c.l.b16 %v3757
      %v3806 = vunpack.c.l.b16 %v3758
      %v3807 = vunpack.c.l.b16 %v3759
      %v3808 = vunpack.c.l.b16 %v3760
      %v3809 = vunpack.c.l.b16 %v3761
      %v3810 = vunpack.c.l.b16 %v3762
      %v3811 = vunpack.c.l.b16 %v3763
      %v3812 = vunpack.c.l.b16 %v3764
      %v3813 = vunpack.c.l.b16 %v3765
      %v3814 = vunpack.c.l.b16 %v3766
      %v3815 = vpack.c.b16 %v3800, %v3799
      %v3816 = vpack.c.b16 %v3802, %v3801
      %v3817 = vpack.c.b16 %v3804, %v3803
      %v3818 = vpack.c.b16 %v3806, %v3805
      %v3819 = vpack.c.b16 %v3808, %v3807
      %v3820 = vpack.c.b16 %v3810, %v3809
      %v3821 = vpack.c.b16 %v3812, %v3811
      %v3822 = vpack.c.b16 %v3814, %v3813
      %3831 = vmatprep.subr.bf16.mxu0 0
      %3832 = vmatpush1.bf16.msra.mxu0 %v3822
      %3833 = vmatprep.subr.bf16.mxu0 0
      %3834 = vmatpush1.bf16.msra.mxu0 %v3821
      %3835 = vmatprep.subr.bf16.mxu0 0
      %3836 = vmatpush1.bf16.msra.mxu0 %v3820
      %3837 = vmatprep.subr.bf16.mxu0 0
      %3838 = vmatpush1.bf16.msra.mxu0 %v3819
      %3839 = vmatprep.subr.bf16.mxu0 0
      %3840 = vmatpush1.bf16.msra.mxu0 %v3818
      %3841 = vmatprep.subr.bf16.mxu0 0
      %3842 = vmatpush1.bf16.msra.mxu0 %v3817
      %3843 = vmatprep.subr.bf16.mxu0 0
      %3844 = vmatpush1.bf16.msra.mxu0 %v3816
      %3845 = vmatprep.subr.bf16.mxu0 0
      %3846 = vmatpush1.bf16.msra.mxu0 %v3815
      %3847 = vmatprep.subr.bf16.mxu0 0
      %3848 = vmatpush2.bf16.msra.mxu0 0
      %3849 = vmatprep.subr.bf16.mxu0 0
      %3850 = vmatpush2.bf16.msra.mxu0 0
      %3851 = vmatprep.subr.bf16.mxu0 0
      %3852 = vmatpush2.bf16.msra.mxu0 0
      %3853 = vmatprep.subr.bf16.mxu0 0
      %3854 = vmatpush2.bf16.msra.mxu0 0
      %3855 = vmatprep.subr.bf16.mxu0 0
      %3856 = vmatpush2.bf16.msra.mxu0 0
      %3857 = vmatprep.subr.bf16.mxu0 0
      %3858 = vmatpush2.bf16.msra.mxu0 0
      %3859 = vmatprep.subr.bf16.mxu0 0
      %3860 = vmatpush2.bf16.msra.mxu0 0
      %3861 = vmatprep.subr.bf16.mxu0 0
      %3862 = vmatpush2.bf16.msra.mxu0 0
      %3863 = vmatprep.mubr.bf16.mxu0 0
      %3864 = vmatmul.mubr.bf16.gmra.mxu0 %v3772
      %v3865 = vpop.f32.mrf.mxu0
      %v3866 = vadd.f32 0.0, %v3865
      %v3867 = vpop.f32.mrf.mxu0
      %v3868 = vpop.f32.mrf.mxu0
      %v3869 = vadd.f32 0.0, %v3868
      %v3870 = vpop.f32.mrf.mxu0
      %3871 = vmatprep.mubr.bf16.mxu0 0
      %3872 = vmatmul.mubr.bf16.gmra.mxu0 %v3774
      %v3873 = vpop.f32.mrf.mxu0
      %v3874 = vadd.f32 0.0, %v3873
      %v3875 = vpop.f32.mrf.mxu0
      %v3876 = vpop.f32.mrf.mxu0
      %v3877 = vadd.f32 0.0, %v3876
      %v3878 = vpop.f32.mrf.mxu0
      %3879 = vmatprep.mubr.bf16.mxu0 0
      %3880 = vmatmul.mubr.bf16.gmra.mxu0 %v3776
      %v3881 = vpop.f32.mrf.mxu0
      %v3882 = vadd.f32 0.0, %v3881
      %v3883 = vpop.f32.mrf.mxu0
      %v3884 = vpop.f32.mrf.mxu0
      %v3885 = vadd.f32 0.0, %v3884
      %v3886 = vpop.f32.mrf.mxu0
      %3887 = vmatprep.mubr.bf16.mxu0 0
      %3888 = vmatmul.mubr.bf16.gmra.mxu0 %v3778
      %v3889 = vpop.f32.mrf.mxu0
      %v3890 = vadd.f32 0.0, %v3889
      %v3891 = vpop.f32.mrf.mxu0
      %v3892 = vpop.f32.mrf.mxu0
      %v3893 = vadd.f32 0.0, %v3892
      %v3894 = vpop.f32.mrf.mxu0
      %3895 = vdwg.mxu0
      %v3896 = vmul.f32 %v3866, %v1041
      %v3897 = vmul.f32 %v3869, %v1046
      %v3898 = vmul.f32 %v3874, %v1051
      %v3899 = vmul.f32 %v3877, %v1056
      %v3900 = vmul.f32 %v3882, %v1061
      %v3901 = vmul.f32 %v3885, %v1066
      %v3902 = vmul.f32 %v3890, %v1071
      %v3903 = vmul.f32 %v3893, %v1076
      %v3904 = vadd.f32 %v3741, %v3896
      %v3905 = vadd.f32 %v3742, %v3897
      %v3906 = vadd.f32 %v3743, %v3898
      %v3907 = vadd.f32 %v3744, %v3899
      %v3908 = vadd.f32 %v3745, %v3900
      %v3909 = vadd.f32 %v3746, %v3901
      %v3910 = vadd.f32 %v3747, %v3902
      %v3911 = vadd.f32 %v3748, %v3903
      %v3912 = vld [vmem:[%s4] sm:$0x1]
      %v3914 = vlaneseq
      %v3915 = vshrl.u32 %v3914, 7
      %v3916 = vsub.s32 0, %v3915
      %v3917 = vrot.slane %v3912, %v3916
      %v3919 = vadd.f32 %v3904, %v3917
      %v3920 = vadd.f32 %v3905, %v3917
      %v3921 = vadd.f32 %v3906, %v3917
      %v3922 = vadd.f32 %v3907, %v3917
      %v3923 = vadd.f32 %v3908, %v3917
      %v3924 = vadd.f32 %v3909, %v3917
      %v3925 = vadd.f32 %v3910, %v3917
      %v3926 = vadd.f32 %v3911, %v3917
      %v3927 = vmax.f32 %v3919, 0.0
      %v3928 = vmax.f32 %v3920, 0.0
      %v3929 = vmax.f32 %v3921, 0.0
      %v3930 = vmax.f32 %v3922, 0.0
      %v3931 = vmax.f32 %v3923, 0.0
      %v3932 = vmax.f32 %v3924, 0.0
      %v3933 = vmax.f32 %v3925, 0.0
      %v3934 = vmax.f32 %v3926, 0.0
      %3935 = vst [vmem:[%s278] sm:$0xff] %v3927
      %3936 = vst [vmem:[%s278 + $0x8] sm:$0xff] %v3928
      %3937 = vst [vmem:[%s278 + $0x10] sm:$0xff] %v3929
      %3938 = vst [vmem:[%s278 + $0x18] sm:$0xff] %v3930
      %3939 = vst [vmem:[%s278 + $0x20] sm:$0xff] %v3931
      %3940 = vst [vmem:[%s278 + $0x28] sm:$0xff] %v3932
      %3941 = vst [vmem:[%s278 + $0x30] sm:$0xff] %v3933
      %3942 = vst [vmem:[%s278 + $0x38] sm:$0xff] %v3934
      %p3943 = scmp.lt.s32.totalorder %s18, 1
      %s3944 = scalar_select %p3943, %s18, 1
      %s3945 = smul.addr %s3944, 8
      %s3946 = smul.addr %s3945, 8
      %s3947 = scalar_lea.vmem %s7, %s3946
      // Predicated region
      $region49: #{down_forward.1} parent=47 // pred_check
        %p3948 = pneg %p188
      $region50: #{down_forward.1} parent=47 // pred_check_branch
        %3950 = sbr.rel (%p3948) target = $region52
      $region51: #{down_forward.1} parent=47 // pred_region
        _
      $region52: #{down_forward.1} parent=47 // pred_fallthru
        _
    $region48: #{down_forward.1} parent=5 // pred_fallthru
      _
    %p3951 = scmp.le.s32.totalorder 2, %s13
    // Predicated region
    $region53: #{down_forward.1} parent=5 // pred_check
      %p3952 = pneg %p3951
    $region54: #{down_forward.1} parent=5 // pred_check_branch
      %3954 = sbr.rel (%p3952) target = $region56
    $region55: #{down_forward.1} parent=5 // pred_region
      %s3955 = ssub.s32 %s13, 2
      // Predicated region
      $region57: #{down_forward.1} parent=55 // pred_check
        %p3956 = pneg %p194
      $region58: #{down_forward.1} parent=55 // pred_check_branch
        %3958 = sbr.rel (%p3956) target = $region60
      $region59: #{down_forward.1} parent=55 // pred_region
        %p3959 = scmp.lt.s32.totalorder %s19, 1
        %s3960 = scalar_select %p3959, %s19, 1
        %s3961 = smul.addr %s3960, 8
        %s3962 = smul.addr %s3961, 8
        %s3963 = scalar_lea.vmem %s7, %s3962
      $region60: #{down_forward.1} parent=55 // pred_fallthru
        _
    $region56: #{down_forward.1} parent=5 // pred_fallthru
      _
  $region6: #{down_forward.1} parent=0 // loop_footer
    %s17 = sadd.s32 1, %s13
  $region7: #{down_forward.1} parent=0 // loop_footer_branch
    %12 = sbr.rel target = $region3
  $region8: #{down_forward.1} parent=0 // loop_exit
    _

</llo_original>
